<compile_context>
chip_gen: v6e
topology: v6e:2x2x1
jax: 0.10.0
libtpu: 0.0.40
codegen_flags: <defaults>
</compile_context>

<pallas_src>
import functools

import jax
import jax.numpy as jnp
from jax.experimental import pallas as pl
from jax.experimental.pallas import tpu as pltpu

EXPANSION = 4
BN_EPS = 1e-5
LANE = 128             # channel axes are zero-padded to a multiple of this
DEFAULT_TILE_M = 512   # target rows per M tile (512-1024 ~ HBM roofline sweet spot)


# ---------------------------------------------------------------------------
# small shape helpers
# ---------------------------------------------------------------------------
def _round_up(x, m):
    return ((x + m - 1) // m) * m


def _pick_tile(m, target):
    """Largest multiple-of-8 divisor of m that is <= target (else m itself)."""
    t = (min(target, m) // 8) * 8
    while t >= 8:
        if m % t == 0:
            return t
        t -= 8
    return m


def _pad_cols(a, c):
    return jnp.pad(a, ((0, 0), (0, c - a.shape[1])))


def _pad2(a, r, c):
    return jnp.pad(a, ((0, r - a.shape[0]), (0, c - a.shape[1])))


def _pad_last2(a, r, c):
    pads = [(0, 0)] * (a.ndim - 2) + [(0, r - a.shape[-2]), (0, c - a.shape[-1])]
    return jnp.pad(a, pads)


def _pad_vec(v, c):
    return jnp.pad(v.astype(jnp.float32), (0, c - v.shape[0]))


def _has_projection(in_planes, planes, stride):
    return stride != 1 or in_planes != EXPANSION * planes


def _affine_from_stats(stats, gamma, beta, count):
    """(sum, sumsq) -> packed (2, C) [scale; shift] for y*scale + shift."""
    mean = stats[0] / count
    var = jnp.maximum(stats[1] / count - mean * mean, 0.0)   # one-pass variance
    scale = gamma * jax.lax.rsqrt(var + BN_EPS)
    shift = beta - mean * scale
    return jnp.stack([scale, shift], axis=0).astype(jnp.float32)


# ---------------------------------------------------------------------------
# Kernel 1: 1x1 conv (matmul) + per-tile per-channel sum / sumsq partials
# ---------------------------------------------------------------------------
def _matmul_stats_kernel(x_ref, w_ref, y_ref, st_ref):
    acc = jnp.dot(x_ref[...], w_ref[...], preferred_element_type=jnp.float32)
    y_ref[...] = acc.astype(y_ref.dtype)
    st_ref[0, 0:1, :] = jnp.sum(acc, axis=0, keepdims=True)
    st_ref[0, 1:2, :] = jnp.sum(acc * acc, axis=0, keepdims=True)


def _matmul_stats(x, w, tile_m):
    m, k = x.shape
    c = w.shape[1]
    tm = _pick_tile(m, tile_m)
    t = m // tm
    bytes_acc = (m * k + k * c + m * c) * x.dtype.itemsize + t * 2 * c * 4
    y, st = pl.pallas_call(
        _matmul_stats_kernel,
        grid=(t,),
        in_specs=[pl.BlockSpec((tm, k), lambda i: (i, 0)),
                  pl.BlockSpec((k, c), lambda i: (0, 0))],
        out_specs=(pl.BlockSpec((tm, c), lambda i: (i, 0)),
                   pl.BlockSpec((1, 2, c), lambda i: (i, 0, 0))),
        out_shape=(jax.ShapeDtypeStruct((m, c), x.dtype),
                   jax.ShapeDtypeStruct((t, 2, c), jnp.float32)),
        compiler_params=pltpu.CompilerParams(dimension_semantics=("parallel",)),
        cost_estimate=pl.CostEstimate(flops=2 * m * k * c, transcendentals=0,
                                      bytes_accessed=int(bytes_acc)),
    )(x, w)
    return y, jnp.sum(st, axis=0)


# ---------------------------------------------------------------------------
# Kernel 1b: apply BN1 scale/shift + ReLU, write zero-padded NHWC image
# ---------------------------------------------------------------------------
def _bn_relu_pad_kernel(y_ref, ss_ref, o_ref, *, h, w):
    c = y_ref.shape[-1]
    z = jnp.maximum(
        y_ref[...].astype(jnp.float32) * ss_ref[0:1, :] + ss_ref[1:2, :], 0.0)
    o_ref[...] = jnp.zeros_like(o_ref)
    o_ref[0, 1:h + 1, 1:w + 1, :] = z.reshape(h, w, c).astype(o_ref.dtype)


def _bn_relu_pad(y, ss, n, h, w, s):
    _, c = y.shape
    hp = _round_up(h + 2, s)
    wp = _round_up(w + 2, s)
    return pl.pallas_call(
        functools.partial(_bn_relu_pad_kernel, h=h, w=w),
        grid=(n,),
        in_specs=[pl.BlockSpec((h * w, c), lambda i: (i, 0)),
                  pl.BlockSpec((2, c), lambda i: (0, 0))],
        out_specs=pl.BlockSpec((1, hp, wp, c), lambda i: (i, 0, 0, 0)),
        out_shape=jax.ShapeDtypeStruct((n, hp, wp, c), y.dtype),
        compiler_params=pltpu.CompilerParams(dimension_semantics=("parallel",)),
    )(y, ss)


# ---------------------------------------------------------------------------
# Kernel 2: 3x3 conv as 9 accumulating tap matmuls (phase layout, no im2col)
# z_ref block: (s*s, Hc, Wc, C) where [ph*s+pw, a, b, :] = zpad[a*s+ph, b*s+pw, :]
# ---------------------------------------------------------------------------
def _conv3x3_kernel(z_ref, w_ref, y_ref, st_ref, *, s, ho, wo):
    cin = z_ref.shape[-1]
    cout = w_ref.shape[-1]
    acc = jnp.zeros((ho * wo, cout), jnp.float32)
    for kh in range(3):
        for kw in range(3):
            phase = (kh % s) * s + (kw % s)
            tap = z_ref[phase,
                        kh // s: kh // s + ho,
                        kw // s: kw // s + wo, :]
            acc = acc + jnp.dot(tap.reshape(ho * wo, cin), w_ref[kh, kw],
                                preferred_element_type=jnp.float32)
    y_ref[...] = acc.astype(y_ref.dtype)
    st_ref[0, 0:1, :] = jnp.sum(acc, axis=0, keepdims=True)
    st_ref[0, 1:2, :] = jnp.sum(acc * acc, axis=0, keepdims=True)


def _conv3x3_stats(zph, w2t, n, s, ho, wo):
    _, hc, wc, c = zph.shape
    cout = w2t.shape[-1]
    m = ho * wo
    bytes_acc = (zph.size + w2t.size + n * m * cout) * zph.dtype.itemsize
    y2, st = pl.pallas_call(
        functools.partial(_conv3x3_kernel, s=s, ho=ho, wo=wo),
        grid=(n,),
        in_specs=[pl.BlockSpec((s * s, hc, wc, c), lambda i: (i, 0, 0, 0)),
                  pl.BlockSpec((3, 3, c, cout), lambda i: (0, 0, 0, 0))],
        out_specs=(pl.BlockSpec((m, cout), lambda i: (i, 0)),
                   pl.BlockSpec((1, 2, cout), lambda i: (i, 0, 0))),
        out_shape=(jax.ShapeDtypeStruct((n * m, cout), zph.dtype),
                   jax.ShapeDtypeStruct((n, 2, cout), jnp.float32)),
        compiler_params=pltpu.CompilerParams(dimension_semantics=("parallel",)),
        cost_estimate=pl.CostEstimate(flops=2 * n * m * 9 * c * cout,
                                      transcendentals=0,
                                      bytes_accessed=int(bytes_acc)),
    )(zph, w2t)
    return y2, jnp.sum(st, axis=0)


# ---------------------------------------------------------------------------
# Kernel 3: BN2+ReLU -> conv3 (1x1) [+ fused projection-shortcut 1x1] + stats
# ---------------------------------------------------------------------------
def _conv3_proj_kernel(y2_ref, ss2_ref, w3_ref, xs_ref, ws_ref,
                       y3_ref, ys_ref, st3_ref, sts_ref):
    z2 = jnp.maximum(
        y2_ref[...].astype(jnp.float32) * ss2_ref[0:1, :] + ss2_ref[1:2, :], 0.0)
    a3 = jnp.dot(z2.astype(w3_ref.dtype), w3_ref[...],
                 preferred_element_type=jnp.float32)
    y3_ref[...] = a3.astype(y3_ref.dtype)
    st3_ref[0, 0:1, :] = jnp.sum(a3, axis=0, keepdims=True)
    st3_ref[0, 1:2, :] = jnp.sum(a3 * a3, axis=0, keepdims=True)
    ash = jnp.dot(xs_ref[...], ws_ref[...], preferred_element_type=jnp.float32)
    ys_ref[...] = ash.astype(ys_ref.dtype)
    sts_ref[0, 0:1, :] = jnp.sum(ash, axis=0, keepdims=True)
    sts_ref[0, 1:2, :] = jnp.sum(ash * ash, axis=0, keepdims=True)


def _conv3_id_kernel(y2_ref, ss2_ref, w3_ref, y3_ref, st3_ref):
    z2 = jnp.maximum(
        y2_ref[...].astype(jnp.float32) * ss2_ref[0:1, :] + ss2_ref[1:2, :], 0.0)
    a3 = jnp.dot(z2.astype(w3_ref.dtype), w3_ref[...],
                 preferred_element_type=jnp.float32)
    y3_ref[...] = a3.astype(y3_ref.dtype)
    st3_ref[0, 0:1, :] = jnp.sum(a3, axis=0, keepdims=True)
    st3_ref[0, 1:2, :] = jnp.sum(a3 * a3, axis=0, keepdims=True)


def _conv3_proj(y2, ss2, w3, xs, ws, tile_m):
    m, c1 = y2.shape
    c3 = w3.shape[1]
    kx = xs.shape[1]
    tm = _pick_tile(m, tile_m)
    t = m // tm
    bytes_acc = (m * c1 + m * kx + 2 * m * c3) * y2.dtype.itemsize
    y3, ys, st3, sts = pl.pallas_call(
        _conv3_proj_kernel,
        grid=(t,),
        in_specs=[pl.BlockSpec((tm, c1), lambda i: (i, 0)),
                  pl.BlockSpec((2, c1), lambda i: (0, 0)),
                  pl.BlockSpec((c1, c3), lambda i: (0, 0)),
                  pl.BlockSpec((tm, kx), lambda i: (i, 0)),
                  pl.BlockSpec((kx, c3), lambda i: (0, 0))],
        out_specs=(pl.BlockSpec((tm, c3), lambda i: (i, 0)),
                   pl.BlockSpec((tm, c3), lambda i: (i, 0)),
                   pl.BlockSpec((1, 2, c3), lambda i: (i, 0, 0)),
                   pl.BlockSpec((1, 2, c3), lambda i: (i, 0, 0))),
        out_shape=(jax.ShapeDtypeStruct((m, c3), y2.dtype),
                   jax.ShapeDtypeStruct((m, c3), y2.dtype),
                   jax.ShapeDtypeStruct((t, 2, c3), jnp.float32),
                   jax.ShapeDtypeStruct((t, 2, c3), jnp.float32)),
        compiler_params=pltpu.CompilerParams(dimension_semantics=("parallel",)),
        cost_estimate=pl.CostEstimate(flops=2 * m * (c1 + kx) * c3,
                                      transcendentals=0,
                                      bytes_accessed=int(bytes_acc)),
    )(y2, ss2, w3, xs, ws)
    return y3, jnp.sum(st3, axis=0), ys, jnp.sum(sts, axis=0)


def _conv3_id(y2, ss2, w3, tile_m):
    m, c1 = y2.shape
    c3 = w3.shape[1]
    tm = _pick_tile(m, tile_m)
    t = m // tm
    bytes_acc = (m * c1 + m * c3) * y2.dtype.itemsize
    y3, st3 = pl.pallas_call(
        _conv3_id_kernel,
        grid=(t,),
        in_specs=[pl.BlockSpec((tm, c1), lambda i: (i, 0)),
                  pl.BlockSpec((2, c1), lambda i: (0, 0)),
                  pl.BlockSpec((c1, c3), lambda i: (0, 0))],
        out_specs=(pl.BlockSpec((tm, c3), lambda i: (i, 0)),
                   pl.BlockSpec((1, 2, c3), lambda i: (i, 0, 0))),
        out_shape=(jax.ShapeDtypeStruct((m, c3), y2.dtype),
                   jax.ShapeDtypeStruct((t, 2, c3), jnp.float32)),
        compiler_params=pltpu.CompilerParams(dimension_semantics=("parallel",)),
        cost_estimate=pl.CostEstimate(flops=2 * m * c1 * c3, transcendentals=0,
                                      bytes_accessed=int(bytes_acc)),
    )(y2, ss2, w3)
    return y3, jnp.sum(st3, axis=0)


# ---------------------------------------------------------------------------
# Kernel 4: BN3 (+ BN_shortcut or identity residual) + add + ReLU
# ---------------------------------------------------------------------------
def _finalize_proj_kernel(y3_ref, ss3_ref, ys_ref, sss_ref, o_ref):
    z3 = y3_ref[...].astype(jnp.float32) * ss3_ref[0:1, :] + ss3_ref[1:2, :]
    r = ys_ref[...].astype(jnp.float32) * sss_ref[0:1, :] + sss_ref[1:2, :]
    o_ref[...] = jnp.maximum(z3 + r, 0.0).astype(o_ref.dtype)


def _finalize_id_kernel(y3_ref, ss3_ref, res_ref, o_ref):
    z3 = y3_ref[...].astype(jnp.float32) * ss3_ref[0:1, :] + ss3_ref[1:2, :]
    o_ref[...] = jnp.maximum(z3 + res_ref[...].astype(jnp.float32),
                             0.0).astype(o_ref.dtype)


def _finalize_proj(y3, ss3, ys, sss, tile_m):
    m, c3 = y3.shape
    tm = _pick_tile(m, tile_m)
    t = m // tm
    return pl.pallas_call(
        _finalize_proj_kernel,
        grid=(t,),
        in_specs=[pl.BlockSpec((tm, c3), lambda i: (i, 0)),
                  pl.BlockSpec((2, c3), lambda i: (0, 0)),
                  pl.BlockSpec((tm, c3), lambda i: (i, 0)),
                  pl.BlockSpec((2, c3), lambda i: (0, 0))],
        out_specs=pl.BlockSpec((tm, c3), lambda i: (i, 0)),
        out_shape=jax.ShapeDtypeStruct((m, c3), jnp.float32),
        compiler_params=pltpu.CompilerParams(dimension_semantics=("parallel",)),
    )(y3, ss3, ys, sss)


def _finalize_id(y3, ss3, res, tile_m):
    m, c3 = y3.shape
    tm = _pick_tile(m, tile_m)
    t = m // tm
    return pl.pallas_call(
        _finalize_id_kernel,
        grid=(t,),
        in_specs=[pl.BlockSpec((tm, c3), lambda i: (i, 0)),
                  pl.BlockSpec((2, c3), lambda i: (0, 0)),
                  pl.BlockSpec((tm, c3), lambda i: (i, 0))],
        out_specs=pl.BlockSpec((tm, c3), lambda i: (i, 0)),
        out_shape=jax.ShapeDtypeStruct((m, c3), jnp.float32),
        compiler_params=pltpu.CompilerParams(dimension_semantics=("parallel",)),
    )(y3, ss3, res)


# ---------------------------------------------------------------------------
# Parameters (deterministic, in-script).  Biases are kept for the reference
# but the Pallas path drops them (exactly cancelled by training-mode BN).
# ---------------------------------------------------------------------------
def init_bottleneck_params(key, in_planes, planes, stride):
    out_planes = EXPANSION * planes
    ks = jax.random.split(key, 16)
    rnd = lambda k, shp, s: s * jax.random.normal(k, shp, jnp.float32)
    p = {
        "w1": rnd(ks[0], (planes, in_planes, 1, 1), 0.2),
        "b1": rnd(ks[1], (planes,), 0.1),
        "g1": 1.0 + rnd(ks[2], (planes,), 0.1),
        "be1": rnd(ks[3], (planes,), 0.1),
        "w2": rnd(ks[4], (planes, planes, 3, 3), 0.2),
        "b2": rnd(ks[5], (planes,), 0.1),
        "g2": 1.0 + rnd(ks[6], (planes,), 0.1),
        "be2": rnd(ks[7], (planes,), 0.1),
        "w3": rnd(ks[8], (out_planes, planes, 1, 1), 0.2),
        "b3": rnd(ks[9], (out_planes,), 0.1),
        "g3": 1.0 + rnd(ks[10], (out_planes,), 0.1),
        "be3": rnd(ks[11], (out_planes,), 0.1),
    }
    if _has_projection(in_planes, planes, stride):
        p.update({
            "ws": rnd(ks[12], (out_planes, in_planes, 1, 1), 0.2),
            "bs": rnd(ks[13], (out_planes,), 0.1),
            "gs": 1.0 + rnd(ks[14], (out_planes,), 0.1),
            "bes": rnd(ks[15], (out_planes,), 0.1),
        })
    return p


# ---------------------------------------------------------------------------
# Bottleneck forward (Pallas path)
# ---------------------------------------------------------------------------
def bottleneck_forward(x_nchw, params, *, in_planes, planes, stride,
                       compute_dtype=jnp.bfloat16, tile_m=DEFAULT_TILE_M):
    out_planes = EXPANSION * planes
    n, cin, h, w = x_nchw.shape
    assert cin == in_planes
    s = stride
    ho = (h + 2 - 3) // s + 1
    wo = (w + 2 - 3) // s + 1
    assert (h * w) % 8 == 0 and (ho * wo) % 8 == 0, "spatial sizes must be *8"

    cin_p = _round_up(cin, LANE)
    c1_p = _round_up(planes, LANE)
    c3_p = _round_up(out_planes, LANE)
    cd = compute_dtype

    m1 = n * h * w
    m2 = n * ho * wo

    x_nhwc = jnp.transpose(x_nchw, (0, 2, 3, 1))                  # NCHW -> NHWC
    x_flat = _pad_cols(x_nhwc.reshape(m1, cin), cin_p).astype(cd)

    # --- lane-dense (128-padded), bf16 weights; conv biases intentionally
    #     dropped (cancelled by training-mode BN mean subtraction) ---
    w1 = _pad2(params["w1"][:, :, 0, 0].T, cin_p, c1_p).astype(cd)
    w2 = _pad_last2(jnp.transpose(params["w2"], (2, 3, 1, 0)), c1_p, c1_p).astype(cd)
    w3 = _pad2(params["w3"][:, :, 0, 0].T, c1_p, c3_p).astype(cd)
    g1, be1 = _pad_vec(params["g1"], c1_p), _pad_vec(params["be1"], c1_p)
    g2, be2 = _pad_vec(params["g2"], c1_p), _pad_vec(params["be2"], c1_p)
    g3, be3 = _pad_vec(params["g3"], c3_p), _pad_vec(params["be3"], c3_p)

    # stage 1: conv1 (1x1) as tiled matmul + BN1 sum/sumsq partials
    y1, st1 = _matmul_stats(x_flat, w1, tile_m)
    ss1 = _affine_from_stats(st1, g1, be1, m1)

    # stage 1b: apply BN1+ReLU, emit zero-padded NHWC image (per batch element)
    z1p = _bn_relu_pad(y1, ss1, n, h, w, s)

    # phase ("space-to-batch") layout so the strided 3x3 taps become purely
    # contiguous slices inside the conv2 kernel (pure layout glue; no-op for s=1)
    hp, wp, _ = z1p.shape[1], z1p.shape[2], z1p.shape[3]
    zph = (z1p.reshape(n, hp // s, s, wp // s, s, c1_p)
              .transpose(0, 2, 4, 1, 3, 5)
              .reshape(n * s * s, hp // s, wp // s, c1_p))

    # stage 2: conv2 (3x3, stride s, pad 1) as 9 accumulating matmuls + stats
    y2, st2 = _conv3x3_stats(zph, w2, n, s, ho, wo)
    ss2 = _affine_from_stats(st2, g2, be2, m2)

    if _has_projection(in_planes, planes, stride):
        gs, bes = _pad_vec(params["gs"], c3_p), _pad_vec(params["bes"], c3_p)
        ws = _pad2(params["ws"][:, :, 0, 0].T, cin_p, c3_p).astype(cd)
        xs = _pad_cols(x_nhwc[:, ::s, ::s, :].reshape(m2, cin), cin_p).astype(cd)
        # stage 3: BN2+ReLU -> conv3, with the projection 1x1 fused in
        y3, st3, ysc, sts = _conv3_proj(y2, ss2, w3, xs, ws, tile_m)
        ss3 = _affine_from_stats(st3, g3, be3, m2)
        sss = _affine_from_stats(sts, gs, bes, m2)
        out_flat = _finalize_proj(y3, ss3, ysc, sss, tile_m)
    else:
        # identity shortcut: stride == 1 and in_planes == 4*planes
        y3, st3 = _conv3_id(y2, ss2, w3, tile_m)
        ss3 = _affine_from_stats(st3, g3, be3, m2)
        assert cin_p == c3_p and m1 == m2
        out_flat = _finalize_id(y3, ss3, x_flat, tile_m)

    out = out_flat.reshape(n, ho, wo, c3_p)[:, :, :, :out_planes]
    return jnp.transpose(out, (0, 3, 1, 2)).astype(jnp.float32)     # NCHW


# ---------------------------------------------------------------------------
# Pure-JAX reference (NCHW, lax.conv) for correctness checking
# ---------------------------------------------------------------------------
def _ref_bottleneck(x, params, *, in_planes, planes, stride):
    def conv(x, w, b, s, pad):
        y = jax.lax.conv_general_dilated(
            x, w, window_strides=(s, s), padding=pad,
            dimension_numbers=("NCHW", "OIHW", "NCHW"))
        return y + b[None, :, None, None]

    def bn(x, g, be):
        mean = x.mean(axis=(0, 2, 3), keepdims=True)
        var = ((x - mean) ** 2).mean(axis=(0, 2, 3), keepdims=True)
        return ((x - mean) / jnp.sqrt(var + BN_EPS)) * g[None, :, None, None] \
            + be[None, :, None, None]

    z = jax.nn.relu(bn(conv(x, params["w1"], params["b1"], 1, "VALID"),
                       params["g1"], params["be1"]))
    z = jax.nn.relu(bn(conv(z, params["w2"], params["b2"], stride, [(1, 1), (1, 1)]),
                       params["g2"], params["be2"]))
    z = bn(conv(z, params["w3"], params["b3"], 1, "VALID"),
           params["g3"], params["be3"])
    if _has_projection(in_planes, planes, stride):
        sc = bn(conv(x, params["ws"], params["bs"], stride, "VALID"),
                params["gs"], params["bes"])
    else:
        sc = x
    return jax.nn.relu(z + sc)


if __name__ == "__main__":
    fwd = jax.jit(bottleneck_forward,
                  static_argnames=("in_planes", "planes", "stride",
                                   "compute_dtype", "tile_m"))

    key = jax.random.PRNGKey(0)
    n, h, w = 2, 16, 16
    # first config exercises the projection shortcut (stride 2),
    # second the identity shortcut (stride 1, in_planes == 4*planes).
    configs = [(4, 4, 2), (16, 4, 1)]

    for in_planes, planes, stride in configs:
        key, kx, kp = jax.random.split(key, 3)
        x = jax.random.normal(kx, (n, in_planes, h, w), jnp.float32)
        params = init_bottleneck_params(kp, in_planes, planes, stride)
        ref = _ref_bottleneck(x, params, in_planes=in_planes, planes=planes,
                              stride=stride)
        expected = (n, EXPANSION * planes,
                    (h - 1) // stride + 1, (w - 1) // stride + 1)

        # f32 compute path: tight structural/numerical check.
        out32 = fwd(x, params, in_planes=in_planes, planes=planes,
                    stride=stride, compute_dtype=jnp.float32, tile_m=128)
        out32 = jax.block_until_ready(out32)
        assert out32.shape == expected, (out32.shape, expected)
        assert jnp.allclose(out32, ref, rtol=1e-3, atol=1e-3), "f32 path mismatch"

        # bf16 performance path (MXU-native operands, bf16 intermediates):
        # bf16-level tolerance against the f32 reference.
        outbf = fwd(x, params, in_planes=in_planes, planes=planes,
                    stride=stride, compute_dtype=jnp.bfloat16, tile_m=128)
        outbf = jax.block_until_ready(outbf)
        assert outbf.shape == expected, (outbf.shape, expected)
        assert jnp.allclose(outbf, ref, rtol=2e-1, atol=2e-1), "bf16 path mismatch"

    print("KERNEL_OK")
</pallas_src>

<mosaic_0001>
module attributes {stable_mosaic.version = 11 : i64} {
  func.func @_matmul_stats_kernel(%arg0: i32, %arg1: memref<128x128xf32, #tpu.memory_space<vmem>>, %arg2: memref<128x128xf32, #tpu.memory_space<vmem>>, %arg3: memref<128x128xf32, #tpu.memory_space<vmem>>, %arg4: memref<1x2x128xf32, #tpu.memory_space<vmem>>) attributes {dimension_semantics = [#tpu.dimension_semantics<parallel>], iteration_bounds = array<i64: 4>, scalar_prefetch = 0 : i64, scratch_operands = 0 : i64, tpu.core_type = #tpu.core_type<tc>, window_params = [{transform_indices = @transform_0, window_bounds = array<i64: 128, 128>}, {pipeline_mode = #tpu.pipeline_mode<synchronous>, transform_indices = @transform_1, window_bounds = array<i64: 128, 128>}, {transform_indices = @transform_2, window_bounds = array<i64: 128, 128>}, {transform_indices = @transform_3, window_bounds = array<i64: 1, 2, 128>}]} {
    %c0 = arith.constant 0 : index
    %c0_0 = arith.constant 0 : index
    %0 = vector.load %arg1[%c0, %c0_0] : memref<128x128xf32, #tpu.memory_space<vmem>>, vector<128x128xf32>
    %c0_1 = arith.constant 0 : index
    %c0_2 = arith.constant 0 : index
    %1 = vector.load %arg2[%c0_1, %c0_2] : memref<128x128xf32, #tpu.memory_space<vmem>>, vector<128x128xf32>
    %cst = arith.constant dense<0.000000e+00> : vector<128x128xf32>
    %2 = tpu.matmul %0, %1, %cst {dimension_numbers = #tpu.dot_dimension_numbers<[1], [0], [0], [1], [0, 0, 1, 1], [], []>} : vector<128x128xf32>, vector<128x128xf32>, vector<128x128xf32> -> vector<128x128xf32>
    %c0_3 = arith.constant 0 : index
    %c0_4 = arith.constant 0 : index
    %3 = vector.load %arg3[%c0_3, %c0_4] : memref<128x128xf32, #tpu.memory_space<vmem>>, vector<128x128xf32>
    tpu.vector_store %arg3[%c0_3, %c0_4], %2 {strides = array<i32>} : memref<128x128xf32, #tpu.memory_space<vmem>>, vector<128x128xf32>,
    %cst_5 = arith.constant dense<0.000000e+00> : vector<128xf32>
    %4 = vector.multi_reduction <add>, %2, %cst_5 [0] : vector<128x128xf32> to vector<128xf32>
    %5 = vector.shape_cast %4 : vector<128xf32> to vector<1x128xf32>
    %c0_6 = arith.constant 0 : index
    %c0_7 = arith.constant 0 : index
    %c0_8 = arith.constant 0 : index
    %6 = vector.load %arg4[%c0_6, %c0_7, %c0_8] : memref<1x2x128xf32, #tpu.memory_space<vmem>>, vector<1x1x128xf32>
    %7 = vector.shape_cast %6 : vector<1x1x128xf32> to vector<1x128xf32>
    %8 = vector.shape_cast %5 : vector<1x128xf32> to vector<1x1x128xf32>
    tpu.vector_store %arg4[%c0_6, %c0_7, %c0_8], %8 {strides = array<i32>} : memref<1x2x128xf32, #tpu.memory_space<vmem>>, vector<1x1x128xf32>,
    %9 = arith.mulf %2, %2 : vector<128x128xf32>
    %cst_9 = arith.constant dense<0.000000e+00> : vector<128xf32>
    %10 = vector.multi_reduction <add>, %9, %cst_9 [0] : vector<128x128xf32> to vector<128xf32>
    %11 = vector.shape_cast %10 : vector<128xf32> to vector<1x128xf32>
    %c0_10 = arith.constant 0 : index
    %c1 = arith.constant 1 : index
    %c0_11 = arith.constant 0 : index
    %12 = vector.load %arg4[%c0_10, %c1, %c0_11] : memref<1x2x128xf32, #tpu.memory_space<vmem>>, vector<1x1x128xf32>
    %13 = vector.shape_cast %12 : vector<1x1x128xf32> to vector<1x128xf32>
    %14 = vector.shape_cast %11 : vector<1x128xf32> to vector<1x1x128xf32>
    tpu.vector_store %arg4[%c0_10, %c1, %c0_11], %14 {strides = array<i32>} : memref<1x2x128xf32, #tpu.memory_space<vmem>>, vector<1x1x128xf32>,
    return
  }
  func.func @transform_0(%arg0: i32) -> (i32, i32) {
    %c0_i32 = arith.constant 0 : i32
    %c0_i32_0 = arith.constant 0 : i32
    return %arg0, %c0_i32 : i32, i32
  }
  func.func @transform_1(%arg0: i32) -> (i32, i32) {
    %c0_i32 = arith.constant 0 : i32
    %c0_i32_0 = arith.constant 0 : i32
    %c0_i32_1 = arith.constant 0 : i32
    return %c0_i32, %c0_i32_0 : i32, i32
  }
  func.func @transform_2(%arg0: i32) -> (i32, i32) {
    %c0_i32 = arith.constant 0 : i32
    %c0_i32_0 = arith.constant 0 : i32
    return %arg0, %c0_i32 : i32, i32
  }
  func.func @transform_3(%arg0: i32) -> (i32, i32, i32) {
    %c0_i32 = arith.constant 0 : i32
    %c0_i32_0 = arith.constant 0 : i32
    %c0_i32_1 = arith.constant 0 : i32
    return %arg0, %c0_i32, %c0_i32_0 : i32, i32, i32
  }
}

module attributes {stable_mosaic.version = 11 : i64} {
  func.func @_bn_relu_pad_kernel(%arg0: i32, %arg1: memref<256x128xf32, #tpu.memory_space<vmem>>, %arg2: memref<2x128xf32, #tpu.memory_space<vmem>>, %arg3: memref<1x18x18x128xf32, #tpu.memory_space<vmem>>) attributes {dimension_semantics = [#tpu.dimension_semantics<parallel>], iteration_bounds = array<i64: 2>, scalar_prefetch = 0 : i64, scratch_operands = 0 : i64, tpu.core_type = #tpu.core_type<tc>, window_params = [{transform_indices = @transform_0, window_bounds = array<i64: 256, 128>}, {pipeline_mode = #tpu.pipeline_mode<synchronous>, transform_indices = @transform_1, window_bounds = array<i64: 2, 128>}, {transform_indices = @transform_2, window_bounds = array<i64: 1, 18, 18, 128>}]} {
    %c0 = arith.constant 0 : index
    %c0_0 = arith.constant 0 : index
    %0 = vector.load %arg1[%c0, %c0_0] : memref<256x128xf32, #tpu.memory_space<vmem>>, vector<256x128xf32>
    %c0_1 = arith.constant 0 : index
    %c0_2 = arith.constant 0 : index
    %1 = vector.load %arg2[%c0_1, %c0_2] : memref<2x128xf32, #tpu.memory_space<vmem>>, vector<1x128xf32>
    %2 = vector.broadcast %1 : vector<1x128xf32> to vector<256x128xf32>
    %3 = arith.mulf %0, %2 : vector<256x128xf32>
    %c1 = arith.constant 1 : index
    %c0_3 = arith.constant 0 : index
    %4 = vector.load %arg2[%c1, %c0_3] : memref<2x128xf32, #tpu.memory_space<vmem>>, vector<1x128xf32>
    %5 = vector.broadcast %4 : vector<1x128xf32> to vector<256x128xf32>
    %6 = arith.addf %3, %5 : vector<256x128xf32>
    %cst = arith.constant 0.000000e+00 : f32
    %7 = vector.broadcast %cst : f32 to vector<256x128xf32>
    %8 = arith.maximumf %6, %7 : vector<256x128xf32>
    %cst_4 = arith.constant 0.000000e+00 : f32
    %9 = vector.broadcast %cst_4 : f32 to vector<1x18x18x128xf32>
    %c0_5 = arith.constant 0 : index
    %c0_6 = arith.constant 0 : index
    %c0_7 = arith.constant 0 : index
    %c0_8 = arith.constant 0 : index
    %10 = vector.load %arg3[%c0_5, %c0_6, %c0_7, %c0_8] : memref<1x18x18x128xf32, #tpu.memory_space<vmem>>, vector<1x18x18x128xf32>
    tpu.vector_store %arg3[%c0_5, %c0_6, %c0_7, %c0_8], %9 {strides = array<i32>} : memref<1x18x18x128xf32, #tpu.memory_space<vmem>>, vector<1x18x18x128xf32>,
    %11 = vector.shape_cast %8 : vector<256x128xf32> to vector<16x16x128xf32>
    %c0_9 = arith.constant 0 : index
    %c1_10 = arith.constant 1 : index
    %c1_11 = arith.constant 1 : index
    %c0_12 = arith.constant 0 : index
    %12 = vector.load %arg3[%c0_9, %c1_10, %c1_11, %c0_12] : memref<1x18x18x128xf32, #tpu.memory_space<vmem>>, vector<1x16x16x128xf32>
    %13 = vector.shape_cast %12 : vector<1x16x16x128xf32> to vector<16x16x128xf32>
    %14 = vector.shape_cast %11 : vector<16x16x128xf32> to vector<1x16x16x128xf32>
    tpu.vector_store %arg3[%c0_9, %c1_10, %c1_11, %c0_12], %14 {strides = array<i32>} : memref<1x18x18x128xf32, #tpu.memory_space<vmem>>, vector<1x16x16x128xf32>,
    return
  }
  func.func @transform_0(%arg0: i32) -> (i32, i32) {
    %c0_i32 = arith.constant 0 : i32
    %c0_i32_0 = arith.constant 0 : i32
    return %arg0, %c0_i32 : i32, i32
  }
  func.func @transform_1(%arg0: i32) -> (i32, i32) {
    %c0_i32 = arith.constant 0 : i32
    %c0_i32_0 = arith.constant 0 : i32
    %c0_i32_1 = arith.constant 0 : i32
    return %c0_i32, %c0_i32_0 : i32, i32
  }
  func.func @transform_2(%arg0: i32) -> (i32, i32, i32, i32) {
    %c0_i32 = arith.constant 0 : i32
    %c0_i32_0 = arith.constant 0 : i32
    %c0_i32_1 = arith.constant 0 : i32
    %c0_i32_2 = arith.constant 0 : i32
    return %arg0, %c0_i32, %c0_i32_0, %c0_i32_1 : i32, i32, i32, i32
  }
}

module attributes {stable_mosaic.version = 11 : i64} {
  func.func @_conv3x3_kernel(%arg0: i32, %arg1: memref<4x9x9x128xf32, #tpu.memory_space<vmem>>, %arg2: memref<3x3x128x128xf32, #tpu.memory_space<vmem>>, %arg3: memref<64x128xf32, #tpu.memory_space<vmem>>, %arg4: memref<1x2x128xf32, #tpu.memory_space<vmem>>) attributes {dimension_semantics = [#tpu.dimension_semantics<parallel>], iteration_bounds = array<i64: 2>, scalar_prefetch = 0 : i64, scratch_operands = 0 : i64, tpu.core_type = #tpu.core_type<tc>, window_params = [{transform_indices = @transform_0, window_bounds = array<i64: 4, 9, 9, 128>}, {pipeline_mode = #tpu.pipeline_mode<synchronous>, transform_indices = @transform_1, window_bounds = array<i64: 3, 3, 128, 128>}, {transform_indices = @transform_2, window_bounds = array<i64: 64, 128>}, {transform_indices = @transform_3, window_bounds = array<i64: 1, 2, 128>}]} {
    %cst = arith.constant 0.000000e+00 : f32
    %0 = vector.broadcast %cst : f32 to vector<64x128xf32>
    %c0 = arith.constant 0 : index
    %c0_0 = arith.constant 0 : index
    %c0_1 = arith.constant 0 : index
    %c0_2 = arith.constant 0 : index
    %1 = vector.load %arg1[%c0, %c0_0, %c0_1, %c0_2] : memref<4x9x9x128xf32, #tpu.memory_space<vmem>>, vector<1x8x8x128xf32>
    %2 = vector.shape_cast %1 : vector<1x8x8x128xf32> to vector<8x8x128xf32>
    %3 = vector.shape_cast %2 : vector<8x8x128xf32> to vector<64x128xf32>
    %c0_3 = arith.constant 0 : index
    %c0_4 = arith.constant 0 : index
    %c0_5 = arith.constant 0 : index
    %c0_6 = arith.constant 0 : index
    %4 = vector.load %arg2[%c0_3, %c0_4, %c0_5, %c0_6] : memref<3x3x128x128xf32, #tpu.memory_space<vmem>>, vector<1x1x128x128xf32>
    %5 = vector.shape_cast %4 : vector<1x1x128x128xf32> to vector<128x128xf32>
    %cst_7 = arith.constant dense<0.000000e+00> : vector<64x128xf32>
    %6 = tpu.matmul %3, %5, %cst_7 {dimension_numbers = #tpu.dot_dimension_numbers<[1], [0], [0], [1], [0, 0, 1, 1], [], []>} : vector<64x128xf32>, vector<128x128xf32>, vector<64x128xf32> -> vector<64x128xf32>
    %7 = arith.addf %0, %6 : vector<64x128xf32>
    %c1 = arith.constant 1 : index
    %c0_8 = arith.constant 0 : index
    %c0_9 = arith.constant 0 : index
    %c0_10 = arith.constant 0 : index
    %8 = vector.load %arg1[%c1, %c0_8, %c0_9, %c0_10] : memref<4x9x9x128xf32, #tpu.memory_space<vmem>>, vector<1x8x8x128xf32>
    %9 = vector.shape_cast %8 : vector<1x8x8x128xf32> to vector<8x8x128xf32>
    %10 = vector.shape_cast %9 : vector<8x8x128xf32> to vector<64x128xf32>
    %c0_11 = arith.constant 0 : index
    %c1_12 = arith.constant 1 : index
    %c0_13 = arith.constant 0 : index
    %c0_14 = arith.constant 0 : index
    %11 = vector.load %arg2[%c0_11, %c1_12, %c0_13, %c0_14] : memref<3x3x128x128xf32, #tpu.memory_space<vmem>>, vector<1x1x128x128xf32>
    %12 = vector.shape_cast %11 : vector<1x1x128x128xf32> to vector<128x128xf32>
    %cst_15 = arith.constant dense<0.000000e+00> : vector<64x128xf32>
    %13 = tpu.matmul %10, %12, %cst_15 {dimension_numbers = #tpu.dot_dimension_numbers<[1], [0], [0], [1], [0, 0, 1, 1], [], []>} : vector<64x128xf32>, vector<128x128xf32>, vector<64x128xf32> -> vector<64x128xf32>
    %14 = arith.addf %7, %13 : vector<64x128xf32>
    %c0_16 = arith.constant 0 : index
    %c0_17 = arith.constant 0 : index
    %c1_18 = arith.constant 1 : index
    %c0_19 = arith.constant 0 : index
    %15 = vector.load %arg1[%c0_16, %c0_17, %c1_18, %c0_19] : memref<4x9x9x128xf32, #tpu.memory_space<vmem>>, vector<1x8x8x128xf32>
    %16 = vector.shape_cast %15 : vector<1x8x8x128xf32> to vector<8x8x128xf32>
    %17 = vector.shape_cast %16 : vector<8x8x128xf32> to vector<64x128xf32>
    %c0_20 = arith.constant 0 : index
    %c2 = arith.constant 2 : index
    %c0_21 = arith.constant 0 : index
    %c0_22 = arith.constant 0 : index
    %18 = vector.load %arg2[%c0_20, %c2, %c0_21, %c0_22] : memref<3x3x128x128xf32, #tpu.memory_space<vmem>>, vector<1x1x128x128xf32>
    %19 = vector.shape_cast %18 : vector<1x1x128x128xf32> to vector<128x128xf32>
    %cst_23 = arith.constant dense<0.000000e+00> : vector<64x128xf32>
    %20 = tpu.matmul %17, %19, %cst_23 {dimension_numbers = #tpu.dot_dimension_numbers<[1], [0], [0], [1], [0, 0, 1, 1], [], []>} : vector<64x128xf32>, vector<128x128xf32>, vector<64x128xf32> -> vector<64x128xf32>
    %21 = arith.addf %14, %20 : vector<64x128xf32>
    %c2_24 = arith.constant 2 : index
    %c0_25 = arith.constant 0 : index
    %c0_26 = arith.constant 0 : index
    %c0_27 = arith.constant 0 : index
    %22 = vector.load %arg1[%c2_24, %c0_25, %c0_26, %c0_27] : memref<4x9x9x128xf32, #tpu.memory_space<vmem>>, vector<1x8x8x128xf32>
    %23 = vector.shape_cast %22 : vector<1x8x8x128xf32> to vector<8x8x128xf32>
    %24 = vector.shape_cast %23 : vector<8x8x128xf32> to vector<64x128xf32>
    %c1_28 = arith.constant 1 : index
    %c0_29 = arith.constant 0 : index
    %c0_30 = arith.constant 0 : index
    %c0_31 = arith.constant 0 : index
    %25 = vector.load %arg2[%c1_28, %c0_29, %c0_30, %c0_31] : memref<3x3x128x128xf32, #tpu.memory_space<vmem>>, vector<1x1x128x128xf32>
    %26 = vector.shape_cast %25 : vector<1x1x128x128xf32> to vector<128x128xf32>
    %cst_32 = arith.constant dense<0.000000e+00> : vector<64x128xf32>
    %27 = tpu.matmul %24, %26, %cst_32 {dimension_numbers = #tpu.dot_dimension_numbers<[1], [0], [0], [1], [0, 0, 1, 1], [], []>} : vector<64x128xf32>, vector<128x128xf32>, vector<64x128xf32> -> vector<64x128xf32>
    %28 = arith.addf %21, %27 : vector<64x128xf32>
    %c3 = arith.constant 3 : index
    %c0_33 = arith.constant 0 : index
    %c0_34 = arith.constant 0 : index
    %c0_35 = arith.constant 0 : index
    %29 = vector.load %arg1[%c3, %c0_33, %c0_34, %c0_35] : memref<4x9x9x128xf32, #tpu.memory_space<vmem>>, vector<1x8x8x128xf32>
    %30 = vector.shape_cast %29 : vector<1x8x8x128xf32> to vector<8x8x128xf32>
    %31 = vector.shape_cast %30 : vector<8x8x128xf32> to vector<64x128xf32>
    %c1_36 = arith.constant 1 : index
    %c1_37 = arith.constant 1 : index
    %c0_38 = arith.constant 0 : index
    %c0_39 = arith.constant 0 : index
    %32 = vector.load %arg2[%c1_36, %c1_37, %c0_38, %c0_39] : memref<3x3x128x128xf32, #tpu.memory_space<vmem>>, vector<1x1x128x128xf32>
    %33 = vector.shape_cast %32 : vector<1x1x128x128xf32> to vector<128x128xf32>
    %cst_40 = arith.constant dense<0.000000e+00> : vector<64x128xf32>
    %34 = tpu.matmul %31, %33, %cst_40 {dimension_numbers = #tpu.dot_dimension_numbers<[1], [0], [0], [1], [0, 0, 1, 1], [], []>} : vector<64x128xf32>, vector<128x128xf32>, vector<64x128xf32> -> vector<64x128xf32>
    %35 = arith.addf %28, %34 : vector<64x128xf32>
    %c2_41 = arith.constant 2 : index
    %c0_42 = arith.constant 0 : index
    %c1_43 = arith.constant 1 : index
    %c0_44 = arith.constant 0 : index
    %36 = vector.load %arg1[%c2_41, %c0_42, %c1_43, %c0_44] : memref<4x9x9x128xf32, #tpu.memory_space<vmem>>, vector<1x8x8x128xf32>
    %37 = vector.shape_cast %36 : vector<1x8x8x128xf32> to vector<8x8x128xf32>
    %38 = vector.shape_cast %37 : vector<8x8x128xf32> to vector<64x128xf32>
    %c1_45 = arith.constant 1 : index
    %c2_46 = arith.constant 2 : index
    %c0_47 = arith.constant 0 : index
    %c0_48 = arith.constant 0 : index
    %39 = vector.load %arg2[%c1_45, %c2_46, %c0_47, %c0_48] : memref<3x3x128x128xf32, #tpu.memory_space<vmem>>, vector<1x1x128x128xf32>
    %40 = vector.shape_cast %39 : vector<1x1x128x128xf32> to vector<128x128xf32>
    %cst_49 = arith.constant dense<0.000000e+00> : vector<64x128xf32>
    %41 = tpu.matmul %38, %40, %cst_49 {dimension_numbers = #tpu.dot_dimension_numbers<[1], [0], [0], [1], [0, 0, 1, 1], [], []>} : vector<64x128xf32>, vector<128x128xf32>, vector<64x128xf32> -> vector<64x128xf32>
    %42 = arith.addf %35, %41 : vector<64x128xf32>
    %c0_50 = arith.constant 0 : index
    %c1_51 = arith.constant 1 : index
    %c0_52 = arith.constant 0 : index
    %c0_53 = arith.constant 0 : index
    %43 = vector.load %arg1[%c0_50, %c1_51, %c0_52, %c0_53] : memref<4x9x9x128xf32, #tpu.memory_space<vmem>>, vector<1x8x8x128xf32>
    %44 = vector.shape_cast %43 : vector<1x8x8x128xf32> to vector<8x8x128xf32>
    %45 = vector.shape_cast %44 : vector<8x8x128xf32> to vector<64x128xf32>
    %c2_54 = arith.constant 2 : index
    %c0_55 = arith.constant 0 : index
    %c0_56 = arith.constant 0 : index
    %c0_57 = arith.constant 0 : index
    %46 = vector.load %arg2[%c2_54, %c0_55, %c0_56, %c0_57] : memref<3x3x128x128xf32, #tpu.memory_space<vmem>>, vector<1x1x128x128xf32>
    %47 = vector.shape_cast %46 : vector<1x1x128x128xf32> to vector<128x128xf32>
    %cst_58 = arith.constant dense<0.000000e+00> : vector<64x128xf32>
    %48 = tpu.matmul %45, %47, %cst_58 {dimension_numbers = #tpu.dot_dimension_numbers<[1], [0], [0], [1], [0, 0, 1, 1], [], []>} : vector<64x128xf32>, vector<128x128xf32>, vector<64x128xf32> -> vector<64x128xf32>
    %49 = arith.addf %42, %48 : vector<64x128xf32>
    %c1_59 = arith.constant 1 : index
    %c1_60 = arith.constant 1 : index
    %c0_61 = arith.constant 0 : index
    %c0_62 = arith.constant 0 : index
    %50 = vector.load %arg1[%c1_59, %c1_60, %c0_61, %c0_62] : memref<4x9x9x128xf32, #tpu.memory_space<vmem>>, vector<1x8x8x128xf32>
    %51 = vector.shape_cast %50 : vector<1x8x8x128xf32> to vector<8x8x128xf32>
    %52 = vector.shape_cast %51 : vector<8x8x128xf32> to vector<64x128xf32>
    %c2_63 = arith.constant 2 : index
    %c1_64 = arith.constant 1 : index
    %c0_65 = arith.constant 0 : index
    %c0_66 = arith.constant 0 : index
    %53 = vector.load %arg2[%c2_63, %c1_64, %c0_65, %c0_66] : memref<3x3x128x128xf32, #tpu.memory_space<vmem>>, vector<1x1x128x128xf32>
    %54 = vector.shape_cast %53 : vector<1x1x128x128xf32> to vector<128x128xf32>
    %cst_67 = arith.constant dense<0.000000e+00> : vector<64x128xf32>
    %55 = tpu.matmul %52, %54, %cst_67 {dimension_numbers = #tpu.dot_dimension_numbers<[1], [0], [0], [1], [0, 0, 1, 1], [], []>} : vector<64x128xf32>, vector<128x128xf32>, vector<64x128xf32> -> vector<64x128xf32>
    %56 = arith.addf %49, %55 : vector<64x128xf32>
    %c0_68 = arith.constant 0 : index
    %c1_69 = arith.constant 1 : index
    %c1_70 = arith.constant 1 : index
    %c0_71 = arith.constant 0 : index
    %57 = vector.load %arg1[%c0_68, %c1_69, %c1_70, %c0_71] : memref<4x9x9x128xf32, #tpu.memory_space<vmem>>, vector<1x8x8x128xf32>
    %58 = vector.shape_cast %57 : vector<1x8x8x128xf32> to vector<8x8x128xf32>
    %59 = vector.shape_cast %58 : vector<8x8x128xf32> to vector<64x128xf32>
    %c2_72 = arith.constant 2 : index
    %c2_73 = arith.constant 2 : index
    %c0_74 = arith.constant 0 : index
    %c0_75 = arith.constant 0 : index
    %60 = vector.load %arg2[%c2_72, %c2_73, %c0_74, %c0_75] : memref<3x3x128x128xf32, #tpu.memory_space<vmem>>, vector<1x1x128x128xf32>
    %61 = vector.shape_cast %60 : vector<1x1x128x128xf32> to vector<128x128xf32>
    %cst_76 = arith.constant dense<0.000000e+00> : vector<64x128xf32>
    %62 = tpu.matmul %59, %61, %cst_76 {dimension_numbers = #tpu.dot_dimension_numbers<[1], [0], [0], [1], [0, 0, 1, 1], [], []>} : vector<64x128xf32>, vector<128x128xf32>, vector<64x128xf32> -> vector<64x128xf32>
    %63 = arith.addf %56, %62 : vector<64x128xf32>
    %c0_77 = arith.constant 0 : index
    %c0_78 = arith.constant 0 : index
    %64 = vector.load %arg3[%c0_77, %c0_78] : memref<64x128xf32, #tpu.memory_space<vmem>>, vector<64x128xf32>
    tpu.vector_store %arg3[%c0_77, %c0_78], %63 {strides = array<i32>} : memref<64x128xf32, #tpu.memory_space<vmem>>, vector<64x128xf32>,
    %cst_79 = arith.constant dense<0.000000e+00> : vector<128xf32>
    %65 = vector.multi_reduction <add>, %63, %cst_79 [0] : vector<64x128xf32> to vector<128xf32>
    %66 = vector.shape_cast %65 : vector<128xf32> to vector<1x128xf32>
    %c0_80 = arith.constant 0 : index
    %c0_81 = arith.constant 0 : index
    %c0_82 = arith.constant 0 : index
    %67 = vector.load %arg4[%c0_80, %c0_81, %c0_82] : memref<1x2x128xf32, #tpu.memory_space<vmem>>, vector<1x1x128xf32>
    %68 = vector.shape_cast %67 : vector<1x1x128xf32> to vector<1x128xf32>
    %69 = vector.shape_cast %66 : vector<1x128xf32> to vector<1x1x128xf32>
    tpu.vector_store %arg4[%c0_80, %c0_81, %c0_82], %69 {strides = array<i32>} : memref<1x2x128xf32, #tpu.memory_space<vmem>>, vector<1x1x128xf32>,
    %70 = arith.mulf %63, %63 : vector<64x128xf32>
    %cst_83 = arith.constant dense<0.000000e+00> : vector<128xf32>
    %71 = vector.multi_reduction <add>, %70, %cst_83 [0] : vector<64x128xf32> to vector<128xf32>
    %72 = vector.shape_cast %71 : vector<128xf32> to vector<1x128xf32>
    %c0_84 = arith.constant 0 : index
    %c1_85 = arith.constant 1 : index
    %c0_86 = arith.constant 0 : index
    %73 = vector.load %arg4[%c0_84, %c1_85, %c0_86] : memref<1x2x128xf32, #tpu.memory_space<vmem>>, vector<1x1x128xf32>
    %74 = vector.shape_cast %73 : vector<1x1x128xf32> to vector<1x128xf32>
    %75 = vector.shape_cast %72 : vector<1x128xf32> to vector<1x1x128xf32>
    tpu.vector_store %arg4[%c0_84, %c1_85, %c0_86], %75 {strides = array<i32>} : memref<1x2x128xf32, #tpu.memory_space<vmem>>, vector<1x1x128xf32>,
    return
  }
  func.func @transform_0(%arg0: i32) -> (i32, i32, i32, i32) {
    %c0_i32 = arith.constant 0 : i32
    %c0_i32_0 = arith.constant 0 : i32
    %c0_i32_1 = arith.constant 0 : i32
    %c0_i32_2 = arith.constant 0 : i32
    return %arg0, %c0_i32, %c0_i32_0, %c0_i32_1 : i32, i32, i32, i32
  }
  func.func @transform_1(%arg0: i32) -> (i32, i32, i32, i32) {
    %c0_i32 = arith.constant 0 : i32
    %c0_i32_0 = arith.constant 0 : i32
    %c0_i32_1 = arith.constant 0 : i32
    %c0_i32_2 = arith.constant 0 : i32
    %c0_i32_3 = arith.constant 0 : i32
    return %c0_i32, %c0_i32_0, %c0_i32_1, %c0_i32_2 : i32, i32, i32, i32
  }
  func.func @transform_2(%arg0: i32) -> (i32, i32) {
    %c0_i32 = arith.constant 0 : i32
    %c0_i32_0 = arith.constant 0 : i32
    return %arg0, %c0_i32 : i32, i32
  }
  func.func @transform_3(%arg0: i32) -> (i32, i32, i32) {
    %c0_i32 = arith.constant 0 : i32
    %c0_i32_0 = arith.constant 0 : i32
    %c0_i32_1 = arith.constant 0 : i32
    return %arg0, %c0_i32, %c0_i32_0 : i32, i32, i32
  }
}

module attributes {stable_mosaic.version = 11 : i64} {
  func.func @_conv3_proj_kernel(%arg0: i32, %arg1: memref<128x128xf32, #tpu.memory_space<vmem>>, %arg2: memref<2x128xf32, #tpu.memory_space<vmem>>, %arg3: memref<128x128xf32, #tpu.memory_space<vmem>>, %arg4: memref<128x128xf32, #tpu.memory_space<vmem>>, %arg5: memref<128x128xf32, #tpu.memory_space<vmem>>, %arg6: memref<128x128xf32, #tpu.memory_space<vmem>>, %arg7: memref<128x128xf32, #tpu.memory_space<vmem>>, %arg8: memref<1x2x128xf32, #tpu.memory_space<vmem>>, %arg9: memref<1x2x128xf32, #tpu.memory_space<vmem>>) attributes {dimension_semantics = [#tpu.dimension_semantics<parallel>], iteration_bounds = array<i64: 1>, scalar_prefetch = 0 : i64, scratch_operands = 0 : i64, tpu.core_type = #tpu.core_type<tc>, window_params = [{transform_indices = @transform_0, window_bounds = array<i64: 128, 128>}, {pipeline_mode = #tpu.pipeline_mode<synchronous>, transform_indices = @transform_1, window_bounds = array<i64: 2, 128>}, {pipeline_mode = #tpu.pipeline_mode<synchronous>, transform_indices = @transform_2, window_bounds = array<i64: 128, 128>}, {transform_indices = @transform_3, window_bounds = array<i64: 128, 128>}, {pipeline_mode = #tpu.pipeline_mode<synchronous>, transform_indices = @transform_4, window_bounds = array<i64: 128, 128>}, {transform_indices = @transform_5, window_bounds = array<i64: 128, 128>}, {transform_indices = @transform_6, window_bounds = array<i64: 128, 128>}, {transform_indices = @transform_7, window_bounds = array<i64: 1, 2, 128>}, {transform_indices = @transform_8, window_bounds = array<i64: 1, 2, 128>}]} {
    %c0 = arith.constant 0 : index
    %c0_0 = arith.constant 0 : index
    %0 = vector.load %arg1[%c0, %c0_0] : memref<128x128xf32, #tpu.memory_space<vmem>>, vector<128x128xf32>
    %c0_1 = arith.constant 0 : index
    %c0_2 = arith.constant 0 : index
    %1 = vector.load %arg2[%c0_1, %c0_2] : memref<2x128xf32, #tpu.memory_space<vmem>>, vector<1x128xf32>
    %2 = vector.broadcast %1 : vector<1x128xf32> to vector<128x128xf32>
    %3 = arith.mulf %0, %2 : vector<128x128xf32>
    %c1 = arith.constant 1 : index
    %c0_3 = arith.constant 0 : index
    %4 = vector.load %arg2[%c1, %c0_3] : memref<2x128xf32, #tpu.memory_space<vmem>>, vector<1x128xf32>
    %5 = vector.broadcast %4 : vector<1x128xf32> to vector<128x128xf32>
    %6 = arith.addf %3, %5 : vector<128x128xf32>
    %cst = arith.constant 0.000000e+00 : f32
    %7 = vector.broadcast %cst : f32 to vector<128x128xf32>
    %8 = arith.maximumf %6, %7 : vector<128x128xf32>
    %c0_4 = arith.constant 0 : index
    %c0_5 = arith.constant 0 : index
    %9 = vector.load %arg3[%c0_4, %c0_5] : memref<128x128xf32, #tpu.memory_space<vmem>>, vector<128x128xf32>
    %cst_6 = arith.constant dense<0.000000e+00> : vector<128x128xf32>
    %10 = tpu.matmul %8, %9, %cst_6 {dimension_numbers = #tpu.dot_dimension_numbers<[1], [0], [0], [1], [0, 0, 1, 1], [], []>} : vector<128x128xf32>, vector<128x128xf32>, vector<128x128xf32> -> vector<128x128xf32>
    %c0_7 = arith.constant 0 : index
    %c0_8 = arith.constant 0 : index
    %11 = vector.load %arg6[%c0_7, %c0_8] : memref<128x128xf32, #tpu.memory_space<vmem>>, vector<128x128xf32>
    tpu.vector_store %arg6[%c0_7, %c0_8], %10 {strides = array<i32>} : memref<128x128xf32, #tpu.memory_space<vmem>>, vector<128x128xf32>,
    %cst_9 = arith.constant dense<0.000000e+00> : vector<128xf32>
    %12 = vector.multi_reduction <add>, %10, %cst_9 [0] : vector<128x128xf32> to vector<128xf32>
    %13 = vector.shape_cast %12 : vector<128xf32> to vector<1x128xf32>
    %c0_10 = arith.constant 0 : index
    %c0_11 = arith.constant 0 : index
    %c0_12 = arith.constant 0 : index
    %14 = vector.load %arg8[%c0_10, %c0_11, %c0_12] : memref<1x2x128xf32, #tpu.memory_space<vmem>>, vector<1x1x128xf32>
    %15 = vector.shape_cast %14 : vector<1x1x128xf32> to vector<1x128xf32>
    %16 = vector.shape_cast %13 : vector<1x128xf32> to vector<1x1x128xf32>
    tpu.vector_store %arg8[%c0_10, %c0_11, %c0_12], %16 {strides = array<i32>} : memref<1x2x128xf32, #tpu.memory_space<vmem>>, vector<1x1x128xf32>,
    %17 = arith.mulf %10, %10 : vector<128x128xf32>
    %cst_13 = arith.constant dense<0.000000e+00> : vector<128xf32>
    %18 = vector.multi_reduction <add>, %17, %cst_13 [0] : vector<128x128xf32> to vector<128xf32>
    %19 = vector.shape_cast %18 : vector<128xf32> to vector<1x128xf32>
    %c0_14 = arith.constant 0 : index
    %c1_15 = arith.constant 1 : index
    %c0_16 = arith.constant 0 : index
    %20 = vector.load %arg8[%c0_14, %c1_15, %c0_16] : memref<1x2x128xf32, #tpu.memory_space<vmem>>, vector<1x1x128xf32>
    %21 = vector.shape_cast %20 : vector<1x1x128xf32> to vector<1x128xf32>
    %22 = vector.shape_cast %19 : vector<1x128xf32> to vector<1x1x128xf32>
    tpu.vector_store %arg8[%c0_14, %c1_15, %c0_16], %22 {strides = array<i32>} : memref<1x2x128xf32, #tpu.memory_space<vmem>>, vector<1x1x128xf32>,
    %c0_17 = arith.constant 0 : index
    %c0_18 = arith.constant 0 : index
    %23 = vector.load %arg4[%c0_17, %c0_18] : memref<128x128xf32, #tpu.memory_space<vmem>>, vector<128x128xf32>
    %c0_19 = arith.constant 0 : index
    %c0_20 = arith.constant 0 : index
    %24 = vector.load %arg5[%c0_19, %c0_20] : memref<128x128xf32, #tpu.memory_space<vmem>>, vector<128x128xf32>
    %cst_21 = arith.constant dense<0.000000e+00> : vector<128x128xf32>
    %25 = tpu.matmul %23, %24, %cst_21 {dimension_numbers = #tpu.dot_dimension_numbers<[1], [0], [0], [1], [0, 0, 1, 1], [], []>} : vector<128x128xf32>, vector<128x128xf32>, vector<128x128xf32> -> vector<128x128xf32>
    %c0_22 = arith.constant 0 : index
    %c0_23 = arith.constant 0 : index
    %26 = vector.load %arg7[%c0_22, %c0_23] : memref<128x128xf32, #tpu.memory_space<vmem>>, vector<128x128xf32>
    tpu.vector_store %arg7[%c0_22, %c0_23], %25 {strides = array<i32>} : memref<128x128xf32, #tpu.memory_space<vmem>>, vector<128x128xf32>,
    %cst_24 = arith.constant dense<0.000000e+00> : vector<128xf32>
    %27 = vector.multi_reduction <add>, %25, %cst_24 [0] : vector<128x128xf32> to vector<128xf32>
    %28 = vector.shape_cast %27 : vector<128xf32> to vector<1x128xf32>
    %c0_25 = arith.constant 0 : index
    %c0_26 = arith.constant 0 : index
    %c0_27 = arith.constant 0 : index
    %29 = vector.load %arg9[%c0_25, %c0_26, %c0_27] : memref<1x2x128xf32, #tpu.memory_space<vmem>>, vector<1x1x128xf32>
    %30 = vector.shape_cast %29 : vector<1x1x128xf32> to vector<1x128xf32>
    %31 = vector.shape_cast %28 : vector<1x128xf32> to vector<1x1x128xf32>
    tpu.vector_store %arg9[%c0_25, %c0_26, %c0_27], %31 {strides = array<i32>} : memref<1x2x128xf32, #tpu.memory_space<vmem>>, vector<1x1x128xf32>,
    %32 = arith.mulf %25, %25 : vector<128x128xf32>
    %cst_28 = arith.constant dense<0.000000e+00> : vector<128xf32>
    %33 = vector.multi_reduction <add>, %32, %cst_28 [0] : vector<128x128xf32> to vector<128xf32>
    %34 = vector.shape_cast %33 : vector<128xf32> to vector<1x128xf32>
    %c0_29 = arith.constant 0 : index
    %c1_30 = arith.constant 1 : index
    %c0_31 = arith.constant 0 : index
    %35 = vector.load %arg9[%c0_29, %c1_30, %c0_31] : memref<1x2x128xf32, #tpu.memory_space<vmem>>, vector<1x1x128xf32>
    %36 = vector.shape_cast %35 : vector<1x1x128xf32> to vector<1x128xf32>
    %37 = vector.shape_cast %34 : vector<1x128xf32> to vector<1x1x128xf32>
    tpu.vector_store %arg9[%c0_29, %c1_30, %c0_31], %37 {strides = array<i32>} : memref<1x2x128xf32, #tpu.memory_space<vmem>>, vector<1x1x128xf32>,
    return
  }
  func.func @transform_0(%arg0: i32) -> (i32, i32) {
    %c0_i32 = arith.constant 0 : i32
    %c0_i32_0 = arith.constant 0 : i32
    return %arg0, %c0_i32 : i32, i32
  }
  func.func @transform_1(%arg0: i32) -> (i32, i32) {
    %c0_i32 = arith.constant 0 : i32
    %c0_i32_0 = arith.constant 0 : i32
    %c0_i32_1 = arith.constant 0 : i32
    return %c0_i32, %c0_i32_0 : i32, i32
  }
  func.func @transform_2(%arg0: i32) -> (i32, i32) {
    %c0_i32 = arith.constant 0 : i32
    %c0_i32_0 = arith.constant 0 : i32
    %c0_i32_1 = arith.constant 0 : i32
    return %c0_i32, %c0_i32_0 : i32, i32
  }
  func.func @transform_3(%arg0: i32) -> (i32, i32) {
    %c0_i32 = arith.constant 0 : i32
    %c0_i32_0 = arith.constant 0 : i32
    return %arg0, %c0_i32 : i32, i32
  }
  func.func @transform_4(%arg0: i32) -> (i32, i32) {
    %c0_i32 = arith.constant 0 : i32
    %c0_i32_0 = arith.constant 0 : i32
    %c0_i32_1 = arith.constant 0 : i32
    return %c0_i32, %c0_i32_0 : i32, i32
  }
  func.func @transform_5(%arg0: i32) -> (i32, i32) {
    %c0_i32 = arith.constant 0 : i32
    %c0_i32_0 = arith.constant 0 : i32
    return %arg0, %c0_i32 : i32, i32
  }
  func.func @transform_6(%arg0: i32) -> (i32, i32) {
    %c0_i32 = arith.constant 0 : i32
    %c0_i32_0 = arith.constant 0 : i32
    return %arg0, %c0_i32 : i32, i32
  }
  func.func @transform_7(%arg0: i32) -> (i32, i32, i32) {
    %c0_i32 = arith.constant 0 : i32
    %c0_i32_0 = arith.constant 0 : i32
    %c0_i32_1 = arith.constant 0 : i32
    return %arg0, %c0_i32, %c0_i32_0 : i32, i32, i32
  }
  func.func @transform_8(%arg0: i32) -> (i32, i32, i32) {
    %c0_i32 = arith.constant 0 : i32
    %c0_i32_0 = arith.constant 0 : i32
    %c0_i32_1 = arith.constant 0 : i32
    return %arg0, %c0_i32, %c0_i32_0 : i32, i32, i32
  }
}

module attributes {stable_mosaic.version = 11 : i64} {
  func.func @_finalize_proj_kernel(%arg0: i32, %arg1: memref<128x128xf32, #tpu.memory_space<vmem>>, %arg2: memref<2x128xf32, #tpu.memory_space<vmem>>, %arg3: memref<128x128xf32, #tpu.memory_space<vmem>>, %arg4: memref<2x128xf32, #tpu.memory_space<vmem>>, %arg5: memref<128x128xf32, #tpu.memory_space<vmem>>) attributes {dimension_semantics = [#tpu.dimension_semantics<parallel>], iteration_bounds = array<i64: 1>, scalar_prefetch = 0 : i64, scratch_operands = 0 : i64, tpu.core_type = #tpu.core_type<tc>, window_params = [{transform_indices = @transform_0, window_bounds = array<i64: 128, 128>}, {pipeline_mode = #tpu.pipeline_mode<synchronous>, transform_indices = @transform_1, window_bounds = array<i64: 2, 128>}, {transform_indices = @transform_2, window_bounds = array<i64: 128, 128>}, {pipeline_mode = #tpu.pipeline_mode<synchronous>, transform_indices = @transform_3, window_bounds = array<i64: 2, 128>}, {transform_indices = @transform_4, window_bounds = array<i64: 128, 128>}]} {
    %c0 = arith.constant 0 : index
    %c0_0 = arith.constant 0 : index
    %0 = vector.load %arg1[%c0, %c0_0] : memref<128x128xf32, #tpu.memory_space<vmem>>, vector<128x128xf32>
    %c0_1 = arith.constant 0 : index
    %c0_2 = arith.constant 0 : index
    %1 = vector.load %arg2[%c0_1, %c0_2] : memref<2x128xf32, #tpu.memory_space<vmem>>, vector<1x128xf32>
    %2 = vector.broadcast %1 : vector<1x128xf32> to vector<128x128xf32>
    %3 = arith.mulf %0, %2 : vector<128x128xf32>
    %c1 = arith.constant 1 : index
    %c0_3 = arith.constant 0 : index
    %4 = vector.load %arg2[%c1, %c0_3] : memref<2x128xf32, #tpu.memory_space<vmem>>, vector<1x128xf32>
    %5 = vector.broadcast %4 : vector<1x128xf32> to vector<128x128xf32>
    %6 = arith.addf %3, %5 : vector<128x128xf32>
    %c0_4 = arith.constant 0 : index
    %c0_5 = arith.constant 0 : index
    %7 = vector.load %arg3[%c0_4, %c0_5] : memref<128x128xf32, #tpu.memory_space<vmem>>, vector<128x128xf32>
    %c0_6 = arith.constant 0 : index
    %c0_7 = arith.constant 0 : index
    %8 = vector.load %arg4[%c0_6, %c0_7] : memref<2x128xf32, #tpu.memory_space<vmem>>, vector<1x128xf32>
    %9 = vector.broadcast %8 : vector<1x128xf32> to vector<128x128xf32>
    %10 = arith.mulf %7, %9 : vector<128x128xf32>
    %c1_8 = arith.constant 1 : index
    %c0_9 = arith.constant 0 : index
    %11 = vector.load %arg4[%c1_8, %c0_9] : memref<2x128xf32, #tpu.memory_space<vmem>>, vector<1x128xf32>
    %12 = vector.broadcast %11 : vector<1x128xf32> to vector<128x128xf32>
    %13 = arith.addf %10, %12 : vector<128x128xf32>
    %14 = arith.addf %6, %13 : vector<128x128xf32>
    %cst = arith.constant 0.000000e+00 : f32
    %15 = vector.broadcast %cst : f32 to vector<128x128xf32>
    %16 = arith.maximumf %14, %15 : vector<128x128xf32>
    %c0_10 = arith.constant 0 : index
    %c0_11 = arith.constant 0 : index
    %17 = vector.load %arg5[%c0_10, %c0_11] : memref<128x128xf32, #tpu.memory_space<vmem>>, vector<128x128xf32>
    tpu.vector_store %arg5[%c0_10, %c0_11], %16 {strides = array<i32>} : memref<128x128xf32, #tpu.memory_space<vmem>>, vector<128x128xf32>,
    return
  }
  func.func @transform_0(%arg0: i32) -> (i32, i32) {
    %c0_i32 = arith.constant 0 : i32
    %c0_i32_0 = arith.constant 0 : i32
    return %arg0, %c0_i32 : i32, i32
  }
  func.func @transform_1(%arg0: i32) -> (i32, i32) {
    %c0_i32 = arith.constant 0 : i32
    %c0_i32_0 = arith.constant 0 : i32
    %c0_i32_1 = arith.constant 0 : i32
    return %c0_i32, %c0_i32_0 : i32, i32
  }
  func.func @transform_2(%arg0: i32) -> (i32, i32) {
    %c0_i32 = arith.constant 0 : i32
    %c0_i32_0 = arith.constant 0 : i32
    return %arg0, %c0_i32 : i32, i32
  }
  func.func @transform_3(%arg0: i32) -> (i32, i32) {
    %c0_i32 = arith.constant 0 : i32
    %c0_i32_0 = arith.constant 0 : i32
    %c0_i32_1 = arith.constant 0 : i32
    return %c0_i32, %c0_i32_0 : i32, i32
  }
  func.func @transform_4(%arg0: i32) -> (i32, i32) {
    %c0_i32 = arith.constant 0 : i32
    %c0_i32_0 = arith.constant 0 : i32
    return %arg0, %c0_i32 : i32, i32
  }
}

</mosaic_0001>

<llo_original>
// kernel: bottleneck_forward.5
$region0: #{bottleneck_forward.5}
  #allocation0 [shape = 'u32[]', space=smem, size = 0x4, offset = 0x4, fixed_abs, tag = 'smem constant byte address 0x4 - core index']
  #allocation1 [shape = 'u32[144,128]{1,0:T(1,128)}', space=vmem, size = 0x12000, scoped, tag = 'internal scratch']
  %s0 = inlined_call_operand.vmem [shape: f32[512,128], index: 0, kind: input, shape index: {}]
  %s1 = inlined_call_operand.vmem [shape: f32[128,128], index: 1, kind: input, shape index: {}]
  %s2 = inlined_call_operand.vmem [shape: f32[512,128], index: 2, kind: output, shape index: {0}]
  %s3 = inlined_call_operand.vmem [shape: f32[4,2,128], index: 3, kind: output, shape index: {1}]
  %4 = xla_tuple %s2, %s3
  %s5 = sld [smem:[#allocation0]]
  $region49: #{bottleneck_forward.5} parent=0
    _
  %s7 = ssub.s32 1, %s5
  %s8 = scalar_select 0, %s7, %s5
  loop: start=0, step=1, limit=6
  $region2: #{bottleneck_forward.5} parent=0 // loop_pre_header
    _
  $region3: #{bottleneck_forward.5} parent=0 // loop_header
    %s10 = sphi 0, %s14
    %p11 = scmp.ge.s32.totalorder %s10, 6
    %s20 = sphi 0, %s22
    %s23 = sphi 0, %s20
    %s24 = sphi 0, %s23
    %s40 = sphi 0, %s24
    %s44 = sphi 0, %s44
    %s46 = sphi 0, %s44
    %s47 = sphi 0, %s46
    %s61 = sphi 0, %s47
    %s67 = sphi 0, %s69
    %s70 = sphi 0, %s67
    %s71 = sphi 0, %s70
    %s87 = sphi 0, %s71
    %s93 = sphi 0, %s95
    %s96 = sphi 0, %s93
    %s97 = sphi 0, %s96
    %s113 = sphi 0, %s97
  $region4: #{bottleneck_forward.5} parent=0 // loop_header_branch
    %13 = sbr.rel (%p11) target = $region8
  $region5: #{bottleneck_forward.5} parent=0 // loop_body
    %s15 = ssub.s32 %s10, 1
    %s16 = ssub.s32 %s10, 2
    %s17 = sadd.s32 %s10, 1
    %s18 = ssub.s32 %s10, %s17
    %p19 = scmp.eq.s32.totalorder %s18, 0
    %s21 = sadd.s32 %s20, 1
    %s22 = scalar_select %p19, %s20, %s21
    %p25 = pneg %p19
    %p26 = scmp.eq.s32.totalorder %s10, 3
    %p27 = por %p25, %p26
    %p28 = scmp.ne.s32.totalorder %s20, %s23
    %p29 = scmp.eq.s32.totalorder %s10, 0
    %p30 = por %p28, %p29
    %p31 = scmp.ne.s32.totalorder %s20, %s23
    %p32 = scmp.eq.s32.totalorder %s15, 3
    %p33 = por %p31, %p32
    %p34 = scmp.ne.s32.totalorder %s23, %s24
    %p35 = scmp.eq.s32.totalorder %s15, 0
    %p36 = por %p34, %p35
    %p37 = scmp.ne.s32.totalorder %s23, %s24
    %p38 = scmp.eq.s32.totalorder %s16, 3
    %p39 = por %p37, %p38
    %p41 = scmp.ne.s32.totalorder %s24, %s40
    %p42 = scmp.eq.s32.totalorder %s16, 0
    %p43 = por %p41, %p42
    %s45 = sadd.s32 %s44, 1
    %p48 = scmp.eq.s32.totalorder %s10, 3
    %p49 = scmp.ne.s32.totalorder %s44, %s46
    %p50 = scmp.eq.s32.totalorder %s10, 0
    %p51 = por %p49, %p50
    %p52 = scmp.ne.s32.totalorder %s44, %s46
    %p53 = scmp.eq.s32.totalorder %s15, 3
    %p54 = por %p52, %p53
    %p55 = scmp.ne.s32.totalorder %s46, %s47
    %p56 = scmp.eq.s32.totalorder %s15, 0
    %p57 = por %p55, %p56
    %p58 = scmp.ne.s32.totalorder %s46, %s47
    %p59 = scmp.eq.s32.totalorder %s16, 3
    %p60 = por %p58, %p59
    %p62 = scmp.ne.s32.totalorder %s47, %s61
    %p63 = scmp.eq.s32.totalorder %s16, 0
    %p64 = por %p62, %p63
    %s65 = ssub.s32 %s10, %s17
    %p66 = scmp.eq.s32.totalorder %s65, 0
    %s68 = sadd.s32 %s67, 1
    %s69 = scalar_select %p66, %s67, %s68
    %p72 = pneg %p66
    %p73 = scmp.eq.s32.totalorder %s10, 3
    %p74 = por %p72, %p73
    %p75 = scmp.ne.s32.totalorder %s67, %s70
    %p76 = scmp.eq.s32.totalorder %s10, 0
    %p77 = por %p75, %p76
    %p78 = scmp.ne.s32.totalorder %s67, %s70
    %p79 = scmp.eq.s32.totalorder %s15, 3
    %p80 = por %p78, %p79
    %p81 = scmp.ne.s32.totalorder %s70, %s71
    %p82 = scmp.eq.s32.totalorder %s15, 0
    %p83 = por %p81, %p82
    %p84 = scmp.ne.s32.totalorder %s70, %s71
    %p85 = scmp.eq.s32.totalorder %s16, 3
    %p86 = por %p84, %p85
    %p88 = scmp.ne.s32.totalorder %s71, %s87
    %p89 = scmp.eq.s32.totalorder %s16, 0
    %p90 = por %p88, %p89
    %s91 = ssub.s32 %s10, %s17
    %p92 = scmp.eq.s32.totalorder %s91, 0
    %s94 = sadd.s32 %s93, 1
    %s95 = scalar_select %p92, %s93, %s94
    %p98 = pneg %p92
    %p99 = scmp.eq.s32.totalorder %s10, 3
    %p100 = por %p98, %p99
    %p101 = scmp.ne.s32.totalorder %s93, %s96
    %p102 = scmp.eq.s32.totalorder %s10, 0
    %p103 = por %p101, %p102
    %p104 = scmp.ne.s32.totalorder %s93, %s96
    %p105 = scmp.eq.s32.totalorder %s15, 3
    %p106 = por %p104, %p105
    %p107 = scmp.ne.s32.totalorder %s96, %s97
    %p108 = scmp.eq.s32.totalorder %s15, 0
    %p109 = por %p107, %p108
    %p110 = scmp.ne.s32.totalorder %s96, %s97
    %p111 = scmp.eq.s32.totalorder %s16, 3
    %p112 = por %p110, %p111
    %p114 = scmp.ne.s32.totalorder %s97, %s113
    %p115 = scmp.eq.s32.totalorder %s16, 0
    %p116 = por %p114, %p115
    %p117 = scmp.le.s32.totalorder 1, %s10
    %p118 = scmp.lt.s32.totalorder %s10, 5
    %p119 = pnand %p117, %p118
    %p120 = pneg %p119
    // Predicated region
    $region9: #{bottleneck_forward.5} parent=5 // pred_check
      _
    $region10: #{bottleneck_forward.5} parent=5 // pred_check_branch
      %122 = sbr.rel (%p119) target = $region12
    $region11: #{bottleneck_forward.5} parent=5 // pred_region
      %s123 = ssub.s32 %s10, 1
      // Predicated region
      $region13: #{bottleneck_forward.5} parent=11 // pred_check
        %p124 = pneg %p57
      $region14: #{bottleneck_forward.5} parent=11 // pred_check_branch
        %126 = sbr.rel (%p124) target = $region16
      $region15: #{bottleneck_forward.5} parent=11 // pred_region
        _
      $region16: #{bottleneck_forward.5} parent=11 // pred_fallthru
        _
    $region12: #{bottleneck_forward.5} parent=5 // pred_fallthru
      _
    %p127 = scmp.lt.s32.totalorder %s10, 4
    // Predicated region
    $region17: #{bottleneck_forward.5} parent=5 // pred_check
      %p128 = pneg %p127
    $region18: #{bottleneck_forward.5} parent=5 // pred_check_branch
      %130 = sbr.rel (%p128) target = $region20
    $region19: #{bottleneck_forward.5} parent=5 // pred_region
      // Predicated region
      $region21: #{bottleneck_forward.5} parent=19 // pred_check
        %p131 = pneg %p30
      $region22: #{bottleneck_forward.5} parent=19 // pred_check_branch
        %133 = sbr.rel (%p131) target = $region24
      $region23: #{bottleneck_forward.5} parent=19 // pred_region
        %s134 = smul.u32 16, %s10
        %p135 = scmp.lt.s32.totalorder %s134, 63
        %s136 = scalar_select %p135, %s134, 63
        %s137 = smul.addr %s136, 8
        %s138 = scalar_lea.vmem %s0, %s137
        %s139 = smul.u32 16, %s10
      $region24: #{bottleneck_forward.5} parent=19 // pred_fallthru
        _
    $region20: #{bottleneck_forward.5} parent=5 // pred_fallthru
      _
    %p140 = scmp.le.s32.totalorder 1, %s10
    %p141 = scmp.lt.s32.totalorder %s10, 5
    %p142 = pnand %p140, %p141
    %p143 = pneg %p142
    // Predicated region
    $region25: #{bottleneck_forward.5} parent=5 // pred_check
      _
    $region26: #{bottleneck_forward.5} parent=5 // pred_check_branch
      %145 = sbr.rel (%p142) target = $region28
    $region27: #{bottleneck_forward.5} parent=5 // pred_region
      %s146 = ssub.s32 %s10, 1
      %s147 = smul.u32 16, %s15
      %p148 = scmp.lt.s32.totalorder %s147, 63
      %s149 = scalar_select %p148, %s147, 63
      %s150 = smul.addr %s149, 8
      %s151 = scalar_lea.vmem %s0, %s150
      %p152 = pneg %p36
      %p153 = pneg %p33
      %p154 = pneg %p57
      %p155 = pneg %p54
      %p156 = pneg %p83
      %p157 = pneg %p80
      %s158 = smul.u32 16, %s15
      %p159 = scmp.lt.s32.totalorder %s158, 63
      %s160 = scalar_select %p159, %s158, 63
      %s161 = smul.addr %s160, 8
      %s162 = scalar_lea.vmem %s2, %s161
      %p163 = pneg %p109
      %p164 = pneg %p106
      %p165 = scmp.lt.s32.totalorder %s15, 3
      %s166 = scalar_select %p165, %s15, 3
      %s167 = smul.addr %s166, 2
      %s168 = scalar_lea.vmem %s3, %s167
      %s169 = smul.u32 16, %s15
      %p170 = scmp.lt.s32.totalorder %s169, 63
      %s171 = scalar_select %p170, %s169, 63
      %s172 = smul.addr %s171, 8
      %s173 = scalar_lea.vmem %s0, %s172
      %s174 = smul.u32 16, %s15
      %s175 = smul.u32 16, %s15
      %p176 = scmp.lt.s32.totalorder %s175, 63
      %s177 = scalar_select %p176, %s175, 63
      %s178 = smul.addr %s177, 8
      %s179 = scalar_lea.vmem %s2, %s178
      %s180 = smul.u32 16, %s15
      %p181 = scmp.lt.s32.totalorder %s15, 3
      %s182 = scalar_select %p181, %s15, 3
      %s183 = smul.addr %s182, 2
      %s184 = scalar_lea.vmem %s3, %s183
      %v185 = vld [vmem:[%s173] sm:$0xff]
      %v186 = vld [vmem:[%s173 + $0x8] sm:$0xff]
      %v187 = vld [vmem:[%s173 + $0x10] sm:$0xff]
      %v188 = vld [vmem:[%s173 + $0x18] sm:$0xff]
      %v189 = vld [vmem:[%s173 + $0x20] sm:$0xff]
      %v190 = vld [vmem:[%s173 + $0x28] sm:$0xff]
      %v191 = vld [vmem:[%s173 + $0x30] sm:$0xff]
      %v192 = vld [vmem:[%s173 + $0x38] sm:$0xff]
      %v193 = vld [vmem:[%s173 + $0x40] sm:$0xff]
      %v194 = vld [vmem:[%s173 + $0x48] sm:$0xff]
      %v195 = vld [vmem:[%s173 + $0x50] sm:$0xff]
      %v196 = vld [vmem:[%s173 + $0x58] sm:$0xff]
      %v197 = vld [vmem:[%s173 + $0x60] sm:$0xff]
      %v198 = vld [vmem:[%s173 + $0x68] sm:$0xff]
      %v199 = vld [vmem:[%s173 + $0x70] sm:$0xff]
      %v200 = vld [vmem:[%s173 + $0x78] sm:$0xff]
      %v201 = vld [vmem:[%s1] sm:$0xff]
      %v202 = vld [vmem:[%s1 + $0x8] sm:$0xff]
      %v203 = vld [vmem:[%s1 + $0x10] sm:$0xff]
      %v204 = vld [vmem:[%s1 + $0x18] sm:$0xff]
      %v205 = vld [vmem:[%s1 + $0x20] sm:$0xff]
      %v206 = vld [vmem:[%s1 + $0x28] sm:$0xff]
      %v207 = vld [vmem:[%s1 + $0x30] sm:$0xff]
      %v208 = vld [vmem:[%s1 + $0x38] sm:$0xff]
      %v209 = vld [vmem:[%s1 + $0x40] sm:$0xff]
      %v210 = vld [vmem:[%s1 + $0x48] sm:$0xff]
      %v211 = vld [vmem:[%s1 + $0x50] sm:$0xff]
      %v212 = vld [vmem:[%s1 + $0x58] sm:$0xff]
      %v213 = vld [vmem:[%s1 + $0x60] sm:$0xff]
      %v214 = vld [vmem:[%s1 + $0x68] sm:$0xff]
      %v215 = vld [vmem:[%s1 + $0x70] sm:$0xff]
      %v216 = vld [vmem:[%s1 + $0x78] sm:$0xff]
      %217 = vmatprep.subr.mxu0 0.0
      %218 = vmatpush1.msra.mxu0 %v216
      %219 = vmatprep.subr.mxu0 0.0
      %220 = vmatpush1.msra.mxu0 %v215
      %221 = vmatprep.subr.mxu0 0.0
      %222 = vmatpush1.msra.mxu0 %v214
      %223 = vmatprep.subr.mxu0 0.0
      %224 = vmatpush1.msra.mxu0 %v213
      %225 = vmatprep.subr.mxu0 0.0
      %226 = vmatpush1.msra.mxu0 %v212
      %227 = vmatprep.subr.mxu0 0.0
      %228 = vmatpush1.msra.mxu0 %v211
      %229 = vmatprep.subr.mxu0 0.0
      %230 = vmatpush1.msra.mxu0 %v210
      %231 = vmatprep.subr.mxu0 0.0
      %232 = vmatpush1.msra.mxu0 %v209
      %233 = vmatprep.subr.mxu0 0.0
      %234 = vmatpush1.msra.mxu0 %v208
      %235 = vmatprep.subr.mxu0 0.0
      %236 = vmatpush1.msra.mxu0 %v207
      %237 = vmatprep.subr.mxu0 0.0
      %238 = vmatpush1.msra.mxu0 %v206
      %239 = vmatprep.subr.mxu0 0.0
      %240 = vmatpush1.msra.mxu0 %v205
      %241 = vmatprep.subr.mxu0 0.0
      %242 = vmatpush1.msra.mxu0 %v204
      %243 = vmatprep.subr.mxu0 0.0
      %244 = vmatpush1.msra.mxu0 %v203
      %245 = vmatprep.subr.mxu0 0.0
      %246 = vmatpush1.msra.mxu0 %v202
      %247 = vmatprep.subr.mxu0 0.0
      %248 = vmatpush1.msra.mxu0 %v201
      %249 = vmatprep.subr.mxu0 0.0
      %250 = vmatpush2.msra.mxu0 0.0
      %251 = vmatprep.subr.mxu0 0.0
      %252 = vmatpush2.msra.mxu0 0.0
      %253 = vmatprep.subr.mxu0 0.0
      %254 = vmatpush2.msra.mxu0 0.0
      %255 = vmatprep.subr.mxu0 0.0
      %256 = vmatpush2.msra.mxu0 0.0
      %257 = vmatprep.subr.mxu0 0.0
      %258 = vmatpush2.msra.mxu0 0.0
      %259 = vmatprep.subr.mxu0 0.0
      %260 = vmatpush2.msra.mxu0 0.0
      %261 = vmatprep.subr.mxu0 0.0
      %262 = vmatpush2.msra.mxu0 0.0
      %263 = vmatprep.subr.mxu0 0.0
      %264 = vmatpush2.msra.mxu0 0.0
      %265 = vmatprep.subr.mxu0 0.0
      %266 = vmatpush2.msra.mxu0 0.0
      %267 = vmatprep.subr.mxu0 0.0
      %268 = vmatpush2.msra.mxu0 0.0
      %269 = vmatprep.subr.mxu0 0.0
      %270 = vmatpush2.msra.mxu0 0.0
      %271 = vmatprep.subr.mxu0 0.0
      %272 = vmatpush2.msra.mxu0 0.0
      %273 = vmatprep.subr.mxu0 0.0
      %274 = vmatpush2.msra.mxu0 0.0
      %275 = vmatprep.subr.mxu0 0.0
      %276 = vmatpush2.msra.mxu0 0.0
      %277 = vmatprep.subr.mxu0 0.0
      %278 = vmatpush2.msra.mxu0 0.0
      %279 = vmatprep.subr.mxu0 0.0
      %280 = vmatpush2.msra.mxu0 0.0
      %281 = vmatprep.mubr.f32.mxu0 0.0
      %282 = vmatmul.mubr.f32.gmra.mxu0 %v185
      %v283 = vpop.f32.mrf.mxu0
      %v284 = vadd.f32 0.0, %v283
      %v285 = vpop.f32.mrf.mxu0
      %286 = vmatprep.mubr.f32.mxu0 0.0
      %287 = vmatmul.mubr.f32.gmra.mxu0 %v186
      %v288 = vpop.f32.mrf.mxu0
      %v289 = vadd.f32 0.0, %v288
      %v290 = vpop.f32.mrf.mxu0
      %291 = vmatprep.mubr.f32.mxu0 0.0
      %292 = vmatmul.mubr.f32.gmra.mxu0 %v187
      %v293 = vpop.f32.mrf.mxu0
      %v294 = vadd.f32 0.0, %v293
      %v295 = vpop.f32.mrf.mxu0
      %296 = vmatprep.mubr.f32.mxu0 0.0
      %297 = vmatmul.mubr.f32.gmra.mxu0 %v188
      %v298 = vpop.f32.mrf.mxu0
      %v299 = vadd.f32 0.0, %v298
      %v300 = vpop.f32.mrf.mxu0
      %301 = vmatprep.mubr.f32.mxu0 0.0
      %302 = vmatmul.mubr.f32.gmra.mxu0 %v189
      %v303 = vpop.f32.mrf.mxu0
      %v304 = vadd.f32 0.0, %v303
      %v305 = vpop.f32.mrf.mxu0
      %306 = vmatprep.mubr.f32.mxu0 0.0
      %307 = vmatmul.mubr.f32.gmra.mxu0 %v190
      %v308 = vpop.f32.mrf.mxu0
      %v309 = vadd.f32 0.0, %v308
      %v310 = vpop.f32.mrf.mxu0
      %311 = vmatprep.mubr.f32.mxu0 0.0
      %312 = vmatmul.mubr.f32.gmra.mxu0 %v191
      %v313 = vpop.f32.mrf.mxu0
      %v314 = vadd.f32 0.0, %v313
      %v315 = vpop.f32.mrf.mxu0
      %316 = vmatprep.mubr.f32.mxu0 0.0
      %317 = vmatmul.mubr.f32.gmra.mxu0 %v192
      %v318 = vpop.f32.mrf.mxu0
      %v319 = vadd.f32 0.0, %v318
      %v320 = vpop.f32.mrf.mxu0
      %321 = vmatprep.mubr.f32.mxu0 0.0
      %322 = vmatmul.mubr.f32.gmra.mxu0 %v193
      %v323 = vpop.f32.mrf.mxu0
      %v324 = vadd.f32 0.0, %v323
      %v325 = vpop.f32.mrf.mxu0
      %326 = vmatprep.mubr.f32.mxu0 0.0
      %327 = vmatmul.mubr.f32.gmra.mxu0 %v194
      %v328 = vpop.f32.mrf.mxu0
      %v329 = vadd.f32 0.0, %v328
      %v330 = vpop.f32.mrf.mxu0
      %331 = vmatprep.mubr.f32.mxu0 0.0
      %332 = vmatmul.mubr.f32.gmra.mxu0 %v195
      %v333 = vpop.f32.mrf.mxu0
      %v334 = vadd.f32 0.0, %v333
      %v335 = vpop.f32.mrf.mxu0
      %336 = vmatprep.mubr.f32.mxu0 0.0
      %337 = vmatmul.mubr.f32.gmra.mxu0 %v196
      %v338 = vpop.f32.mrf.mxu0
      %v339 = vadd.f32 0.0, %v338
      %v340 = vpop.f32.mrf.mxu0
      %341 = vmatprep.mubr.f32.mxu0 0.0
      %342 = vmatmul.mubr.f32.gmra.mxu0 %v197
      %v343 = vpop.f32.mrf.mxu0
      %v344 = vadd.f32 0.0, %v343
      %v345 = vpop.f32.mrf.mxu0
      %346 = vmatprep.mubr.f32.mxu0 0.0
      %347 = vmatmul.mubr.f32.gmra.mxu0 %v198
      %v348 = vpop.f32.mrf.mxu0
      %v349 = vadd.f32 0.0, %v348
      %v350 = vpop.f32.mrf.mxu0
      %351 = vmatprep.mubr.f32.mxu0 0.0
      %352 = vmatmul.mubr.f32.gmra.mxu0 %v199
      %v353 = vpop.f32.mrf.mxu0
      %v354 = vadd.f32 0.0, %v353
      %v355 = vpop.f32.mrf.mxu0
      %356 = vmatprep.mubr.f32.mxu0 0.0
      %357 = vmatmul.mubr.f32.gmra.mxu0 %v200
      %v358 = vpop.f32.mrf.mxu0
      %v359 = vadd.f32 0.0, %v358
      %v360 = vpop.f32.mrf.mxu0
      %361 = vdwg.mxu0
      %362 = vst [vmem:[%s179] sm:$0xff] %v284
      %363 = vst [vmem:[%s179 + $0x8] sm:$0xff] %v289
      %364 = vst [vmem:[%s179 + $0x10] sm:$0xff] %v294
      %365 = vst [vmem:[%s179 + $0x18] sm:$0xff] %v299
      %366 = vst [vmem:[%s179 + $0x20] sm:$0xff] %v304
      %367 = vst [vmem:[%s179 + $0x28] sm:$0xff] %v309
      %368 = vst [vmem:[%s179 + $0x30] sm:$0xff] %v314
      %369 = vst [vmem:[%s179 + $0x38] sm:$0xff] %v319
      %370 = vst [vmem:[%s179 + $0x40] sm:$0xff] %v324
      %371 = vst [vmem:[%s179 + $0x48] sm:$0xff] %v329
      %372 = vst [vmem:[%s179 + $0x50] sm:$0xff] %v334
      %373 = vst [vmem:[%s179 + $0x58] sm:$0xff] %v339
      %374 = vst [vmem:[%s179 + $0x60] sm:$0xff] %v344
      %375 = vst [vmem:[%s179 + $0x68] sm:$0xff] %v349
      %376 = vst [vmem:[%s179 + $0x70] sm:$0xff] %v354
      %377 = vst [vmem:[%s179 + $0x78] sm:$0xff] %v359
      %v378 = vadd.f32 %v284, %v289
      %v379 = vadd.f32 %v378, %v294
      %v380 = vadd.f32 %v379, %v299
      %v381 = vadd.f32 %v380, %v304
      %v382 = vadd.f32 %v381, %v309
      %v383 = vadd.f32 %v382, %v314
      %v384 = vadd.f32 %v383, %v319
      %v385 = vadd.f32 %v384, %v324
      %v386 = vadd.f32 %v385, %v329
      %v387 = vadd.f32 %v386, %v334
      %v388 = vadd.f32 %v387, %v339
      %v389 = vadd.f32 %v388, %v344
      %v390 = vadd.f32 %v389, %v349
      %v391 = vadd.f32 %v390, %v354
      %v392 = vadd.f32 %v391, %v359
      %v393 = vrot.slane %v392, 4
      %v394 = vadd.f32 %v392, %v393
      %v395 = vrot.slane %v394, 2
      %v396 = vadd.f32 %v394, %v395
      %v397 = vrot.slane %v396, 1
      %v398 = vadd.f32 %v396, %v397
      %399 = vst [vmem:[%s184] sm:$0x1] %v398
      %v400 = vmul.f32 %v284, %v284
      %v401 = vmul.f32 %v289, %v289
      %v402 = vmul.f32 %v294, %v294
      %v403 = vmul.f32 %v299, %v299
      %v404 = vmul.f32 %v304, %v304
      %v405 = vmul.f32 %v309, %v309
      %v406 = vmul.f32 %v314, %v314
      %v407 = vmul.f32 %v319, %v319
      %v408 = vmul.f32 %v324, %v324
      %v409 = vmul.f32 %v329, %v329
      %v410 = vmul.f32 %v334, %v334
      %v411 = vmul.f32 %v339, %v339
      %v412 = vmul.f32 %v344, %v344
      %v413 = vmul.f32 %v349, %v349
      %v414 = vmul.f32 %v354, %v354
      %v415 = vmul.f32 %v359, %v359
      %v416 = vadd.f32 %v400, %v401
      %v417 = vadd.f32 %v416, %v402
      %v418 = vadd.f32 %v417, %v403
      %v419 = vadd.f32 %v418, %v404
      %v420 = vadd.f32 %v419, %v405
      %v421 = vadd.f32 %v420, %v406
      %v422 = vadd.f32 %v421, %v407
      %v423 = vadd.f32 %v422, %v408
      %v424 = vadd.f32 %v423, %v409
      %v425 = vadd.f32 %v424, %v410
      %v426 = vadd.f32 %v425, %v411
      %v427 = vadd.f32 %v426, %v412
      %v428 = vadd.f32 %v427, %v413
      %v429 = vadd.f32 %v428, %v414
      %v430 = vadd.f32 %v429, %v415
      %v431 = vrot.slane %v430, 4
      %v432 = vadd.f32 %v430, %v431
      %v433 = vrot.slane %v432, 2
      %v434 = vadd.f32 %v432, %v433
      %v435 = vrot.slane %v434, 1
      %v436 = vadd.f32 %v434, %v435
      %437 = vst [vmem:[%s184 + $0x1] sm:$0x1] %v436
      %s438 = smul.u32 16, %s15
      %p439 = scmp.lt.s32.totalorder %s438, 63
      %s440 = scalar_select %p439, %s438, 63
      %s441 = smul.addr %s440, 8
      %s442 = scalar_lea.vmem %s2, %s441
      %p443 = scmp.lt.s32.totalorder %s15, 3
      %s444 = scalar_select %p443, %s15, 3
      %s445 = smul.addr %s444, 2
      %s446 = scalar_lea.vmem %s3, %s445
      // Predicated region
      $region29: #{bottleneck_forward.5} parent=27 // pred_check
        %p447 = pneg %p80
      $region30: #{bottleneck_forward.5} parent=27 // pred_check_branch
        %449 = sbr.rel (%p447) target = $region32
      $region31: #{bottleneck_forward.5} parent=27 // pred_region
        %s450 = smul.u32 16, %s15
      $region32: #{bottleneck_forward.5} parent=27 // pred_fallthru
        _
      // Predicated region
      $region33: #{bottleneck_forward.5} parent=27 // pred_check
        %p451 = pneg %p106
      $region34: #{bottleneck_forward.5} parent=27 // pred_check_branch
        %453 = sbr.rel (%p451) target = $region36
      $region35: #{bottleneck_forward.5} parent=27 // pred_region
        _
      $region36: #{bottleneck_forward.5} parent=27 // pred_fallthru
        _
    $region28: #{bottleneck_forward.5} parent=5 // pred_fallthru
      _
    %p454 = scmp.le.s32.totalorder 2, %s10
    // Predicated region
    $region37: #{bottleneck_forward.5} parent=5 // pred_check
      %p455 = pneg %p454
    $region38: #{bottleneck_forward.5} parent=5 // pred_check_branch
      %457 = sbr.rel (%p455) target = $region40
    $region39: #{bottleneck_forward.5} parent=5 // pred_region
      %s458 = ssub.s32 %s10, 2
      // Predicated region
      $region41: #{bottleneck_forward.5} parent=39 // pred_check
        %p459 = pneg %p86
      $region42: #{bottleneck_forward.5} parent=39 // pred_check_branch
        %461 = sbr.rel (%p459) target = $region44
      $region43: #{bottleneck_forward.5} parent=39 // pred_region
        %s462 = smul.u32 16, %s16
        %p463 = scmp.lt.s32.totalorder %s462, 63
        %s464 = scalar_select %p463, %s462, 63
        %s465 = smul.addr %s464, 8
        %s466 = scalar_lea.vmem %s2, %s465
      $region44: #{bottleneck_forward.5} parent=39 // pred_fallthru
        _
      // Predicated region
      $region45: #{bottleneck_forward.5} parent=39 // pred_check
        %p467 = pneg %p112
      $region46: #{bottleneck_forward.5} parent=39 // pred_check_branch
        %469 = sbr.rel (%p467) target = $region48
      $region47: #{bottleneck_forward.5} parent=39 // pred_region
        %p470 = scmp.lt.s32.totalorder %s16, 3
        %s471 = scalar_select %p470, %s16, 3
        %s472 = smul.addr %s471, 2
        %s473 = scalar_lea.vmem %s3, %s472
      $region48: #{bottleneck_forward.5} parent=39 // pred_fallthru
        _
    $region40: #{bottleneck_forward.5} parent=5 // pred_fallthru
      _
  $region6: #{bottleneck_forward.5} parent=0 // loop_footer
    %s14 = sadd.s32 1, %s10
  $region7: #{bottleneck_forward.5} parent=0 // loop_footer_branch
    %9 = sbr.rel target = $region3
  $region8: #{bottleneck_forward.5} parent=0 // loop_exit
    _

// kernel: bottleneck_forward.6
$region0: #{bottleneck_forward.6}
  #allocation0 [shape = 'u32[]', space=smem, size = 0x4, offset = 0x4, fixed_abs, tag = 'smem constant byte address 0x4 - core index']
  #allocation1 [shape = 'u32[144,128]{1,0:T(1,128)}', space=vmem, size = 0x12000, scoped, tag = 'internal scratch']
  %s0 = inlined_call_operand.vmem [shape: f32[512,128], index: 0, kind: input, shape index: {}]
  %s1 = inlined_call_operand.vmem [shape: f32[2,128], index: 1, kind: input, shape index: {}]
  %s2 = inlined_call_operand.vmem [shape: f32[2,18,18,128], index: 2, kind: output, shape index: {}]
  %s3 = sld [smem:[#allocation0]]
  $region41: #{bottleneck_forward.6} parent=0
    _
  %s5 = ssub.s32 1, %s3
  %s6 = scalar_select 0, %s5, %s3
  loop: start=0, step=1, limit=4
  $region2: #{bottleneck_forward.6} parent=0 // loop_pre_header
    _
  $region3: #{bottleneck_forward.6} parent=0 // loop_header
    %s8 = sphi 0, %s12
    %p9 = scmp.ge.s32.totalorder %s8, 4
    %s18 = sphi 0, %s20
    %s21 = sphi 0, %s18
    %s22 = sphi 0, %s21
    %s38 = sphi 0, %s22
    %s42 = sphi 0, %s42
    %s44 = sphi 0, %s42
    %s45 = sphi 0, %s44
    %s59 = sphi 0, %s45
    %s65 = sphi 0, %s67
    %s68 = sphi 0, %s65
    %s69 = sphi 0, %s68
    %s85 = sphi 0, %s69
  $region4: #{bottleneck_forward.6} parent=0 // loop_header_branch
    %11 = sbr.rel (%p9) target = $region8
  $region5: #{bottleneck_forward.6} parent=0 // loop_body
    %s13 = ssub.s32 %s8, 1
    %s14 = ssub.s32 %s8, 2
    %s15 = sadd.s32 %s8, 1
    %s16 = ssub.s32 %s8, %s15
    %p17 = scmp.eq.s32.totalorder %s16, 0
    %s19 = sadd.s32 %s18, 1
    %s20 = scalar_select %p17, %s18, %s19
    %p23 = pneg %p17
    %p24 = scmp.eq.s32.totalorder %s8, 1
    %p25 = por %p23, %p24
    %p26 = scmp.ne.s32.totalorder %s18, %s21
    %p27 = scmp.eq.s32.totalorder %s8, 0
    %p28 = por %p26, %p27
    %p29 = scmp.ne.s32.totalorder %s18, %s21
    %p30 = scmp.eq.s32.totalorder %s13, 1
    %p31 = por %p29, %p30
    %p32 = scmp.ne.s32.totalorder %s21, %s22
    %p33 = scmp.eq.s32.totalorder %s13, 0
    %p34 = por %p32, %p33
    %p35 = scmp.ne.s32.totalorder %s21, %s22
    %p36 = scmp.eq.s32.totalorder %s14, 1
    %p37 = por %p35, %p36
    %p39 = scmp.ne.s32.totalorder %s22, %s38
    %p40 = scmp.eq.s32.totalorder %s14, 0
    %p41 = por %p39, %p40
    %s43 = sadd.s32 %s42, 1
    %p46 = scmp.eq.s32.totalorder %s8, 1
    %p47 = scmp.ne.s32.totalorder %s42, %s44
    %p48 = scmp.eq.s32.totalorder %s8, 0
    %p49 = por %p47, %p48
    %p50 = scmp.ne.s32.totalorder %s42, %s44
    %p51 = scmp.eq.s32.totalorder %s13, 1
    %p52 = por %p50, %p51
    %p53 = scmp.ne.s32.totalorder %s44, %s45
    %p54 = scmp.eq.s32.totalorder %s13, 0
    %p55 = por %p53, %p54
    %p56 = scmp.ne.s32.totalorder %s44, %s45
    %p57 = scmp.eq.s32.totalorder %s14, 1
    %p58 = por %p56, %p57
    %p60 = scmp.ne.s32.totalorder %s45, %s59
    %p61 = scmp.eq.s32.totalorder %s14, 0
    %p62 = por %p60, %p61
    %s63 = ssub.s32 %s8, %s15
    %p64 = scmp.eq.s32.totalorder %s63, 0
    %s66 = sadd.s32 %s65, 1
    %s67 = scalar_select %p64, %s65, %s66
    %p70 = pneg %p64
    %p71 = scmp.eq.s32.totalorder %s8, 1
    %p72 = por %p70, %p71
    %p73 = scmp.ne.s32.totalorder %s65, %s68
    %p74 = scmp.eq.s32.totalorder %s8, 0
    %p75 = por %p73, %p74
    %p76 = scmp.ne.s32.totalorder %s65, %s68
    %p77 = scmp.eq.s32.totalorder %s13, 1
    %p78 = por %p76, %p77
    %p79 = scmp.ne.s32.totalorder %s68, %s69
    %p80 = scmp.eq.s32.totalorder %s13, 0
    %p81 = por %p79, %p80
    %p82 = scmp.ne.s32.totalorder %s68, %s69
    %p83 = scmp.eq.s32.totalorder %s14, 1
    %p84 = por %p82, %p83
    %p86 = scmp.ne.s32.totalorder %s69, %s85
    %p87 = scmp.eq.s32.totalorder %s14, 0
    %p88 = por %p86, %p87
    %p89 = scmp.le.s32.totalorder 1, %s8
    %p90 = scmp.lt.s32.totalorder %s8, 3
    %p91 = pnand %p89, %p90
    %p92 = pneg %p91
    // Predicated region
    $region9: #{bottleneck_forward.6} parent=5 // pred_check
      _
    $region10: #{bottleneck_forward.6} parent=5 // pred_check_branch
      %94 = sbr.rel (%p91) target = $region12
    $region11: #{bottleneck_forward.6} parent=5 // pred_region
      %s95 = ssub.s32 %s8, 1
      // Predicated region
      $region13: #{bottleneck_forward.6} parent=11 // pred_check
        %p96 = pneg %p55
      $region14: #{bottleneck_forward.6} parent=11 // pred_check_branch
        %98 = sbr.rel (%p96) target = $region16
      $region15: #{bottleneck_forward.6} parent=11 // pred_region
        _
      $region16: #{bottleneck_forward.6} parent=11 // pred_fallthru
        _
    $region12: #{bottleneck_forward.6} parent=5 // pred_fallthru
      _
    %p99 = scmp.lt.s32.totalorder %s8, 2
    // Predicated region
    $region17: #{bottleneck_forward.6} parent=5 // pred_check
      %p100 = pneg %p99
    $region18: #{bottleneck_forward.6} parent=5 // pred_check_branch
      %102 = sbr.rel (%p100) target = $region20
    $region19: #{bottleneck_forward.6} parent=5 // pred_region
      // Predicated region
      $region21: #{bottleneck_forward.6} parent=19 // pred_check
        %p103 = pneg %p28
      $region22: #{bottleneck_forward.6} parent=19 // pred_check_branch
        %105 = sbr.rel (%p103) target = $region24
      $region23: #{bottleneck_forward.6} parent=19 // pred_region
        %s106 = smul.u32 32, %s8
        %p107 = scmp.lt.s32.totalorder %s106, 63
        %s108 = scalar_select %p107, %s106, 63
        %s109 = smul.addr %s108, 8
        %s110 = scalar_lea.vmem %s0, %s109
        %s111 = smul.u32 32, %s8
      $region24: #{bottleneck_forward.6} parent=19 // pred_fallthru
        _
    $region20: #{bottleneck_forward.6} parent=5 // pred_fallthru
      _
    %p112 = scmp.le.s32.totalorder 1, %s8
    %p113 = scmp.lt.s32.totalorder %s8, 3
    %p114 = pnand %p112, %p113
    %p115 = pneg %p114
    // Predicated region
    $region25: #{bottleneck_forward.6} parent=5 // pred_check
      _
    $region26: #{bottleneck_forward.6} parent=5 // pred_check_branch
      %117 = sbr.rel (%p114) target = $region28
    $region27: #{bottleneck_forward.6} parent=5 // pred_region
      %s118 = ssub.s32 %s8, 1
      %s119 = smul.u32 32, %s13
      %p120 = scmp.lt.s32.totalorder %s119, 63
      %s121 = scalar_select %p120, %s119, 63
      %s122 = smul.addr %s121, 8
      %s123 = scalar_lea.vmem %s0, %s122
      %p124 = pneg %p34
      %p125 = pneg %p31
      %p126 = pneg %p55
      %p127 = pneg %p52
      %p128 = pneg %p81
      %p129 = pneg %p78
      %p130 = scmp.lt.s32.totalorder %s13, 1
      %s131 = scalar_select %p130, %s13, 1
      %s132 = smul.addr %s131, 54
      %s133 = smul.addr %s132, 8
      %s134 = scalar_lea.vmem %s2, %s133
      %s135 = smul.u32 32, %s13
      %p136 = scmp.lt.s32.totalorder %s135, 63
      %s137 = scalar_select %p136, %s135, 63
      %s138 = smul.addr %s137, 8
      %s139 = scalar_lea.vmem %s0, %s138
      %s140 = smul.u32 32, %s13
      %p141 = scmp.lt.s32.totalorder %s13, 1
      %s142 = scalar_select %p141, %s13, 1
      %s143 = smul.addr %s142, 54
      %s144 = smul.addr %s143, 8
      %s145 = scalar_lea.vmem %s2, %s144
      %v146 = vld [vmem:[%s139] sm:$0xff]
      %v147 = vld [vmem:[%s139 + $0x8] sm:$0xff]
      %v148 = vld [vmem:[%s139 + $0x10] sm:$0xff]
      %v149 = vld [vmem:[%s139 + $0x18] sm:$0xff]
      %v150 = vld [vmem:[%s139 + $0x20] sm:$0xff]
      %v151 = vld [vmem:[%s139 + $0x28] sm:$0xff]
      %v152 = vld [vmem:[%s139 + $0x30] sm:$0xff]
      %v153 = vld [vmem:[%s139 + $0x38] sm:$0xff]
      %v154 = vld [vmem:[%s139 + $0x40] sm:$0xff]
      %v155 = vld [vmem:[%s139 + $0x48] sm:$0xff]
      %v156 = vld [vmem:[%s139 + $0x50] sm:$0xff]
      %v157 = vld [vmem:[%s139 + $0x58] sm:$0xff]
      %v158 = vld [vmem:[%s139 + $0x60] sm:$0xff]
      %v159 = vld [vmem:[%s139 + $0x68] sm:$0xff]
      %v160 = vld [vmem:[%s139 + $0x70] sm:$0xff]
      %v161 = vld [vmem:[%s139 + $0x78] sm:$0xff]
      %v162 = vld [vmem:[%s139 + $0x80] sm:$0xff]
      %v163 = vld [vmem:[%s139 + $0x88] sm:$0xff]
      %v164 = vld [vmem:[%s139 + $0x90] sm:$0xff]
      %v165 = vld [vmem:[%s139 + $0x98] sm:$0xff]
      %v166 = vld [vmem:[%s139 + $0xa0] sm:$0xff]
      %v167 = vld [vmem:[%s139 + $0xa8] sm:$0xff]
      %v168 = vld [vmem:[%s139 + $0xb0] sm:$0xff]
      %v169 = vld [vmem:[%s139 + $0xb8] sm:$0xff]
      %v170 = vld [vmem:[%s139 + $0xc0] sm:$0xff]
      %v171 = vld [vmem:[%s139 + $0xc8] sm:$0xff]
      %v172 = vld [vmem:[%s139 + $0xd0] sm:$0xff]
      %v173 = vld [vmem:[%s139 + $0xd8] sm:$0xff]
      %v174 = vld [vmem:[%s139 + $0xe0] sm:$0xff]
      %v175 = vld [vmem:[%s139 + $0xe8] sm:$0xff]
      %v176 = vld [vmem:[%s139 + $0xf0] sm:$0xff]
      %v177 = vld [vmem:[%s139 + $0xf8] sm:$0xff]
      %v178 = vld [vmem:[%s1] sm:$0x1]
      %v179 = vlaneseq
      %v180 = vshrl.u32 %v179, 7
      %v181 = vsub.s32 0, %v180
      %v182 = vrot.slane %v178, %v181
      %v183 = vmul.f32 %v146, %v182
      %v184 = vmul.f32 %v147, %v182
      %v185 = vmul.f32 %v148, %v182
      %v186 = vmul.f32 %v149, %v182
      %v187 = vmul.f32 %v150, %v182
      %v188 = vmul.f32 %v151, %v182
      %v189 = vmul.f32 %v152, %v182
      %v190 = vmul.f32 %v153, %v182
      %v191 = vmul.f32 %v154, %v182
      %v192 = vmul.f32 %v155, %v182
      %v193 = vmul.f32 %v156, %v182
      %v194 = vmul.f32 %v157, %v182
      %v195 = vmul.f32 %v158, %v182
      %v196 = vmul.f32 %v159, %v182
      %v197 = vmul.f32 %v160, %v182
      %v198 = vmul.f32 %v161, %v182
      %v199 = vmul.f32 %v162, %v182
      %v200 = vmul.f32 %v163, %v182
      %v201 = vmul.f32 %v164, %v182
      %v202 = vmul.f32 %v165, %v182
      %v203 = vmul.f32 %v166, %v182
      %v204 = vmul.f32 %v167, %v182
      %v205 = vmul.f32 %v168, %v182
      %v206 = vmul.f32 %v169, %v182
      %v207 = vmul.f32 %v170, %v182
      %v208 = vmul.f32 %v171, %v182
      %v209 = vmul.f32 %v172, %v182
      %v210 = vmul.f32 %v173, %v182
      %v211 = vmul.f32 %v174, %v182
      %v212 = vmul.f32 %v175, %v182
      %v213 = vmul.f32 %v176, %v182
      %v214 = vmul.f32 %v177, %v182
      %v215 = vld [vmem:[%s1 + $0x1] sm:$0x1]
      %v216 = vlaneseq
      %v217 = vshrl.u32 %v216, 7
      %v218 = vsub.s32 0, %v217
      %v219 = vrot.slane %v215, %v218
      %v220 = vadd.f32 %v183, %v219
      %v221 = vadd.f32 %v184, %v219
      %v222 = vadd.f32 %v185, %v219
      %v223 = vadd.f32 %v186, %v219
      %v224 = vadd.f32 %v187, %v219
      %v225 = vadd.f32 %v188, %v219
      %v226 = vadd.f32 %v189, %v219
      %v227 = vadd.f32 %v190, %v219
      %v228 = vadd.f32 %v191, %v219
      %v229 = vadd.f32 %v192, %v219
      %v230 = vadd.f32 %v193, %v219
      %v231 = vadd.f32 %v194, %v219
      %v232 = vadd.f32 %v195, %v219
      %v233 = vadd.f32 %v196, %v219
      %v234 = vadd.f32 %v197, %v219
      %v235 = vadd.f32 %v198, %v219
      %v236 = vadd.f32 %v199, %v219
      %v237 = vadd.f32 %v200, %v219
      %v238 = vadd.f32 %v201, %v219
      %v239 = vadd.f32 %v202, %v219
      %v240 = vadd.f32 %v203, %v219
      %v241 = vadd.f32 %v204, %v219
      %v242 = vadd.f32 %v205, %v219
      %v243 = vadd.f32 %v206, %v219
      %v244 = vadd.f32 %v207, %v219
      %v245 = vadd.f32 %v208, %v219
      %v246 = vadd.f32 %v209, %v219
      %v247 = vadd.f32 %v210, %v219
      %v248 = vadd.f32 %v211, %v219
      %v249 = vadd.f32 %v212, %v219
      %v250 = vadd.f32 %v213, %v219
      %v251 = vadd.f32 %v214, %v219
      %v252 = vmax.f32 %v220, 0.0
      %v253 = vmax.f32 %v221, 0.0
      %v254 = vmax.f32 %v222, 0.0
      %v255 = vmax.f32 %v223, 0.0
      %v256 = vmax.f32 %v224, 0.0
      %v257 = vmax.f32 %v225, 0.0
      %v258 = vmax.f32 %v226, 0.0
      %v259 = vmax.f32 %v227, 0.0
      %v260 = vmax.f32 %v228, 0.0
      %v261 = vmax.f32 %v229, 0.0
      %v262 = vmax.f32 %v230, 0.0
      %v263 = vmax.f32 %v231, 0.0
      %v264 = vmax.f32 %v232, 0.0
      %v265 = vmax.f32 %v233, 0.0
      %v266 = vmax.f32 %v234, 0.0
      %v267 = vmax.f32 %v235, 0.0
      %v268 = vmax.f32 %v236, 0.0
      %v269 = vmax.f32 %v237, 0.0
      %v270 = vmax.f32 %v238, 0.0
      %v271 = vmax.f32 %v239, 0.0
      %v272 = vmax.f32 %v240, 0.0
      %v273 = vmax.f32 %v241, 0.0
      %v274 = vmax.f32 %v242, 0.0
      %v275 = vmax.f32 %v243, 0.0
      %v276 = vmax.f32 %v244, 0.0
      %v277 = vmax.f32 %v245, 0.0
      %v278 = vmax.f32 %v246, 0.0
      %v279 = vmax.f32 %v247, 0.0
      %v280 = vmax.f32 %v248, 0.0
      %v281 = vmax.f32 %v249, 0.0
      %v282 = vmax.f32 %v250, 0.0
      %v283 = vmax.f32 %v251, 0.0
      %284 = vst [vmem:[%s145] sm:$0xff] 0.0
      %285 = vst [vmem:[%s145 + $0x8] sm:$0xff] 0.0
      %286 = vst [vmem:[%s145 + $0x10] sm:$0x3] 0.0
      %287 = vst [vmem:[%s145 + $0x18] sm:$0xff] 0.0
      %288 = vst [vmem:[%s145 + $0x20] sm:$0xff] 0.0
      %289 = vst [vmem:[%s145 + $0x28] sm:$0x3] 0.0
      %290 = vst [vmem:[%s145 + $0x30] sm:$0xff] 0.0
      %291 = vst [vmem:[%s145 + $0x38] sm:$0xff] 0.0
      %292 = vst [vmem:[%s145 + $0x40] sm:$0x3] 0.0
      %293 = vst [vmem:[%s145 + $0x48] sm:$0xff] 0.0
      %294 = vst [vmem:[%s145 + $0x50] sm:$0xff] 0.0
      %295 = vst [vmem:[%s145 + $0x58] sm:$0x3] 0.0
      %296 = vst [vmem:[%s145 + $0x60] sm:$0xff] 0.0
      %297 = vst [vmem:[%s145 + $0x68] sm:$0xff] 0.0
      %298 = vst [vmem:[%s145 + $0x70] sm:$0x3] 0.0
      %299 = vst [vmem:[%s145 + $0x78] sm:$0xff] 0.0
      %300 = vst [vmem:[%s145 + $0x80] sm:$0xff] 0.0
      %301 = vst [vmem:[%s145 + $0x88] sm:$0x3] 0.0
      %302 = vst [vmem:[%s145 + $0x90] sm:$0xff] 0.0
      %303 = vst [vmem:[%s145 + $0x98] sm:$0xff] 0.0
      %304 = vst [vmem:[%s145 + $0xa0] sm:$0x3] 0.0
      %305 = vst [vmem:[%s145 + $0xa8] sm:$0xff] 0.0
      %306 = vst [vmem:[%s145 + $0xb0] sm:$0xff] 0.0
      %307 = vst [vmem:[%s145 + $0xb8] sm:$0x3] 0.0
      %308 = vst [vmem:[%s145 + $0xc0] sm:$0xff] 0.0
      %309 = vst [vmem:[%s145 + $0xc8] sm:$0xff] 0.0
      %310 = vst [vmem:[%s145 + $0xd0] sm:$0x3] 0.0
      %311 = vst [vmem:[%s145 + $0xd8] sm:$0xff] 0.0
      %312 = vst [vmem:[%s145 + $0xe0] sm:$0xff] 0.0
      %313 = vst [vmem:[%s145 + $0xe8] sm:$0x3] 0.0
      %314 = vst [vmem:[%s145 + $0xf0] sm:$0xff] 0.0
      %315 = vst [vmem:[%s145 + $0xf8] sm:$0xff] 0.0
      %316 = vst [vmem:[%s145 + $0x100] sm:$0x3] 0.0
      %317 = vst [vmem:[%s145 + $0x108] sm:$0xff] 0.0
      %318 = vst [vmem:[%s145 + $0x110] sm:$0xff] 0.0
      %319 = vst [vmem:[%s145 + $0x118] sm:$0x3] 0.0
      %320 = vst [vmem:[%s145 + $0x120] sm:$0xff] 0.0
      %321 = vst [vmem:[%s145 + $0x128] sm:$0xff] 0.0
      %322 = vst [vmem:[%s145 + $0x130] sm:$0x3] 0.0
      %323 = vst [vmem:[%s145 + $0x138] sm:$0xff] 0.0
      %324 = vst [vmem:[%s145 + $0x140] sm:$0xff] 0.0
      %325 = vst [vmem:[%s145 + $0x148] sm:$0x3] 0.0
      %326 = vst [vmem:[%s145 + $0x150] sm:$0xff] 0.0
      %327 = vst [vmem:[%s145 + $0x158] sm:$0xff] 0.0
      %328 = vst [vmem:[%s145 + $0x160] sm:$0x3] 0.0
      %329 = vst [vmem:[%s145 + $0x168] sm:$0xff] 0.0
      %330 = vst [vmem:[%s145 + $0x170] sm:$0xff] 0.0
      %331 = vst [vmem:[%s145 + $0x178] sm:$0x3] 0.0
      %332 = vst [vmem:[%s145 + $0x180] sm:$0xff] 0.0
      %333 = vst [vmem:[%s145 + $0x188] sm:$0xff] 0.0
      %334 = vst [vmem:[%s145 + $0x190] sm:$0x3] 0.0
      %335 = vst [vmem:[%s145 + $0x198] sm:$0xff] 0.0
      %336 = vst [vmem:[%s145 + $0x1a0] sm:$0xff] 0.0
      %337 = vst [vmem:[%s145 + $0x1a8] sm:$0x3] 0.0
      %s338 = scalar_lea.vmem %s145, 24
      %339 = vst [vmem:[%s338 + $0x1] sm:$0xff] %v252
      %340 = vst [vmem:[%s338 + $0x9] sm:$0xff] %v253
      %341 = vst [vmem:[%s338 + $0x19] sm:$0xff] %v254
      %342 = vst [vmem:[%s338 + $0x21] sm:$0xff] %v255
      %343 = vst [vmem:[%s338 + $0x31] sm:$0xff] %v256
      %344 = vst [vmem:[%s338 + $0x39] sm:$0xff] %v257
      %345 = vst [vmem:[%s338 + $0x49] sm:$0xff] %v258
      %346 = vst [vmem:[%s338 + $0x51] sm:$0xff] %v259
      %347 = vst [vmem:[%s338 + $0x61] sm:$0xff] %v260
      %348 = vst [vmem:[%s338 + $0x69] sm:$0xff] %v261
      %349 = vst [vmem:[%s338 + $0x79] sm:$0xff] %v262
      %350 = vst [vmem:[%s338 + $0x81] sm:$0xff] %v263
      %351 = vst [vmem:[%s338 + $0x91] sm:$0xff] %v264
      %352 = vst [vmem:[%s338 + $0x99] sm:$0xff] %v265
      %353 = vst [vmem:[%s338 + $0xa9] sm:$0xff] %v266
      %354 = vst [vmem:[%s338 + $0xb1] sm:$0xff] %v267
      %355 = vst [vmem:[%s338 + $0xc1] sm:$0xff] %v268
      %356 = vst [vmem:[%s338 + $0xc9] sm:$0xff] %v269
      %357 = vst [vmem:[%s338 + $0xd9] sm:$0xff] %v270
      %358 = vst [vmem:[%s338 + $0xe1] sm:$0xff] %v271
      %359 = vst [vmem:[%s338 + $0xf1] sm:$0xff] %v272
      %360 = vst [vmem:[%s338 + $0xf9] sm:$0xff] %v273
      %361 = vst [vmem:[%s338 + $0x109] sm:$0xff] %v274
      %362 = vst [vmem:[%s338 + $0x111] sm:$0xff] %v275
      %363 = vst [vmem:[%s338 + $0x121] sm:$0xff] %v276
      %364 = vst [vmem:[%s338 + $0x129] sm:$0xff] %v277
      %365 = vst [vmem:[%s338 + $0x139] sm:$0xff] %v278
      %366 = vst [vmem:[%s338 + $0x141] sm:$0xff] %v279
      %367 = vst [vmem:[%s338 + $0x151] sm:$0xff] %v280
      %368 = vst [vmem:[%s338 + $0x159] sm:$0xff] %v281
      %369 = vst [vmem:[%s338 + $0x169] sm:$0xff] %v282
      %370 = vst [vmem:[%s338 + $0x171] sm:$0xff] %v283
      %p371 = scmp.lt.s32.totalorder %s13, 1
      %s372 = scalar_select %p371, %s13, 1
      %s373 = smul.addr %s372, 54
      %s374 = smul.addr %s373, 8
      %s375 = scalar_lea.vmem %s2, %s374
      // Predicated region
      $region29: #{bottleneck_forward.6} parent=27 // pred_check
        %p376 = pneg %p78
      $region30: #{bottleneck_forward.6} parent=27 // pred_check_branch
        %378 = sbr.rel (%p376) target = $region32
      $region31: #{bottleneck_forward.6} parent=27 // pred_region
        _
      $region32: #{bottleneck_forward.6} parent=27 // pred_fallthru
        _
    $region28: #{bottleneck_forward.6} parent=5 // pred_fallthru
      _
    %p379 = scmp.le.s32.totalorder 2, %s8
    // Predicated region
    $region33: #{bottleneck_forward.6} parent=5 // pred_check
      %p380 = pneg %p379
    $region34: #{bottleneck_forward.6} parent=5 // pred_check_branch
      %382 = sbr.rel (%p380) target = $region36
    $region35: #{bottleneck_forward.6} parent=5 // pred_region
      %s383 = ssub.s32 %s8, 2
      // Predicated region
      $region37: #{bottleneck_forward.6} parent=35 // pred_check
        %p384 = pneg %p84
      $region38: #{bottleneck_forward.6} parent=35 // pred_check_branch
        %386 = sbr.rel (%p384) target = $region40
      $region39: #{bottleneck_forward.6} parent=35 // pred_region
        %p387 = scmp.lt.s32.totalorder %s14, 1
        %s388 = scalar_select %p387, %s14, 1
        %s389 = smul.addr %s388, 54
        %s390 = smul.addr %s389, 8
        %s391 = scalar_lea.vmem %s2, %s390
      $region40: #{bottleneck_forward.6} parent=35 // pred_fallthru
        _
    $region36: #{bottleneck_forward.6} parent=5 // pred_fallthru
      _
  $region6: #{bottleneck_forward.6} parent=0 // loop_footer
    %s12 = sadd.s32 1, %s8
  $region7: #{bottleneck_forward.6} parent=0 // loop_footer_branch
    %7 = sbr.rel target = $region3
  $region8: #{bottleneck_forward.6} parent=0 // loop_exit
    _

// kernel: bottleneck_forward.9
$region0: #{bottleneck_forward.9}
  #allocation0 [shape = 'u32[]', space=smem, size = 0x4, offset = 0x4, fixed_abs, tag = 'smem constant byte address 0x4 - core index']
  #allocation1 [shape = 'u32[144,128]{1,0:T(1,128)}', space=vmem, size = 0x12000, scoped, tag = 'internal scratch']
  %s0 = inlined_call_operand.vmem [shape: f32[128,128], index: 0, kind: input, shape index: {}]
  %s1 = inlined_call_operand.vmem [shape: f32[2,128], index: 1, kind: input, shape index: {}]
  %s2 = inlined_call_operand.vmem [shape: f32[128,128], index: 2, kind: input, shape index: {}]
  %s3 = inlined_call_operand.vmem [shape: f32[2,128], index: 3, kind: input, shape index: {}]
  %s4 = inlined_call_operand.vmem [shape: f32[128,128], index: 4, kind: output, shape index: {}]
  %s5 = sld [smem:[#allocation0]]
  $region26: #{bottleneck_forward.9} parent=0
    _
  %s7 = ssub.s32 1, %s5
  %s8 = scalar_select 0, %s7, %s5
  // Predicated region
  $region2: #{bottleneck_forward.9} parent=0 // pred_check
    _
  $region3: #{bottleneck_forward.9} parent=0 // pred_check_branch
    %10 = sbr.rel (0) target = $region5
  $region4: #{bottleneck_forward.9} parent=0 // pred_region
    _
  $region5: #{bottleneck_forward.9} parent=0 // pred_fallthru
    _
  // Predicated region
  $region6: #{bottleneck_forward.9} parent=0 // pred_check
    _
  $region7: #{bottleneck_forward.9} parent=0 // pred_check_branch
    %12 = sbr.rel (0) target = $region9
  $region8: #{bottleneck_forward.9} parent=0 // pred_region
    _
  $region9: #{bottleneck_forward.9} parent=0 // pred_fallthru
    _
  // Predicated region
  $region10: #{bottleneck_forward.9} parent=0 // pred_check
    _
  $region11: #{bottleneck_forward.9} parent=0 // pred_check_branch
    %14 = sbr.rel (0) target = $region13
  $region12: #{bottleneck_forward.9} parent=0 // pred_region
    _
  $region13: #{bottleneck_forward.9} parent=0 // pred_fallthru
    _
  // Predicated region
  $region14: #{bottleneck_forward.9} parent=0 // pred_check
    _
  $region15: #{bottleneck_forward.9} parent=0 // pred_check_branch
    %16 = sbr.rel (0) target = $region17
  $region16: #{bottleneck_forward.9} parent=0 // pred_region
    _
  $region17: #{bottleneck_forward.9} parent=0 // pred_fallthru
    _
  %v17 = vld [vmem:[%s0] sm:$0xff]
  %v18 = vld [vmem:[%s0 + $0x8] sm:$0xff]
  %v19 = vld [vmem:[%s0 + $0x10] sm:$0xff]
  %v20 = vld [vmem:[%s0 + $0x18] sm:$0xff]
  %v21 = vld [vmem:[%s0 + $0x20] sm:$0xff]
  %v22 = vld [vmem:[%s0 + $0x28] sm:$0xff]
  %v23 = vld [vmem:[%s0 + $0x30] sm:$0xff]
  %v24 = vld [vmem:[%s0 + $0x38] sm:$0xff]
  %v25 = vld [vmem:[%s0 + $0x40] sm:$0xff]
  %v26 = vld [vmem:[%s0 + $0x48] sm:$0xff]
  %v27 = vld [vmem:[%s0 + $0x50] sm:$0xff]
  %v28 = vld [vmem:[%s0 + $0x58] sm:$0xff]
  %v29 = vld [vmem:[%s0 + $0x60] sm:$0xff]
  %v30 = vld [vmem:[%s0 + $0x68] sm:$0xff]
  %v31 = vld [vmem:[%s0 + $0x70] sm:$0xff]
  %v32 = vld [vmem:[%s0 + $0x78] sm:$0xff]
  %v33 = vld [vmem:[%s1] sm:$0x1]
  %v34 = vlaneseq
  %v35 = vshrl.u32 %v34, 7
  %v36 = vsub.s32 0, %v35
  %v37 = vrot.slane %v33, %v36
  %v38 = vmul.f32 %v17, %v37
  %v39 = vmul.f32 %v18, %v37
  %v40 = vmul.f32 %v19, %v37
  %v41 = vmul.f32 %v20, %v37
  %v42 = vmul.f32 %v21, %v37
  %v43 = vmul.f32 %v22, %v37
  %v44 = vmul.f32 %v23, %v37
  %v45 = vmul.f32 %v24, %v37
  %v46 = vmul.f32 %v25, %v37
  %v47 = vmul.f32 %v26, %v37
  %v48 = vmul.f32 %v27, %v37
  %v49 = vmul.f32 %v28, %v37
  %v50 = vmul.f32 %v29, %v37
  %v51 = vmul.f32 %v30, %v37
  %v52 = vmul.f32 %v31, %v37
  %v53 = vmul.f32 %v32, %v37
  %v54 = vld [vmem:[%s1 + $0x1] sm:$0x1]
  %v55 = vlaneseq
  %v56 = vshrl.u32 %v55, 7
  %v57 = vsub.s32 0, %v56
  %v58 = vrot.slane %v54, %v57
  %v59 = vadd.f32 %v38, %v58
  %v60 = vadd.f32 %v39, %v58
  %v61 = vadd.f32 %v40, %v58
  %v62 = vadd.f32 %v41, %v58
  %v63 = vadd.f32 %v42, %v58
  %v64 = vadd.f32 %v43, %v58
  %v65 = vadd.f32 %v44, %v58
  %v66 = vadd.f32 %v45, %v58
  %v67 = vadd.f32 %v46, %v58
  %v68 = vadd.f32 %v47, %v58
  %v69 = vadd.f32 %v48, %v58
  %v70 = vadd.f32 %v49, %v58
  %v71 = vadd.f32 %v50, %v58
  %v72 = vadd.f32 %v51, %v58
  %v73 = vadd.f32 %v52, %v58
  %v74 = vadd.f32 %v53, %v58
  %v75 = vld [vmem:[%s2] sm:$0xff]
  %v76 = vld [vmem:[%s2 + $0x8] sm:$0xff]
  %v77 = vld [vmem:[%s2 + $0x10] sm:$0xff]
  %v78 = vld [vmem:[%s2 + $0x18] sm:$0xff]
  %v79 = vld [vmem:[%s2 + $0x20] sm:$0xff]
  %v80 = vld [vmem:[%s2 + $0x28] sm:$0xff]
  %v81 = vld [vmem:[%s2 + $0x30] sm:$0xff]
  %v82 = vld [vmem:[%s2 + $0x38] sm:$0xff]
  %v83 = vld [vmem:[%s2 + $0x40] sm:$0xff]
  %v84 = vld [vmem:[%s2 + $0x48] sm:$0xff]
  %v85 = vld [vmem:[%s2 + $0x50] sm:$0xff]
  %v86 = vld [vmem:[%s2 + $0x58] sm:$0xff]
  %v87 = vld [vmem:[%s2 + $0x60] sm:$0xff]
  %v88 = vld [vmem:[%s2 + $0x68] sm:$0xff]
  %v89 = vld [vmem:[%s2 + $0x70] sm:$0xff]
  %v90 = vld [vmem:[%s2 + $0x78] sm:$0xff]
  %v91 = vld [vmem:[%s3] sm:$0x1]
  %v92 = vlaneseq
  %v93 = vshrl.u32 %v92, 7
  %v94 = vsub.s32 0, %v93
  %v95 = vrot.slane %v91, %v94
  %v96 = vmul.f32 %v75, %v95
  %v97 = vmul.f32 %v76, %v95
  %v98 = vmul.f32 %v77, %v95
  %v99 = vmul.f32 %v78, %v95
  %v100 = vmul.f32 %v79, %v95
  %v101 = vmul.f32 %v80, %v95
  %v102 = vmul.f32 %v81, %v95
  %v103 = vmul.f32 %v82, %v95
  %v104 = vmul.f32 %v83, %v95
  %v105 = vmul.f32 %v84, %v95
  %v106 = vmul.f32 %v85, %v95
  %v107 = vmul.f32 %v86, %v95
  %v108 = vmul.f32 %v87, %v95
  %v109 = vmul.f32 %v88, %v95
  %v110 = vmul.f32 %v89, %v95
  %v111 = vmul.f32 %v90, %v95
  %v112 = vld [vmem:[%s3 + $0x1] sm:$0x1]
  %v113 = vlaneseq
  %v114 = vshrl.u32 %v113, 7
  %v115 = vsub.s32 0, %v114
  %v116 = vrot.slane %v112, %v115
  %v117 = vadd.f32 %v96, %v116
  %v118 = vadd.f32 %v97, %v116
  %v119 = vadd.f32 %v98, %v116
  %v120 = vadd.f32 %v99, %v116
  %v121 = vadd.f32 %v100, %v116
  %v122 = vadd.f32 %v101, %v116
  %v123 = vadd.f32 %v102, %v116
  %v124 = vadd.f32 %v103, %v116
  %v125 = vadd.f32 %v104, %v116
  %v126 = vadd.f32 %v105, %v116
  %v127 = vadd.f32 %v106, %v116
  %v128 = vadd.f32 %v107, %v116
  %v129 = vadd.f32 %v108, %v116
  %v130 = vadd.f32 %v109, %v116
  %v131 = vadd.f32 %v110, %v116
  %v132 = vadd.f32 %v111, %v116
  %v133 = vadd.f32 %v59, %v117
  %v134 = vadd.f32 %v60, %v118
  %v135 = vadd.f32 %v61, %v119
  %v136 = vadd.f32 %v62, %v120
  %v137 = vadd.f32 %v63, %v121
  %v138 = vadd.f32 %v64, %v122
  %v139 = vadd.f32 %v65, %v123
  %v140 = vadd.f32 %v66, %v124
  %v141 = vadd.f32 %v67, %v125
  %v142 = vadd.f32 %v68, %v126
  %v143 = vadd.f32 %v69, %v127
  %v144 = vadd.f32 %v70, %v128
  %v145 = vadd.f32 %v71, %v129
  %v146 = vadd.f32 %v72, %v130
  %v147 = vadd.f32 %v73, %v131
  %v148 = vadd.f32 %v74, %v132
  %v149 = vmax.f32 %v133, 0.0
  %v150 = vmax.f32 %v134, 0.0
  %v151 = vmax.f32 %v135, 0.0
  %v152 = vmax.f32 %v136, 0.0
  %v153 = vmax.f32 %v137, 0.0
  %v154 = vmax.f32 %v138, 0.0
  %v155 = vmax.f32 %v139, 0.0
  %v156 = vmax.f32 %v140, 0.0
  %v157 = vmax.f32 %v141, 0.0
  %v158 = vmax.f32 %v142, 0.0
  %v159 = vmax.f32 %v143, 0.0
  %v160 = vmax.f32 %v144, 0.0
  %v161 = vmax.f32 %v145, 0.0
  %v162 = vmax.f32 %v146, 0.0
  %v163 = vmax.f32 %v147, 0.0
  %v164 = vmax.f32 %v148, 0.0
  %165 = vst [vmem:[%s4] sm:$0xff] %v149
  %166 = vst [vmem:[%s4 + $0x8] sm:$0xff] %v150
  %167 = vst [vmem:[%s4 + $0x10] sm:$0xff] %v151
  %168 = vst [vmem:[%s4 + $0x18] sm:$0xff] %v152
  %169 = vst [vmem:[%s4 + $0x20] sm:$0xff] %v153
  %170 = vst [vmem:[%s4 + $0x28] sm:$0xff] %v154
  %171 = vst [vmem:[%s4 + $0x30] sm:$0xff] %v155
  %172 = vst [vmem:[%s4 + $0x38] sm:$0xff] %v156
  %173 = vst [vmem:[%s4 + $0x40] sm:$0xff] %v157
  %174 = vst [vmem:[%s4 + $0x48] sm:$0xff] %v158
  %175 = vst [vmem:[%s4 + $0x50] sm:$0xff] %v159
  %176 = vst [vmem:[%s4 + $0x58] sm:$0xff] %v160
  %177 = vst [vmem:[%s4 + $0x60] sm:$0xff] %v161
  %178 = vst [vmem:[%s4 + $0x68] sm:$0xff] %v162
  %179 = vst [vmem:[%s4 + $0x70] sm:$0xff] %v163
  %180 = vst [vmem:[%s4 + $0x78] sm:$0xff] %v164
  // Predicated region
  $region18: #{bottleneck_forward.9} parent=0 // pred_check
    _
  $region19: #{bottleneck_forward.9} parent=0 // pred_check_branch
    %182 = sbr.rel (0) target = $region21
  $region20: #{bottleneck_forward.9} parent=0 // pred_region
    _
  $region21: #{bottleneck_forward.9} parent=0 // pred_fallthru
    _
  // Predicated region
  $region22: #{bottleneck_forward.9} parent=0 // pred_check
    _
  $region23: #{bottleneck_forward.9} parent=0 // pred_check_branch
    %184 = sbr.rel (0) target = $region25
  $region24: #{bottleneck_forward.9} parent=0 // pred_region
    _
  $region25: #{bottleneck_forward.9} parent=0 // pred_fallthru
    _

// kernel: bottleneck_forward.8
$region0: #{bottleneck_forward.8}
  #allocation0 [shape = 'u32[]', space=smem, size = 0x4, offset = 0x4, fixed_abs, tag = 'smem constant byte address 0x4 - core index']
  #allocation1 [shape = 'u32[144,128]{1,0:T(1,128)}', space=vmem, size = 0x12000, scoped, tag = 'internal scratch']
  %s0 = inlined_call_operand.vmem [shape: f32[128,128], index: 0, kind: input, shape index: {}]
  %s1 = inlined_call_operand.vmem [shape: f32[2,128], index: 1, kind: input, shape index: {}]
  %s2 = inlined_call_operand.vmem [shape: f32[128,128], index: 2, kind: input, shape index: {}]
  %s3 = inlined_call_operand.vmem [shape: f32[128,128], index: 3, kind: input, shape index: {}]
  %s4 = inlined_call_operand.vmem [shape: f32[128,128], index: 4, kind: input, shape index: {}]
  %s5 = inlined_call_operand.vmem [shape: f32[128,128], index: 5, kind: output, shape index: {0}]
  %s6 = inlined_call_operand.vmem [shape: f32[128,128], index: 6, kind: output, shape index: {1}]
  %s7 = inlined_call_operand.vmem [shape: f32[1,2,128], index: 7, kind: output, shape index: {2}]
  %s8 = inlined_call_operand.vmem [shape: f32[1,2,128], index: 8, kind: output, shape index: {3}]
  %9 = xla_tuple %s5, %s6, %s7, %s8
  %s10 = sld [smem:[#allocation0]]
  $region54: #{bottleneck_forward.8} parent=0
    _
  %s12 = ssub.s32 1, %s10
  %s13 = scalar_select 0, %s12, %s10
  // Predicated region
  $region2: #{bottleneck_forward.8} parent=0 // pred_check
    _
  $region3: #{bottleneck_forward.8} parent=0 // pred_check_branch
    %15 = sbr.rel (0) target = $region5
  $region4: #{bottleneck_forward.8} parent=0 // pred_region
    _
  $region5: #{bottleneck_forward.8} parent=0 // pred_fallthru
    _
  // Predicated region
  $region6: #{bottleneck_forward.8} parent=0 // pred_check
    _
  $region7: #{bottleneck_forward.8} parent=0 // pred_check_branch
    %17 = sbr.rel (0) target = $region9
  $region8: #{bottleneck_forward.8} parent=0 // pred_region
    _
  $region9: #{bottleneck_forward.8} parent=0 // pred_fallthru
    _
  // Predicated region
  $region10: #{bottleneck_forward.8} parent=0 // pred_check
    _
  $region11: #{bottleneck_forward.8} parent=0 // pred_check_branch
    %19 = sbr.rel (0) target = $region13
  $region12: #{bottleneck_forward.8} parent=0 // pred_region
    _
  $region13: #{bottleneck_forward.8} parent=0 // pred_fallthru
    _
  // Predicated region
  $region14: #{bottleneck_forward.8} parent=0 // pred_check
    _
  $region15: #{bottleneck_forward.8} parent=0 // pred_check_branch
    %21 = sbr.rel (0) target = $region17
  $region16: #{bottleneck_forward.8} parent=0 // pred_region
    _
  $region17: #{bottleneck_forward.8} parent=0 // pred_fallthru
    _
  // Predicated region
  $region18: #{bottleneck_forward.8} parent=0 // pred_check
    _
  $region19: #{bottleneck_forward.8} parent=0 // pred_check_branch
    %23 = sbr.rel (0) target = $region21
  $region20: #{bottleneck_forward.8} parent=0 // pred_region
    _
  $region21: #{bottleneck_forward.8} parent=0 // pred_fallthru
    _
  %v24 = vld [vmem:[%s0] sm:$0xff]
  %v25 = vld [vmem:[%s0 + $0x8] sm:$0xff]
  %v26 = vld [vmem:[%s0 + $0x10] sm:$0xff]
  %v27 = vld [vmem:[%s0 + $0x18] sm:$0xff]
  %v28 = vld [vmem:[%s0 + $0x20] sm:$0xff]
  %v29 = vld [vmem:[%s0 + $0x28] sm:$0xff]
  %v30 = vld [vmem:[%s0 + $0x30] sm:$0xff]
  %v31 = vld [vmem:[%s0 + $0x38] sm:$0xff]
  %v32 = vld [vmem:[%s0 + $0x40] sm:$0xff]
  %v33 = vld [vmem:[%s0 + $0x48] sm:$0xff]
  %v34 = vld [vmem:[%s0 + $0x50] sm:$0xff]
  %v35 = vld [vmem:[%s0 + $0x58] sm:$0xff]
  %v36 = vld [vmem:[%s0 + $0x60] sm:$0xff]
  %v37 = vld [vmem:[%s0 + $0x68] sm:$0xff]
  %v38 = vld [vmem:[%s0 + $0x70] sm:$0xff]
  %v39 = vld [vmem:[%s0 + $0x78] sm:$0xff]
  %v40 = vld [vmem:[%s1] sm:$0x1]
  %v41 = vlaneseq
  %v42 = vshrl.u32 %v41, 7
  %v43 = vsub.s32 0, %v42
  %v44 = vrot.slane %v40, %v43
  %v45 = vmul.f32 %v24, %v44
  %v46 = vmul.f32 %v25, %v44
  %v47 = vmul.f32 %v26, %v44
  %v48 = vmul.f32 %v27, %v44
  %v49 = vmul.f32 %v28, %v44
  %v50 = vmul.f32 %v29, %v44
  %v51 = vmul.f32 %v30, %v44
  %v52 = vmul.f32 %v31, %v44
  %v53 = vmul.f32 %v32, %v44
  %v54 = vmul.f32 %v33, %v44
  %v55 = vmul.f32 %v34, %v44
  %v56 = vmul.f32 %v35, %v44
  %v57 = vmul.f32 %v36, %v44
  %v58 = vmul.f32 %v37, %v44
  %v59 = vmul.f32 %v38, %v44
  %v60 = vmul.f32 %v39, %v44
  %v61 = vld [vmem:[%s1 + $0x1] sm:$0x1]
  %v62 = vlaneseq
  %v63 = vshrl.u32 %v62, 7
  %v64 = vsub.s32 0, %v63
  %v65 = vrot.slane %v61, %v64
  %v66 = vadd.f32 %v45, %v65
  %v67 = vadd.f32 %v46, %v65
  %v68 = vadd.f32 %v47, %v65
  %v69 = vadd.f32 %v48, %v65
  %v70 = vadd.f32 %v49, %v65
  %v71 = vadd.f32 %v50, %v65
  %v72 = vadd.f32 %v51, %v65
  %v73 = vadd.f32 %v52, %v65
  %v74 = vadd.f32 %v53, %v65
  %v75 = vadd.f32 %v54, %v65
  %v76 = vadd.f32 %v55, %v65
  %v77 = vadd.f32 %v56, %v65
  %v78 = vadd.f32 %v57, %v65
  %v79 = vadd.f32 %v58, %v65
  %v80 = vadd.f32 %v59, %v65
  %v81 = vadd.f32 %v60, %v65
  %v82 = vmax.f32 %v66, 0.0
  %v83 = vmax.f32 %v67, 0.0
  %v84 = vmax.f32 %v68, 0.0
  %v85 = vmax.f32 %v69, 0.0
  %v86 = vmax.f32 %v70, 0.0
  %v87 = vmax.f32 %v71, 0.0
  %v88 = vmax.f32 %v72, 0.0
  %v89 = vmax.f32 %v73, 0.0
  %v90 = vmax.f32 %v74, 0.0
  %v91 = vmax.f32 %v75, 0.0
  %v92 = vmax.f32 %v76, 0.0
  %v93 = vmax.f32 %v77, 0.0
  %v94 = vmax.f32 %v78, 0.0
  %v95 = vmax.f32 %v79, 0.0
  %v96 = vmax.f32 %v80, 0.0
  %v97 = vmax.f32 %v81, 0.0
  %v98 = vld [vmem:[%s2] sm:$0xff]
  %v99 = vld [vmem:[%s2 + $0x8] sm:$0xff]
  %v100 = vld [vmem:[%s2 + $0x10] sm:$0xff]
  %v101 = vld [vmem:[%s2 + $0x18] sm:$0xff]
  %v102 = vld [vmem:[%s2 + $0x20] sm:$0xff]
  %v103 = vld [vmem:[%s2 + $0x28] sm:$0xff]
  %v104 = vld [vmem:[%s2 + $0x30] sm:$0xff]
  %v105 = vld [vmem:[%s2 + $0x38] sm:$0xff]
  %v106 = vld [vmem:[%s2 + $0x40] sm:$0xff]
  %v107 = vld [vmem:[%s2 + $0x48] sm:$0xff]
  %v108 = vld [vmem:[%s2 + $0x50] sm:$0xff]
  %v109 = vld [vmem:[%s2 + $0x58] sm:$0xff]
  %v110 = vld [vmem:[%s2 + $0x60] sm:$0xff]
  %v111 = vld [vmem:[%s2 + $0x68] sm:$0xff]
  %v112 = vld [vmem:[%s2 + $0x70] sm:$0xff]
  %v113 = vld [vmem:[%s2 + $0x78] sm:$0xff]
  %114 = vmatprep.subr.mxu0 0.0
  %115 = vmatpush1.msra.mxu0 %v113
  %116 = vmatprep.subr.mxu0 0.0
  %117 = vmatpush1.msra.mxu0 %v112
  %118 = vmatprep.subr.mxu0 0.0
  %119 = vmatpush1.msra.mxu0 %v111
  %120 = vmatprep.subr.mxu0 0.0
  %121 = vmatpush1.msra.mxu0 %v110
  %122 = vmatprep.subr.mxu0 0.0
  %123 = vmatpush1.msra.mxu0 %v109
  %124 = vmatprep.subr.mxu0 0.0
  %125 = vmatpush1.msra.mxu0 %v108
  %126 = vmatprep.subr.mxu0 0.0
  %127 = vmatpush1.msra.mxu0 %v107
  %128 = vmatprep.subr.mxu0 0.0
  %129 = vmatpush1.msra.mxu0 %v106
  %130 = vmatprep.subr.mxu0 0.0
  %131 = vmatpush1.msra.mxu0 %v105
  %132 = vmatprep.subr.mxu0 0.0
  %133 = vmatpush1.msra.mxu0 %v104
  %134 = vmatprep.subr.mxu0 0.0
  %135 = vmatpush1.msra.mxu0 %v103
  %136 = vmatprep.subr.mxu0 0.0
  %137 = vmatpush1.msra.mxu0 %v102
  %138 = vmatprep.subr.mxu0 0.0
  %139 = vmatpush1.msra.mxu0 %v101
  %140 = vmatprep.subr.mxu0 0.0
  %141 = vmatpush1.msra.mxu0 %v100
  %142 = vmatprep.subr.mxu0 0.0
  %143 = vmatpush1.msra.mxu0 %v99
  %144 = vmatprep.subr.mxu0 0.0
  %145 = vmatpush1.msra.mxu0 %v98
  %146 = vmatprep.subr.mxu0 0.0
  %147 = vmatpush2.msra.mxu0 0.0
  %148 = vmatprep.subr.mxu0 0.0
  %149 = vmatpush2.msra.mxu0 0.0
  %150 = vmatprep.subr.mxu0 0.0
  %151 = vmatpush2.msra.mxu0 0.0
  %152 = vmatprep.subr.mxu0 0.0
  %153 = vmatpush2.msra.mxu0 0.0
  %154 = vmatprep.subr.mxu0 0.0
  %155 = vmatpush2.msra.mxu0 0.0
  %156 = vmatprep.subr.mxu0 0.0
  %157 = vmatpush2.msra.mxu0 0.0
  %158 = vmatprep.subr.mxu0 0.0
  %159 = vmatpush2.msra.mxu0 0.0
  %160 = vmatprep.subr.mxu0 0.0
  %161 = vmatpush2.msra.mxu0 0.0
  %162 = vmatprep.subr.mxu0 0.0
  %163 = vmatpush2.msra.mxu0 0.0
  %164 = vmatprep.subr.mxu0 0.0
  %165 = vmatpush2.msra.mxu0 0.0
  %166 = vmatprep.subr.mxu0 0.0
  %167 = vmatpush2.msra.mxu0 0.0
  %168 = vmatprep.subr.mxu0 0.0
  %169 = vmatpush2.msra.mxu0 0.0
  %170 = vmatprep.subr.mxu0 0.0
  %171 = vmatpush2.msra.mxu0 0.0
  %172 = vmatprep.subr.mxu0 0.0
  %173 = vmatpush2.msra.mxu0 0.0
  %174 = vmatprep.subr.mxu0 0.0
  %175 = vmatpush2.msra.mxu0 0.0
  %176 = vmatprep.subr.mxu0 0.0
  %177 = vmatpush2.msra.mxu0 0.0
  %178 = vmatprep.mubr.f32.mxu0 0.0
  %179 = vmatmul.mubr.f32.gmra.mxu0 %v82
  %v180 = vpop.f32.mrf.mxu0
  %v181 = vadd.f32 0.0, %v180
  %v182 = vpop.f32.mrf.mxu0
  %183 = vmatprep.mubr.f32.mxu0 0.0
  %184 = vmatmul.mubr.f32.gmra.mxu0 %v83
  %v185 = vpop.f32.mrf.mxu0
  %v186 = vadd.f32 0.0, %v185
  %v187 = vpop.f32.mrf.mxu0
  %188 = vmatprep.mubr.f32.mxu0 0.0
  %189 = vmatmul.mubr.f32.gmra.mxu0 %v84
  %v190 = vpop.f32.mrf.mxu0
  %v191 = vadd.f32 0.0, %v190
  %v192 = vpop.f32.mrf.mxu0
  %193 = vmatprep.mubr.f32.mxu0 0.0
  %194 = vmatmul.mubr.f32.gmra.mxu0 %v85
  %v195 = vpop.f32.mrf.mxu0
  %v196 = vadd.f32 0.0, %v195
  %v197 = vpop.f32.mrf.mxu0
  %198 = vmatprep.mubr.f32.mxu0 0.0
  %199 = vmatmul.mubr.f32.gmra.mxu0 %v86
  %v200 = vpop.f32.mrf.mxu0
  %v201 = vadd.f32 0.0, %v200
  %v202 = vpop.f32.mrf.mxu0
  %203 = vmatprep.mubr.f32.mxu0 0.0
  %204 = vmatmul.mubr.f32.gmra.mxu0 %v87
  %v205 = vpop.f32.mrf.mxu0
  %v206 = vadd.f32 0.0, %v205
  %v207 = vpop.f32.mrf.mxu0
  %208 = vmatprep.mubr.f32.mxu0 0.0
  %209 = vmatmul.mubr.f32.gmra.mxu0 %v88
  %v210 = vpop.f32.mrf.mxu0
  %v211 = vadd.f32 0.0, %v210
  %v212 = vpop.f32.mrf.mxu0
  %213 = vmatprep.mubr.f32.mxu0 0.0
  %214 = vmatmul.mubr.f32.gmra.mxu0 %v89
  %v215 = vpop.f32.mrf.mxu0
  %v216 = vadd.f32 0.0, %v215
  %v217 = vpop.f32.mrf.mxu0
  %218 = vmatprep.mubr.f32.mxu0 0.0
  %219 = vmatmul.mubr.f32.gmra.mxu0 %v90
  %v220 = vpop.f32.mrf.mxu0
  %v221 = vadd.f32 0.0, %v220
  %v222 = vpop.f32.mrf.mxu0
  %223 = vmatprep.mubr.f32.mxu0 0.0
  %224 = vmatmul.mubr.f32.gmra.mxu0 %v91
  %v225 = vpop.f32.mrf.mxu0
  %v226 = vadd.f32 0.0, %v225
  %v227 = vpop.f32.mrf.mxu0
  %228 = vmatprep.mubr.f32.mxu0 0.0
  %229 = vmatmul.mubr.f32.gmra.mxu0 %v92
  %v230 = vpop.f32.mrf.mxu0
  %v231 = vadd.f32 0.0, %v230
  %v232 = vpop.f32.mrf.mxu0
  %233 = vmatprep.mubr.f32.mxu0 0.0
  %234 = vmatmul.mubr.f32.gmra.mxu0 %v93
  %v235 = vpop.f32.mrf.mxu0
  %v236 = vadd.f32 0.0, %v235
  %v237 = vpop.f32.mrf.mxu0
  %238 = vmatprep.mubr.f32.mxu0 0.0
  %239 = vmatmul.mubr.f32.gmra.mxu0 %v94
  %v240 = vpop.f32.mrf.mxu0
  %v241 = vadd.f32 0.0, %v240
  %v242 = vpop.f32.mrf.mxu0
  %243 = vmatprep.mubr.f32.mxu0 0.0
  %244 = vmatmul.mubr.f32.gmra.mxu0 %v95
  %v245 = vpop.f32.mrf.mxu0
  %v246 = vadd.f32 0.0, %v245
  %v247 = vpop.f32.mrf.mxu0
  %248 = vmatprep.mubr.f32.mxu0 0.0
  %249 = vmatmul.mubr.f32.gmra.mxu0 %v96
  %v250 = vpop.f32.mrf.mxu0
  %v251 = vadd.f32 0.0, %v250
  %v252 = vpop.f32.mrf.mxu0
  %253 = vmatprep.mubr.f32.mxu0 0.0
  %254 = vmatmul.mubr.f32.gmra.mxu0 %v97
  %v255 = vpop.f32.mrf.mxu0
  %v256 = vadd.f32 0.0, %v255
  %v257 = vpop.f32.mrf.mxu0
  %258 = vdwg.mxu0
  %259 = vst [vmem:[%s5] sm:$0xff] %v181
  %260 = vst [vmem:[%s5 + $0x8] sm:$0xff] %v186
  %261 = vst [vmem:[%s5 + $0x10] sm:$0xff] %v191
  %262 = vst [vmem:[%s5 + $0x18] sm:$0xff] %v196
  %263 = vst [vmem:[%s5 + $0x20] sm:$0xff] %v201
  %264 = vst [vmem:[%s5 + $0x28] sm:$0xff] %v206
  %265 = vst [vmem:[%s5 + $0x30] sm:$0xff] %v211
  %266 = vst [vmem:[%s5 + $0x38] sm:$0xff] %v216
  %267 = vst [vmem:[%s5 + $0x40] sm:$0xff] %v221
  %268 = vst [vmem:[%s5 + $0x48] sm:$0xff] %v226
  %269 = vst [vmem:[%s5 + $0x50] sm:$0xff] %v231
  %270 = vst [vmem:[%s5 + $0x58] sm:$0xff] %v236
  %271 = vst [vmem:[%s5 + $0x60] sm:$0xff] %v241
  %272 = vst [vmem:[%s5 + $0x68] sm:$0xff] %v246
  %273 = vst [vmem:[%s5 + $0x70] sm:$0xff] %v251
  %274 = vst [vmem:[%s5 + $0x78] sm:$0xff] %v256
  %v275 = vadd.f32 %v181, %v186
  %v276 = vadd.f32 %v275, %v191
  %v277 = vadd.f32 %v276, %v196
  %v278 = vadd.f32 %v277, %v201
  %v279 = vadd.f32 %v278, %v206
  %v280 = vadd.f32 %v279, %v211
  %v281 = vadd.f32 %v280, %v216
  %v282 = vadd.f32 %v281, %v221
  %v283 = vadd.f32 %v282, %v226
  %v284 = vadd.f32 %v283, %v231
  %v285 = vadd.f32 %v284, %v236
  %v286 = vadd.f32 %v285, %v241
  %v287 = vadd.f32 %v286, %v246
  %v288 = vadd.f32 %v287, %v251
  %v289 = vadd.f32 %v288, %v256
  %v290 = vrot.slane %v289, 4
  %v291 = vadd.f32 %v289, %v290
  %v292 = vrot.slane %v291, 2
  %v293 = vadd.f32 %v291, %v292
  %v294 = vrot.slane %v293, 1
  %v295 = vadd.f32 %v293, %v294
  %296 = vst [vmem:[%s7] sm:$0x1] %v295
  %v297 = vmul.f32 %v181, %v181
  %v298 = vmul.f32 %v186, %v186
  %v299 = vmul.f32 %v191, %v191
  %v300 = vmul.f32 %v196, %v196
  %v301 = vmul.f32 %v201, %v201
  %v302 = vmul.f32 %v206, %v206
  %v303 = vmul.f32 %v211, %v211
  %v304 = vmul.f32 %v216, %v216
  %v305 = vmul.f32 %v221, %v221
  %v306 = vmul.f32 %v226, %v226
  %v307 = vmul.f32 %v231, %v231
  %v308 = vmul.f32 %v236, %v236
  %v309 = vmul.f32 %v241, %v241
  %v310 = vmul.f32 %v246, %v246
  %v311 = vmul.f32 %v251, %v251
  %v312 = vmul.f32 %v256, %v256
  %v313 = vadd.f32 %v297, %v298
  %v314 = vadd.f32 %v313, %v299
  %v315 = vadd.f32 %v314, %v300
  %v316 = vadd.f32 %v315, %v301
  %v317 = vadd.f32 %v316, %v302
  %v318 = vadd.f32 %v317, %v303
  %v319 = vadd.f32 %v318, %v304
  %v320 = vadd.f32 %v319, %v305
  %v321 = vadd.f32 %v320, %v306
  %v322 = vadd.f32 %v321, %v307
  %v323 = vadd.f32 %v322, %v308
  %v324 = vadd.f32 %v323, %v309
  %v325 = vadd.f32 %v324, %v310
  %v326 = vadd.f32 %v325, %v311
  %v327 = vadd.f32 %v326, %v312
  %v328 = vrot.slane %v327, 4
  %v329 = vadd.f32 %v327, %v328
  %v330 = vrot.slane %v329, 2
  %v331 = vadd.f32 %v329, %v330
  %v332 = vrot.slane %v331, 1
  %v333 = vadd.f32 %v331, %v332
  %334 = vst [vmem:[%s7 + $0x1] sm:$0x1] %v333
  %v335 = vld [vmem:[%s3] sm:$0xff]
  %v336 = vld [vmem:[%s3 + $0x8] sm:$0xff]
  %v337 = vld [vmem:[%s3 + $0x10] sm:$0xff]
  %v338 = vld [vmem:[%s3 + $0x18] sm:$0xff]
  %v339 = vld [vmem:[%s3 + $0x20] sm:$0xff]
  %v340 = vld [vmem:[%s3 + $0x28] sm:$0xff]
  %v341 = vld [vmem:[%s3 + $0x30] sm:$0xff]
  %v342 = vld [vmem:[%s3 + $0x38] sm:$0xff]
  %v343 = vld [vmem:[%s3 + $0x40] sm:$0xff]
  %v344 = vld [vmem:[%s3 + $0x48] sm:$0xff]
  %v345 = vld [vmem:[%s3 + $0x50] sm:$0xff]
  %v346 = vld [vmem:[%s3 + $0x58] sm:$0xff]
  %v347 = vld [vmem:[%s3 + $0x60] sm:$0xff]
  %v348 = vld [vmem:[%s3 + $0x68] sm:$0xff]
  %v349 = vld [vmem:[%s3 + $0x70] sm:$0xff]
  %v350 = vld [vmem:[%s3 + $0x78] sm:$0xff]
  %v351 = vld [vmem:[%s4] sm:$0xff]
  %v352 = vld [vmem:[%s4 + $0x8] sm:$0xff]
  %v353 = vld [vmem:[%s4 + $0x10] sm:$0xff]
  %v354 = vld [vmem:[%s4 + $0x18] sm:$0xff]
  %v355 = vld [vmem:[%s4 + $0x20] sm:$0xff]
  %v356 = vld [vmem:[%s4 + $0x28] sm:$0xff]
  %v357 = vld [vmem:[%s4 + $0x30] sm:$0xff]
  %v358 = vld [vmem:[%s4 + $0x38] sm:$0xff]
  %v359 = vld [vmem:[%s4 + $0x40] sm:$0xff]
  %v360 = vld [vmem:[%s4 + $0x48] sm:$0xff]
  %v361 = vld [vmem:[%s4 + $0x50] sm:$0xff]
  %v362 = vld [vmem:[%s4 + $0x58] sm:$0xff]
  %v363 = vld [vmem:[%s4 + $0x60] sm:$0xff]
  %v364 = vld [vmem:[%s4 + $0x68] sm:$0xff]
  %v365 = vld [vmem:[%s4 + $0x70] sm:$0xff]
  %v366 = vld [vmem:[%s4 + $0x78] sm:$0xff]
  %367 = vmatprep.subr.mxu0 0.0
  %368 = vmatpush1.msra.mxu0 %v366
  %369 = vmatprep.subr.mxu0 0.0
  %370 = vmatpush1.msra.mxu0 %v365
  %371 = vmatprep.subr.mxu0 0.0
  %372 = vmatpush1.msra.mxu0 %v364
  %373 = vmatprep.subr.mxu0 0.0
  %374 = vmatpush1.msra.mxu0 %v363
  %375 = vmatprep.subr.mxu0 0.0
  %376 = vmatpush1.msra.mxu0 %v362
  %377 = vmatprep.subr.mxu0 0.0
  %378 = vmatpush1.msra.mxu0 %v361
  %379 = vmatprep.subr.mxu0 0.0
  %380 = vmatpush1.msra.mxu0 %v360
  %381 = vmatprep.subr.mxu0 0.0
  %382 = vmatpush1.msra.mxu0 %v359
  %383 = vmatprep.subr.mxu0 0.0
  %384 = vmatpush1.msra.mxu0 %v358
  %385 = vmatprep.subr.mxu0 0.0
  %386 = vmatpush1.msra.mxu0 %v357
  %387 = vmatprep.subr.mxu0 0.0
  %388 = vmatpush1.msra.mxu0 %v356
  %389 = vmatprep.subr.mxu0 0.0
  %390 = vmatpush1.msra.mxu0 %v355
  %391 = vmatprep.subr.mxu0 0.0
  %392 = vmatpush1.msra.mxu0 %v354
  %393 = vmatprep.subr.mxu0 0.0
  %394 = vmatpush1.msra.mxu0 %v353
  %395 = vmatprep.subr.mxu0 0.0
  %396 = vmatpush1.msra.mxu0 %v352
  %397 = vmatprep.subr.mxu0 0.0
  %398 = vmatpush1.msra.mxu0 %v351
  %399 = vmatprep.subr.mxu0 0.0
  %400 = vmatpush2.msra.mxu0 0.0
  %401 = vmatprep.subr.mxu0 0.0
  %402 = vmatpush2.msra.mxu0 0.0
  %403 = vmatprep.subr.mxu0 0.0
  %404 = vmatpush2.msra.mxu0 0.0
  %405 = vmatprep.subr.mxu0 0.0
  %406 = vmatpush2.msra.mxu0 0.0
  %407 = vmatprep.subr.mxu0 0.0
  %408 = vmatpush2.msra.mxu0 0.0
  %409 = vmatprep.subr.mxu0 0.0
  %410 = vmatpush2.msra.mxu0 0.0
  %411 = vmatprep.subr.mxu0 0.0
  %412 = vmatpush2.msra.mxu0 0.0
  %413 = vmatprep.subr.mxu0 0.0
  %414 = vmatpush2.msra.mxu0 0.0
  %415 = vmatprep.subr.mxu0 0.0
  %416 = vmatpush2.msra.mxu0 0.0
  %417 = vmatprep.subr.mxu0 0.0
  %418 = vmatpush2.msra.mxu0 0.0
  %419 = vmatprep.subr.mxu0 0.0
  %420 = vmatpush2.msra.mxu0 0.0
  %421 = vmatprep.subr.mxu0 0.0
  %422 = vmatpush2.msra.mxu0 0.0
  %423 = vmatprep.subr.mxu0 0.0
  %424 = vmatpush2.msra.mxu0 0.0
  %425 = vmatprep.subr.mxu0 0.0
  %426 = vmatpush2.msra.mxu0 0.0
  %427 = vmatprep.subr.mxu0 0.0
  %428 = vmatpush2.msra.mxu0 0.0
  %429 = vmatprep.subr.mxu0 0.0
  %430 = vmatpush2.msra.mxu0 0.0
  %431 = vmatprep.mubr.f32.mxu0 0.0
  %432 = vmatmul.mubr.f32.gmra.mxu0 %v335
  %v433 = vpop.f32.mrf.mxu0
  %v434 = vadd.f32 0.0, %v433
  %v435 = vpop.f32.mrf.mxu0
  %436 = vmatprep.mubr.f32.mxu0 0.0
  %437 = vmatmul.mubr.f32.gmra.mxu0 %v336
  %v438 = vpop.f32.mrf.mxu0
  %v439 = vadd.f32 0.0, %v438
  %v440 = vpop.f32.mrf.mxu0
  %441 = vmatprep.mubr.f32.mxu0 0.0
  %442 = vmatmul.mubr.f32.gmra.mxu0 %v337
  %v443 = vpop.f32.mrf.mxu0
  %v444 = vadd.f32 0.0, %v443
  %v445 = vpop.f32.mrf.mxu0
  %446 = vmatprep.mubr.f32.mxu0 0.0
  %447 = vmatmul.mubr.f32.gmra.mxu0 %v338
  %v448 = vpop.f32.mrf.mxu0
  %v449 = vadd.f32 0.0, %v448
  %v450 = vpop.f32.mrf.mxu0
  %451 = vmatprep.mubr.f32.mxu0 0.0
  %452 = vmatmul.mubr.f32.gmra.mxu0 %v339
  %v453 = vpop.f32.mrf.mxu0
  %v454 = vadd.f32 0.0, %v453
  %v455 = vpop.f32.mrf.mxu0
  %456 = vmatprep.mubr.f32.mxu0 0.0
  %457 = vmatmul.mubr.f32.gmra.mxu0 %v340
  %v458 = vpop.f32.mrf.mxu0
  %v459 = vadd.f32 0.0, %v458
  %v460 = vpop.f32.mrf.mxu0
  %461 = vmatprep.mubr.f32.mxu0 0.0
  %462 = vmatmul.mubr.f32.gmra.mxu0 %v341
  %v463 = vpop.f32.mrf.mxu0
  %v464 = vadd.f32 0.0, %v463
  %v465 = vpop.f32.mrf.mxu0
  %466 = vmatprep.mubr.f32.mxu0 0.0
  %467 = vmatmul.mubr.f32.gmra.mxu0 %v342
  %v468 = vpop.f32.mrf.mxu0
  %v469 = vadd.f32 0.0, %v468
  %v470 = vpop.f32.mrf.mxu0
  %471 = vmatprep.mubr.f32.mxu0 0.0
  %472 = vmatmul.mubr.f32.gmra.mxu0 %v343
  %v473 = vpop.f32.mrf.mxu0
  %v474 = vadd.f32 0.0, %v473
  %v475 = vpop.f32.mrf.mxu0
  %476 = vmatprep.mubr.f32.mxu0 0.0
  %477 = vmatmul.mubr.f32.gmra.mxu0 %v344
  %v478 = vpop.f32.mrf.mxu0
  %v479 = vadd.f32 0.0, %v478
  %v480 = vpop.f32.mrf.mxu0
  %481 = vmatprep.mubr.f32.mxu0 0.0
  %482 = vmatmul.mubr.f32.gmra.mxu0 %v345
  %v483 = vpop.f32.mrf.mxu0
  %v484 = vadd.f32 0.0, %v483
  %v485 = vpop.f32.mrf.mxu0
  %486 = vmatprep.mubr.f32.mxu0 0.0
  %487 = vmatmul.mubr.f32.gmra.mxu0 %v346
  %v488 = vpop.f32.mrf.mxu0
  %v489 = vadd.f32 0.0, %v488
  %v490 = vpop.f32.mrf.mxu0
  %491 = vmatprep.mubr.f32.mxu0 0.0
  %492 = vmatmul.mubr.f32.gmra.mxu0 %v347
  %v493 = vpop.f32.mrf.mxu0
  %v494 = vadd.f32 0.0, %v493
  %v495 = vpop.f32.mrf.mxu0
  %496 = vmatprep.mubr.f32.mxu0 0.0
  %497 = vmatmul.mubr.f32.gmra.mxu0 %v348
  %v498 = vpop.f32.mrf.mxu0
  %v499 = vadd.f32 0.0, %v498
  %v500 = vpop.f32.mrf.mxu0
  %501 = vmatprep.mubr.f32.mxu0 0.0
  %502 = vmatmul.mubr.f32.gmra.mxu0 %v349
  %v503 = vpop.f32.mrf.mxu0
  %v504 = vadd.f32 0.0, %v503
  %v505 = vpop.f32.mrf.mxu0
  %506 = vmatprep.mubr.f32.mxu0 0.0
  %507 = vmatmul.mubr.f32.gmra.mxu0 %v350
  %v508 = vpop.f32.mrf.mxu0
  %v509 = vadd.f32 0.0, %v508
  %v510 = vpop.f32.mrf.mxu0
  %511 = vdwg.mxu0
  %512 = vst [vmem:[%s6] sm:$0xff] %v434
  %513 = vst [vmem:[%s6 + $0x8] sm:$0xff] %v439
  %514 = vst [vmem:[%s6 + $0x10] sm:$0xff] %v444
  %515 = vst [vmem:[%s6 + $0x18] sm:$0xff] %v449
  %516 = vst [vmem:[%s6 + $0x20] sm:$0xff] %v454
  %517 = vst [vmem:[%s6 + $0x28] sm:$0xff] %v459
  %518 = vst [vmem:[%s6 + $0x30] sm:$0xff] %v464
  %519 = vst [vmem:[%s6 + $0x38] sm:$0xff] %v469
  %520 = vst [vmem:[%s6 + $0x40] sm:$0xff] %v474
  %521 = vst [vmem:[%s6 + $0x48] sm:$0xff] %v479
  %522 = vst [vmem:[%s6 + $0x50] sm:$0xff] %v484
  %523 = vst [vmem:[%s6 + $0x58] sm:$0xff] %v489
  %524 = vst [vmem:[%s6 + $0x60] sm:$0xff] %v494
  %525 = vst [vmem:[%s6 + $0x68] sm:$0xff] %v499
  %526 = vst [vmem:[%s6 + $0x70] sm:$0xff] %v504
  %527 = vst [vmem:[%s6 + $0x78] sm:$0xff] %v509
  %v528 = vadd.f32 %v434, %v439
  %v529 = vadd.f32 %v528, %v444
  %v530 = vadd.f32 %v529, %v449
  %v531 = vadd.f32 %v530, %v454
  %v532 = vadd.f32 %v531, %v459
  %v533 = vadd.f32 %v532, %v464
  %v534 = vadd.f32 %v533, %v469
  %v535 = vadd.f32 %v534, %v474
  %v536 = vadd.f32 %v535, %v479
  %v537 = vadd.f32 %v536, %v484
  %v538 = vadd.f32 %v537, %v489
  %v539 = vadd.f32 %v538, %v494
  %v540 = vadd.f32 %v539, %v499
  %v541 = vadd.f32 %v540, %v504
  %v542 = vadd.f32 %v541, %v509
  %v543 = vrot.slane %v542, 4
  %v544 = vadd.f32 %v542, %v543
  %v545 = vrot.slane %v544, 2
  %v546 = vadd.f32 %v544, %v545
  %v547 = vrot.slane %v546, 1
  %v548 = vadd.f32 %v546, %v547
  %549 = vst [vmem:[%s8] sm:$0x1] %v548
  %v550 = vmul.f32 %v434, %v434
  %v551 = vmul.f32 %v439, %v439
  %v552 = vmul.f32 %v444, %v444
  %v553 = vmul.f32 %v449, %v449
  %v554 = vmul.f32 %v454, %v454
  %v555 = vmul.f32 %v459, %v459
  %v556 = vmul.f32 %v464, %v464
  %v557 = vmul.f32 %v469, %v469
  %v558 = vmul.f32 %v474, %v474
  %v559 = vmul.f32 %v479, %v479
  %v560 = vmul.f32 %v484, %v484
  %v561 = vmul.f32 %v489, %v489
  %v562 = vmul.f32 %v494, %v494
  %v563 = vmul.f32 %v499, %v499
  %v564 = vmul.f32 %v504, %v504
  %v565 = vmul.f32 %v509, %v509
  %v566 = vadd.f32 %v550, %v551
  %v567 = vadd.f32 %v566, %v552
  %v568 = vadd.f32 %v567, %v553
  %v569 = vadd.f32 %v568, %v554
  %v570 = vadd.f32 %v569, %v555
  %v571 = vadd.f32 %v570, %v556
  %v572 = vadd.f32 %v571, %v557
  %v573 = vadd.f32 %v572, %v558
  %v574 = vadd.f32 %v573, %v559
  %v575 = vadd.f32 %v574, %v560
  %v576 = vadd.f32 %v575, %v561
  %v577 = vadd.f32 %v576, %v562
  %v578 = vadd.f32 %v577, %v563
  %v579 = vadd.f32 %v578, %v564
  %v580 = vadd.f32 %v579, %v565
  %v581 = vrot.slane %v580, 4
  %v582 = vadd.f32 %v580, %v581
  %v583 = vrot.slane %v582, 2
  %v584 = vadd.f32 %v582, %v583
  %v585 = vrot.slane %v584, 1
  %v586 = vadd.f32 %v584, %v585
  %587 = vst [vmem:[%s8 + $0x1] sm:$0x1] %v586
  // Predicated region
  $region22: #{bottleneck_forward.8} parent=0 // pred_check
    _
  $region23: #{bottleneck_forward.8} parent=0 // pred_check_branch
    %589 = sbr.rel (0) target = $region25
  $region24: #{bottleneck_forward.8} parent=0 // pred_region
    _
  $region25: #{bottleneck_forward.8} parent=0 // pred_fallthru
    _
  // Predicated region
  $region26: #{bottleneck_forward.8} parent=0 // pred_check
    _
  $region27: #{bottleneck_forward.8} parent=0 // pred_check_branch
    %591 = sbr.rel (0) target = $region29
  $region28: #{bottleneck_forward.8} parent=0 // pred_region
    _
  $region29: #{bottleneck_forward.8} parent=0 // pred_fallthru
    _
  // Predicated region
  $region30: #{bottleneck_forward.8} parent=0 // pred_check
    _
  $region31: #{bottleneck_forward.8} parent=0 // pred_check_branch
    %593 = sbr.rel (0) target = $region33
  $region32: #{bottleneck_forward.8} parent=0 // pred_region
    _
  $region33: #{bottleneck_forward.8} parent=0 // pred_fallthru
    _
  // Predicated region
  $region34: #{bottleneck_forward.8} parent=0 // pred_check
    _
  $region35: #{bottleneck_forward.8} parent=0 // pred_check_branch
    %595 = sbr.rel (0) target = $region37
  $region36: #{bottleneck_forward.8} parent=0 // pred_region
    _
  $region37: #{bottleneck_forward.8} parent=0 // pred_fallthru
    _
  // Predicated region
  $region38: #{bottleneck_forward.8} parent=0 // pred_check
    _
  $region39: #{bottleneck_forward.8} parent=0 // pred_check_branch
    %597 = sbr.rel (0) target = $region41
  $region40: #{bottleneck_forward.8} parent=0 // pred_region
    _
  $region41: #{bottleneck_forward.8} parent=0 // pred_fallthru
    _
  // Predicated region
  $region42: #{bottleneck_forward.8} parent=0 // pred_check
    _
  $region43: #{bottleneck_forward.8} parent=0 // pred_check_branch
    %599 = sbr.rel (0) target = $region45
  $region44: #{bottleneck_forward.8} parent=0 // pred_region
    _
  $region45: #{bottleneck_forward.8} parent=0 // pred_fallthru
    _
  // Predicated region
  $region46: #{bottleneck_forward.8} parent=0 // pred_check
    _
  $region47: #{bottleneck_forward.8} parent=0 // pred_check_branch
    %601 = sbr.rel (0) target = $region49
  $region48: #{bottleneck_forward.8} parent=0 // pred_region
    _
  $region49: #{bottleneck_forward.8} parent=0 // pred_fallthru
    _
  // Predicated region
  $region50: #{bottleneck_forward.8} parent=0 // pred_check
    _
  $region51: #{bottleneck_forward.8} parent=0 // pred_check_branch
    %603 = sbr.rel (0) target = $region53
  $region52: #{bottleneck_forward.8} parent=0 // pred_region
    _
  $region53: #{bottleneck_forward.8} parent=0 // pred_fallthru
    _

// kernel: bottleneck_forward.7
$region0: #{bottleneck_forward.7}
  #allocation0 [shape = 'u32[]', space=smem, size = 0x4, offset = 0x4, fixed_abs, tag = 'smem constant byte address 0x4 - core index']
  #allocation1 [shape = 'u32[144,128]{1,0:T(1,128)}', space=vmem, size = 0x12000, scoped, tag = 'internal scratch']
  %s0 = inlined_call_operand.vmem [shape: f32[8,9,9,128], index: 0, kind: input, shape index: {}]
  %s1 = inlined_call_operand.vmem [shape: f32[3,3,128,128], index: 1, kind: input, shape index: {}]
  %s2 = inlined_call_operand.vmem [shape: f32[128,128], index: 2, kind: output, shape index: {0}]
  %s3 = inlined_call_operand.vmem [shape: f32[2,2,128], index: 3, kind: output, shape index: {1}]
  %4 = xla_tuple %s2, %s3
  %s5 = sld [smem:[#allocation0]]
  $region49: #{bottleneck_forward.7} parent=0
    _
  %s7 = ssub.s32 1, %s5
  %s8 = scalar_select 0, %s7, %s5
  loop: start=0, step=1, limit=4
  $region2: #{bottleneck_forward.7} parent=0 // loop_pre_header
    _
  $region3: #{bottleneck_forward.7} parent=0 // loop_header
    %s10 = sphi 0, %s14
    %p11 = scmp.ge.s32.totalorder %s10, 4
    %s20 = sphi 0, %s22
    %s23 = sphi 0, %s20
    %s24 = sphi 0, %s23
    %s40 = sphi 0, %s24
    %s44 = sphi 0, %s44
    %s46 = sphi 0, %s44
    %s47 = sphi 0, %s46
    %s61 = sphi 0, %s47
    %s67 = sphi 0, %s69
    %s70 = sphi 0, %s67
    %s71 = sphi 0, %s70
    %s87 = sphi 0, %s71
    %s93 = sphi 0, %s95
    %s96 = sphi 0, %s93
    %s97 = sphi 0, %s96
    %s113 = sphi 0, %s97
  $region4: #{bottleneck_forward.7} parent=0 // loop_header_branch
    %13 = sbr.rel (%p11) target = $region8
  $region5: #{bottleneck_forward.7} parent=0 // loop_body
    %s15 = ssub.s32 %s10, 1
    %s16 = ssub.s32 %s10, 2
    %s17 = sadd.s32 %s10, 1
    %s18 = ssub.s32 %s10, %s17
    %p19 = scmp.eq.s32.totalorder %s18, 0
    %s21 = sadd.s32 %s20, 1
    %s22 = scalar_select %p19, %s20, %s21
    %p25 = pneg %p19
    %p26 = scmp.eq.s32.totalorder %s10, 1
    %p27 = por %p25, %p26
    %p28 = scmp.ne.s32.totalorder %s20, %s23
    %p29 = scmp.eq.s32.totalorder %s10, 0
    %p30 = por %p28, %p29
    %p31 = scmp.ne.s32.totalorder %s20, %s23
    %p32 = scmp.eq.s32.totalorder %s15, 1
    %p33 = por %p31, %p32
    %p34 = scmp.ne.s32.totalorder %s23, %s24
    %p35 = scmp.eq.s32.totalorder %s15, 0
    %p36 = por %p34, %p35
    %p37 = scmp.ne.s32.totalorder %s23, %s24
    %p38 = scmp.eq.s32.totalorder %s16, 1
    %p39 = por %p37, %p38
    %p41 = scmp.ne.s32.totalorder %s24, %s40
    %p42 = scmp.eq.s32.totalorder %s16, 0
    %p43 = por %p41, %p42
    %s45 = sadd.s32 %s44, 1
    %p48 = scmp.eq.s32.totalorder %s10, 1
    %p49 = scmp.ne.s32.totalorder %s44, %s46
    %p50 = scmp.eq.s32.totalorder %s10, 0
    %p51 = por %p49, %p50
    %p52 = scmp.ne.s32.totalorder %s44, %s46
    %p53 = scmp.eq.s32.totalorder %s15, 1
    %p54 = por %p52, %p53
    %p55 = scmp.ne.s32.totalorder %s46, %s47
    %p56 = scmp.eq.s32.totalorder %s15, 0
    %p57 = por %p55, %p56
    %p58 = scmp.ne.s32.totalorder %s46, %s47
    %p59 = scmp.eq.s32.totalorder %s16, 1
    %p60 = por %p58, %p59
    %p62 = scmp.ne.s32.totalorder %s47, %s61
    %p63 = scmp.eq.s32.totalorder %s16, 0
    %p64 = por %p62, %p63
    %s65 = ssub.s32 %s10, %s17
    %p66 = scmp.eq.s32.totalorder %s65, 0
    %s68 = sadd.s32 %s67, 1
    %s69 = scalar_select %p66, %s67, %s68
    %p72 = pneg %p66
    %p73 = scmp.eq.s32.totalorder %s10, 1
    %p74 = por %p72, %p73
    %p75 = scmp.ne.s32.totalorder %s67, %s70
    %p76 = scmp.eq.s32.totalorder %s10, 0
    %p77 = por %p75, %p76
    %p78 = scmp.ne.s32.totalorder %s67, %s70
    %p79 = scmp.eq.s32.totalorder %s15, 1
    %p80 = por %p78, %p79
    %p81 = scmp.ne.s32.totalorder %s70, %s71
    %p82 = scmp.eq.s32.totalorder %s15, 0
    %p83 = por %p81, %p82
    %p84 = scmp.ne.s32.totalorder %s70, %s71
    %p85 = scmp.eq.s32.totalorder %s16, 1
    %p86 = por %p84, %p85
    %p88 = scmp.ne.s32.totalorder %s71, %s87
    %p89 = scmp.eq.s32.totalorder %s16, 0
    %p90 = por %p88, %p89
    %s91 = ssub.s32 %s10, %s17
    %p92 = scmp.eq.s32.totalorder %s91, 0
    %s94 = sadd.s32 %s93, 1
    %s95 = scalar_select %p92, %s93, %s94
    %p98 = pneg %p92
    %p99 = scmp.eq.s32.totalorder %s10, 1
    %p100 = por %p98, %p99
    %p101 = scmp.ne.s32.totalorder %s93, %s96
    %p102 = scmp.eq.s32.totalorder %s10, 0
    %p103 = por %p101, %p102
    %p104 = scmp.ne.s32.totalorder %s93, %s96
    %p105 = scmp.eq.s32.totalorder %s15, 1
    %p106 = por %p104, %p105
    %p107 = scmp.ne.s32.totalorder %s96, %s97
    %p108 = scmp.eq.s32.totalorder %s15, 0
    %p109 = por %p107, %p108
    %p110 = scmp.ne.s32.totalorder %s96, %s97
    %p111 = scmp.eq.s32.totalorder %s16, 1
    %p112 = por %p110, %p111
    %p114 = scmp.ne.s32.totalorder %s97, %s113
    %p115 = scmp.eq.s32.totalorder %s16, 0
    %p116 = por %p114, %p115
    %p117 = scmp.le.s32.totalorder 1, %s10
    %p118 = scmp.lt.s32.totalorder %s10, 3
    %p119 = pnand %p117, %p118
    %p120 = pneg %p119
    // Predicated region
    $region9: #{bottleneck_forward.7} parent=5 // pred_check
      _
    $region10: #{bottleneck_forward.7} parent=5 // pred_check_branch
      %122 = sbr.rel (%p119) target = $region12
    $region11: #{bottleneck_forward.7} parent=5 // pred_region
      %s123 = ssub.s32 %s10, 1
      // Predicated region
      $region13: #{bottleneck_forward.7} parent=11 // pred_check
        %p124 = pneg %p57
      $region14: #{bottleneck_forward.7} parent=11 // pred_check_branch
        %126 = sbr.rel (%p124) target = $region16
      $region15: #{bottleneck_forward.7} parent=11 // pred_region
        _
      $region16: #{bottleneck_forward.7} parent=11 // pred_fallthru
        _
    $region12: #{bottleneck_forward.7} parent=5 // pred_fallthru
      _
    %p127 = scmp.lt.s32.totalorder %s10, 2
    // Predicated region
    $region17: #{bottleneck_forward.7} parent=5 // pred_check
      %p128 = pneg %p127
    $region18: #{bottleneck_forward.7} parent=5 // pred_check_branch
      %130 = sbr.rel (%p128) target = $region20
    $region19: #{bottleneck_forward.7} parent=5 // pred_region
      // Predicated region
      $region21: #{bottleneck_forward.7} parent=19 // pred_check
        %p131 = pneg %p30
      $region22: #{bottleneck_forward.7} parent=19 // pred_check_branch
        %133 = sbr.rel (%p131) target = $region24
      $region23: #{bottleneck_forward.7} parent=19 // pred_region
        %s134 = smul.u32 4, %s10
        %p135 = scmp.lt.s32.totalorder %s134, 7
        %s136 = scalar_select %p135, %s134, 7
        %s137 = smul.addr %s136, 18
        %s138 = smul.addr %s137, 8
        %s139 = scalar_lea.vmem %s0, %s138
        %s140 = smul.u32 4, %s10
      $region24: #{bottleneck_forward.7} parent=19 // pred_fallthru
        _
    $region20: #{bottleneck_forward.7} parent=5 // pred_fallthru
      _
    %p141 = scmp.le.s32.totalorder 1, %s10
    %p142 = scmp.lt.s32.totalorder %s10, 3
    %p143 = pnand %p141, %p142
    %p144 = pneg %p143
    // Predicated region
    $region25: #{bottleneck_forward.7} parent=5 // pred_check
      _
    $region26: #{bottleneck_forward.7} parent=5 // pred_check_branch
      %146 = sbr.rel (%p143) target = $region28
    $region27: #{bottleneck_forward.7} parent=5 // pred_region
      %s147 = ssub.s32 %s10, 1
      %s148 = smul.u32 4, %s15
      %p149 = scmp.lt.s32.totalorder %s148, 7
      %s150 = scalar_select %p149, %s148, 7
      %s151 = smul.addr %s150, 18
      %s152 = smul.addr %s151, 8
      %s153 = scalar_lea.vmem %s0, %s152
      %p154 = pneg %p36
      %p155 = pneg %p33
      %p156 = pneg %p57
      %p157 = pneg %p54
      %p158 = pneg %p83
      %p159 = pneg %p80
      %s160 = smul.u32 8, %s15
      %p161 = scmp.lt.s32.totalorder %s160, 15
      %s162 = scalar_select %p161, %s160, 15
      %s163 = smul.addr %s162, 8
      %s164 = scalar_lea.vmem %s2, %s163
      %p165 = pneg %p109
      %p166 = pneg %p106
      %p167 = scmp.lt.s32.totalorder %s15, 1
      %s168 = scalar_select %p167, %s15, 1
      %s169 = smul.addr %s168, 2
      %s170 = scalar_lea.vmem %s3, %s169
      %s171 = smul.u32 4, %s15
      %p172 = scmp.lt.s32.totalorder %s171, 7
      %s173 = scalar_select %p172, %s171, 7
      %s174 = smul.addr %s173, 18
      %s175 = smul.addr %s174, 8
      %s176 = scalar_lea.vmem %s0, %s175
      %s177 = smul.u32 4, %s15
      %s178 = smul.u32 8, %s15
      %p179 = scmp.lt.s32.totalorder %s178, 15
      %s180 = scalar_select %p179, %s178, 15
      %s181 = smul.addr %s180, 8
      %s182 = scalar_lea.vmem %s2, %s181
      %s183 = smul.u32 8, %s15
      %p184 = scmp.lt.s32.totalorder %s15, 1
      %s185 = scalar_select %p184, %s15, 1
      %s186 = smul.addr %s185, 2
      %s187 = scalar_lea.vmem %s3, %s186
      %v188 = vld [vmem:[%s176] sm:$0xff]
      %v189 = vld [vmem:[%s176 + $0x10] sm:$0xff]
      %v190 = vld [vmem:[%s176 + $0x20] sm:$0xff]
      %v191 = vld [vmem:[%s176 + $0x30] sm:$0xff]
      %v192 = vld [vmem:[%s176 + $0x40] sm:$0xff]
      %v193 = vld [vmem:[%s176 + $0x50] sm:$0xff]
      %v194 = vld [vmem:[%s176 + $0x60] sm:$0xff]
      %v195 = vld [vmem:[%s176 + $0x70] sm:$0xff]
      %v196 = vld [vmem:[%s1] sm:$0xff]
      %v197 = vld [vmem:[%s1 + $0x8] sm:$0xff]
      %v198 = vld [vmem:[%s1 + $0x10] sm:$0xff]
      %v199 = vld [vmem:[%s1 + $0x18] sm:$0xff]
      %v200 = vld [vmem:[%s1 + $0x20] sm:$0xff]
      %v201 = vld [vmem:[%s1 + $0x28] sm:$0xff]
      %v202 = vld [vmem:[%s1 + $0x30] sm:$0xff]
      %v203 = vld [vmem:[%s1 + $0x38] sm:$0xff]
      %v204 = vld [vmem:[%s1 + $0x40] sm:$0xff]
      %v205 = vld [vmem:[%s1 + $0x48] sm:$0xff]
      %v206 = vld [vmem:[%s1 + $0x50] sm:$0xff]
      %v207 = vld [vmem:[%s1 + $0x58] sm:$0xff]
      %v208 = vld [vmem:[%s1 + $0x60] sm:$0xff]
      %v209 = vld [vmem:[%s1 + $0x68] sm:$0xff]
      %v210 = vld [vmem:[%s1 + $0x70] sm:$0xff]
      %v211 = vld [vmem:[%s1 + $0x78] sm:$0xff]
      %s212 = scalar_lea.vmem %s176, 144
      %v213 = vld [vmem:[%s212] sm:$0xff]
      %v214 = vld [vmem:[%s212 + $0x10] sm:$0xff]
      %v215 = vld [vmem:[%s212 + $0x20] sm:$0xff]
      %v216 = vld [vmem:[%s212 + $0x30] sm:$0xff]
      %v217 = vld [vmem:[%s212 + $0x40] sm:$0xff]
      %v218 = vld [vmem:[%s212 + $0x50] sm:$0xff]
      %v219 = vld [vmem:[%s212 + $0x60] sm:$0xff]
      %v220 = vld [vmem:[%s212 + $0x70] sm:$0xff]
      %s221 = scalar_lea.vmem %s1, 128
      %v222 = vld [vmem:[%s221] sm:$0xff]
      %v223 = vld [vmem:[%s221 + $0x8] sm:$0xff]
      %v224 = vld [vmem:[%s221 + $0x10] sm:$0xff]
      %v225 = vld [vmem:[%s221 + $0x18] sm:$0xff]
      %v226 = vld [vmem:[%s221 + $0x20] sm:$0xff]
      %v227 = vld [vmem:[%s221 + $0x28] sm:$0xff]
      %v228 = vld [vmem:[%s221 + $0x30] sm:$0xff]
      %v229 = vld [vmem:[%s221 + $0x38] sm:$0xff]
      %v230 = vld [vmem:[%s221 + $0x40] sm:$0xff]
      %v231 = vld [vmem:[%s221 + $0x48] sm:$0xff]
      %v232 = vld [vmem:[%s221 + $0x50] sm:$0xff]
      %v233 = vld [vmem:[%s221 + $0x58] sm:$0xff]
      %v234 = vld [vmem:[%s221 + $0x60] sm:$0xff]
      %v235 = vld [vmem:[%s221 + $0x68] sm:$0xff]
      %v236 = vld [vmem:[%s221 + $0x70] sm:$0xff]
      %v237 = vld [vmem:[%s221 + $0x78] sm:$0xff]
      %238 = vmatprep.subr.mxu0 0.0
      %239 = vmatpush1.msra.mxu0 %v237
      %240 = vmatprep.subr.mxu0 0.0
      %241 = vmatpush1.msra.mxu0 %v236
      %242 = vmatprep.subr.mxu0 0.0
      %243 = vmatpush1.msra.mxu0 %v235
      %244 = vmatprep.subr.mxu0 0.0
      %245 = vmatpush1.msra.mxu0 %v234
      %246 = vmatprep.subr.mxu0 0.0
      %247 = vmatpush1.msra.mxu0 %v233
      %248 = vmatprep.subr.mxu0 0.0
      %249 = vmatpush1.msra.mxu0 %v232
      %250 = vmatprep.subr.mxu0 0.0
      %251 = vmatpush1.msra.mxu0 %v231
      %252 = vmatprep.subr.mxu0 0.0
      %253 = vmatpush1.msra.mxu0 %v230
      %254 = vmatprep.subr.mxu0 0.0
      %255 = vmatpush1.msra.mxu0 %v229
      %256 = vmatprep.subr.mxu0 0.0
      %257 = vmatpush1.msra.mxu0 %v228
      %258 = vmatprep.subr.mxu0 0.0
      %259 = vmatpush1.msra.mxu0 %v227
      %260 = vmatprep.subr.mxu0 0.0
      %261 = vmatpush1.msra.mxu0 %v226
      %262 = vmatprep.subr.mxu0 0.0
      %263 = vmatpush1.msra.mxu0 %v225
      %264 = vmatprep.subr.mxu0 0.0
      %265 = vmatpush1.msra.mxu0 %v224
      %266 = vmatprep.subr.mxu0 0.0
      %267 = vmatpush1.msra.mxu0 %v223
      %268 = vmatprep.subr.mxu0 0.0
      %269 = vmatpush1.msra.mxu0 %v222
      %270 = vmatprep.subr.mxu0 0.0
      %271 = vmatpush2.msra.mxu0 0.0
      %272 = vmatprep.subr.mxu0 0.0
      %273 = vmatpush2.msra.mxu0 0.0
      %274 = vmatprep.subr.mxu0 0.0
      %275 = vmatpush2.msra.mxu0 0.0
      %276 = vmatprep.subr.mxu0 0.0
      %277 = vmatpush2.msra.mxu0 0.0
      %278 = vmatprep.subr.mxu0 0.0
      %279 = vmatpush2.msra.mxu0 0.0
      %280 = vmatprep.subr.mxu0 0.0
      %281 = vmatpush2.msra.mxu0 0.0
      %282 = vmatprep.subr.mxu0 0.0
      %283 = vmatpush2.msra.mxu0 0.0
      %284 = vmatprep.subr.mxu0 0.0
      %285 = vmatpush2.msra.mxu0 0.0
      %286 = vmatprep.subr.mxu0 0.0
      %287 = vmatpush2.msra.mxu0 0.0
      %288 = vmatprep.subr.mxu0 0.0
      %289 = vmatpush2.msra.mxu0 0.0
      %290 = vmatprep.subr.mxu0 0.0
      %291 = vmatpush2.msra.mxu0 0.0
      %292 = vmatprep.subr.mxu0 0.0
      %293 = vmatpush2.msra.mxu0 0.0
      %294 = vmatprep.subr.mxu0 0.0
      %295 = vmatpush2.msra.mxu0 0.0
      %296 = vmatprep.subr.mxu0 0.0
      %297 = vmatpush2.msra.mxu0 0.0
      %298 = vmatprep.subr.mxu0 0.0
      %299 = vmatpush2.msra.mxu0 0.0
      %300 = vmatprep.subr.mxu0 0.0
      %301 = vmatpush2.msra.mxu0 0.0
      %302 = vmatprep.mubr.f32.mxu0 0.0
      %303 = vmatmul.mubr.f32.gmra.mxu0 %v213
      %v304 = vpop.f32.mrf.mxu0
      %v305 = vadd.f32 0.0, %v304
      %v306 = vpop.f32.mrf.mxu0
      %307 = vmatprep.mubr.f32.mxu0 0.0
      %308 = vmatmul.mubr.f32.gmra.mxu0 %v214
      %v309 = vpop.f32.mrf.mxu0
      %v310 = vadd.f32 0.0, %v309
      %v311 = vpop.f32.mrf.mxu0
      %312 = vmatprep.mubr.f32.mxu0 0.0
      %313 = vmatmul.mubr.f32.gmra.mxu0 %v215
      %v314 = vpop.f32.mrf.mxu0
      %v315 = vadd.f32 0.0, %v314
      %v316 = vpop.f32.mrf.mxu0
      %317 = vmatprep.mubr.f32.mxu0 0.0
      %318 = vmatmul.mubr.f32.gmra.mxu0 %v216
      %v319 = vpop.f32.mrf.mxu0
      %v320 = vadd.f32 0.0, %v319
      %v321 = vpop.f32.mrf.mxu0
      %322 = vmatprep.mubr.f32.mxu0 0.0
      %323 = vmatmul.mubr.f32.gmra.mxu0 %v217
      %v324 = vpop.f32.mrf.mxu0
      %v325 = vadd.f32 0.0, %v324
      %v326 = vpop.f32.mrf.mxu0
      %327 = vmatprep.mubr.f32.mxu0 0.0
      %328 = vmatmul.mubr.f32.gmra.mxu0 %v218
      %v329 = vpop.f32.mrf.mxu0
      %v330 = vadd.f32 0.0, %v329
      %v331 = vpop.f32.mrf.mxu0
      %332 = vmatprep.mubr.f32.mxu0 0.0
      %333 = vmatmul.mubr.f32.gmra.mxu0 %v219
      %v334 = vpop.f32.mrf.mxu0
      %v335 = vadd.f32 0.0, %v334
      %v336 = vpop.f32.mrf.mxu0
      %337 = vmatprep.mubr.f32.mxu0 0.0
      %338 = vmatmul.mubr.f32.gmra.mxu0 %v220
      %v339 = vpop.f32.mrf.mxu0
      %v340 = vadd.f32 0.0, %v339
      %v341 = vpop.f32.mrf.mxu0
      %342 = vdwg.mxu0
      %343 = vmatprep.subr.mxu0 0.0
      %344 = vmatpush1.msra.mxu0 %v211
      %345 = vmatprep.subr.mxu0 0.0
      %346 = vmatpush1.msra.mxu0 %v210
      %347 = vmatprep.subr.mxu0 0.0
      %348 = vmatpush1.msra.mxu0 %v209
      %349 = vmatprep.subr.mxu0 0.0
      %350 = vmatpush1.msra.mxu0 %v208
      %351 = vmatprep.subr.mxu0 0.0
      %352 = vmatpush1.msra.mxu0 %v207
      %353 = vmatprep.subr.mxu0 0.0
      %354 = vmatpush1.msra.mxu0 %v206
      %355 = vmatprep.subr.mxu0 0.0
      %356 = vmatpush1.msra.mxu0 %v205
      %357 = vmatprep.subr.mxu0 0.0
      %358 = vmatpush1.msra.mxu0 %v204
      %359 = vmatprep.subr.mxu0 0.0
      %360 = vmatpush1.msra.mxu0 %v203
      %361 = vmatprep.subr.mxu0 0.0
      %362 = vmatpush1.msra.mxu0 %v202
      %363 = vmatprep.subr.mxu0 0.0
      %364 = vmatpush1.msra.mxu0 %v201
      %365 = vmatprep.subr.mxu0 0.0
      %366 = vmatpush1.msra.mxu0 %v200
      %367 = vmatprep.subr.mxu0 0.0
      %368 = vmatpush1.msra.mxu0 %v199
      %369 = vmatprep.subr.mxu0 0.0
      %370 = vmatpush1.msra.mxu0 %v198
      %371 = vmatprep.subr.mxu0 0.0
      %372 = vmatpush1.msra.mxu0 %v197
      %373 = vmatprep.subr.mxu0 0.0
      %374 = vmatpush1.msra.mxu0 %v196
      %375 = vmatprep.subr.mxu0 0.0
      %376 = vmatpush2.msra.mxu0 0.0
      %377 = vmatprep.subr.mxu0 0.0
      %378 = vmatpush2.msra.mxu0 0.0
      %379 = vmatprep.subr.mxu0 0.0
      %380 = vmatpush2.msra.mxu0 0.0
      %381 = vmatprep.subr.mxu0 0.0
      %382 = vmatpush2.msra.mxu0 0.0
      %383 = vmatprep.subr.mxu0 0.0
      %384 = vmatpush2.msra.mxu0 0.0
      %385 = vmatprep.subr.mxu0 0.0
      %386 = vmatpush2.msra.mxu0 0.0
      %387 = vmatprep.subr.mxu0 0.0
      %388 = vmatpush2.msra.mxu0 0.0
      %389 = vmatprep.subr.mxu0 0.0
      %390 = vmatpush2.msra.mxu0 0.0
      %391 = vmatprep.subr.mxu0 0.0
      %392 = vmatpush2.msra.mxu0 0.0
      %393 = vmatprep.subr.mxu0 0.0
      %394 = vmatpush2.msra.mxu0 0.0
      %395 = vmatprep.subr.mxu0 0.0
      %396 = vmatpush2.msra.mxu0 0.0
      %397 = vmatprep.subr.mxu0 0.0
      %398 = vmatpush2.msra.mxu0 0.0
      %399 = vmatprep.subr.mxu0 0.0
      %400 = vmatpush2.msra.mxu0 0.0
      %401 = vmatprep.subr.mxu0 0.0
      %402 = vmatpush2.msra.mxu0 0.0
      %403 = vmatprep.subr.mxu0 0.0
      %404 = vmatpush2.msra.mxu0 0.0
      %405 = vmatprep.subr.mxu0 0.0
      %406 = vmatpush2.msra.mxu0 0.0
      %407 = vmatprep.mubr.f32.mxu0 0.0
      %408 = vmatmul.mubr.f32.gmra.mxu0 %v188
      %v409 = vpop.f32.mrf.mxu0
      %v410 = vadd.f32 %v305, %v409
      %v411 = vpop.f32.mrf.mxu0
      %412 = vmatprep.mubr.f32.mxu0 0.0
      %413 = vmatmul.mubr.f32.gmra.mxu0 %v189
      %v414 = vpop.f32.mrf.mxu0
      %v415 = vadd.f32 %v310, %v414
      %v416 = vpop.f32.mrf.mxu0
      %417 = vmatprep.mubr.f32.mxu0 0.0
      %418 = vmatmul.mubr.f32.gmra.mxu0 %v190
      %v419 = vpop.f32.mrf.mxu0
      %v420 = vadd.f32 %v315, %v419
      %v421 = vpop.f32.mrf.mxu0
      %422 = vmatprep.mubr.f32.mxu0 0.0
      %423 = vmatmul.mubr.f32.gmra.mxu0 %v191
      %v424 = vpop.f32.mrf.mxu0
      %v425 = vadd.f32 %v320, %v424
      %v426 = vpop.f32.mrf.mxu0
      %427 = vmatprep.mubr.f32.mxu0 0.0
      %428 = vmatmul.mubr.f32.gmra.mxu0 %v192
      %v429 = vpop.f32.mrf.mxu0
      %v430 = vadd.f32 %v325, %v429
      %v431 = vpop.f32.mrf.mxu0
      %432 = vmatprep.mubr.f32.mxu0 0.0
      %433 = vmatmul.mubr.f32.gmra.mxu0 %v193
      %v434 = vpop.f32.mrf.mxu0
      %v435 = vadd.f32 %v330, %v434
      %v436 = vpop.f32.mrf.mxu0
      %437 = vmatprep.mubr.f32.mxu0 0.0
      %438 = vmatmul.mubr.f32.gmra.mxu0 %v194
      %v439 = vpop.f32.mrf.mxu0
      %v440 = vadd.f32 %v335, %v439
      %v441 = vpop.f32.mrf.mxu0
      %442 = vmatprep.mubr.f32.mxu0 0.0
      %443 = vmatmul.mubr.f32.gmra.mxu0 %v195
      %v444 = vpop.f32.mrf.mxu0
      %v445 = vadd.f32 %v340, %v444
      %v446 = vpop.f32.mrf.mxu0
      %447 = vdwg.mxu0
      %v448 = vld [vmem:[%s176 + $0x1] sm:$0xff]
      %v449 = vld [vmem:[%s176 + $0x11] sm:$0xff]
      %v450 = vld [vmem:[%s176 + $0x21] sm:$0xff]
      %v451 = vld [vmem:[%s176 + $0x31] sm:$0xff]
      %v452 = vld [vmem:[%s176 + $0x41] sm:$0xff]
      %v453 = vld [vmem:[%s176 + $0x51] sm:$0xff]
      %v454 = vld [vmem:[%s176 + $0x61] sm:$0xff]
      %v455 = vld [vmem:[%s176 + $0x71] sm:$0xff]
      %s456 = scalar_lea.vmem %s1, 256
      %v457 = vld [vmem:[%s456] sm:$0xff]
      %v458 = vld [vmem:[%s456 + $0x8] sm:$0xff]
      %v459 = vld [vmem:[%s456 + $0x10] sm:$0xff]
      %v460 = vld [vmem:[%s456 + $0x18] sm:$0xff]
      %v461 = vld [vmem:[%s456 + $0x20] sm:$0xff]
      %v462 = vld [vmem:[%s456 + $0x28] sm:$0xff]
      %v463 = vld [vmem:[%s456 + $0x30] sm:$0xff]
      %v464 = vld [vmem:[%s456 + $0x38] sm:$0xff]
      %v465 = vld [vmem:[%s456 + $0x40] sm:$0xff]
      %v466 = vld [vmem:[%s456 + $0x48] sm:$0xff]
      %v467 = vld [vmem:[%s456 + $0x50] sm:$0xff]
      %v468 = vld [vmem:[%s456 + $0x58] sm:$0xff]
      %v469 = vld [vmem:[%s456 + $0x60] sm:$0xff]
      %v470 = vld [vmem:[%s456 + $0x68] sm:$0xff]
      %v471 = vld [vmem:[%s456 + $0x70] sm:$0xff]
      %v472 = vld [vmem:[%s456 + $0x78] sm:$0xff]
      %473 = vmatprep.subr.mxu0 0.0
      %474 = vmatpush1.msra.mxu0 %v472
      %475 = vmatprep.subr.mxu0 0.0
      %476 = vmatpush1.msra.mxu0 %v471
      %477 = vmatprep.subr.mxu0 0.0
      %478 = vmatpush1.msra.mxu0 %v470
      %479 = vmatprep.subr.mxu0 0.0
      %480 = vmatpush1.msra.mxu0 %v469
      %481 = vmatprep.subr.mxu0 0.0
      %482 = vmatpush1.msra.mxu0 %v468
      %483 = vmatprep.subr.mxu0 0.0
      %484 = vmatpush1.msra.mxu0 %v467
      %485 = vmatprep.subr.mxu0 0.0
      %486 = vmatpush1.msra.mxu0 %v466
      %487 = vmatprep.subr.mxu0 0.0
      %488 = vmatpush1.msra.mxu0 %v465
      %489 = vmatprep.subr.mxu0 0.0
      %490 = vmatpush1.msra.mxu0 %v464
      %491 = vmatprep.subr.mxu0 0.0
      %492 = vmatpush1.msra.mxu0 %v463
      %493 = vmatprep.subr.mxu0 0.0
      %494 = vmatpush1.msra.mxu0 %v462
      %495 = vmatprep.subr.mxu0 0.0
      %496 = vmatpush1.msra.mxu0 %v461
      %497 = vmatprep.subr.mxu0 0.0
      %498 = vmatpush1.msra.mxu0 %v460
      %499 = vmatprep.subr.mxu0 0.0
      %500 = vmatpush1.msra.mxu0 %v459
      %501 = vmatprep.subr.mxu0 0.0
      %502 = vmatpush1.msra.mxu0 %v458
      %503 = vmatprep.subr.mxu0 0.0
      %504 = vmatpush1.msra.mxu0 %v457
      %505 = vmatprep.subr.mxu0 0.0
      %506 = vmatpush2.msra.mxu0 0.0
      %507 = vmatprep.subr.mxu0 0.0
      %508 = vmatpush2.msra.mxu0 0.0
      %509 = vmatprep.subr.mxu0 0.0
      %510 = vmatpush2.msra.mxu0 0.0
      %511 = vmatprep.subr.mxu0 0.0
      %512 = vmatpush2.msra.mxu0 0.0
      %513 = vmatprep.subr.mxu0 0.0
      %514 = vmatpush2.msra.mxu0 0.0
      %515 = vmatprep.subr.mxu0 0.0
      %516 = vmatpush2.msra.mxu0 0.0
      %517 = vmatprep.subr.mxu0 0.0
      %518 = vmatpush2.msra.mxu0 0.0
      %519 = vmatprep.subr.mxu0 0.0
      %520 = vmatpush2.msra.mxu0 0.0
      %521 = vmatprep.subr.mxu0 0.0
      %522 = vmatpush2.msra.mxu0 0.0
      %523 = vmatprep.subr.mxu0 0.0
      %524 = vmatpush2.msra.mxu0 0.0
      %525 = vmatprep.subr.mxu0 0.0
      %526 = vmatpush2.msra.mxu0 0.0
      %527 = vmatprep.subr.mxu0 0.0
      %528 = vmatpush2.msra.mxu0 0.0
      %529 = vmatprep.subr.mxu0 0.0
      %530 = vmatpush2.msra.mxu0 0.0
      %531 = vmatprep.subr.mxu0 0.0
      %532 = vmatpush2.msra.mxu0 0.0
      %533 = vmatprep.subr.mxu0 0.0
      %534 = vmatpush2.msra.mxu0 0.0
      %535 = vmatprep.subr.mxu0 0.0
      %536 = vmatpush2.msra.mxu0 0.0
      %537 = vmatprep.mubr.f32.mxu0 0.0
      %538 = vmatmul.mubr.f32.gmra.mxu0 %v448
      %v539 = vpop.f32.mrf.mxu0
      %v540 = vadd.f32 0.0, %v539
      %v541 = vpop.f32.mrf.mxu0
      %542 = vmatprep.mubr.f32.mxu0 0.0
      %543 = vmatmul.mubr.f32.gmra.mxu0 %v449
      %v544 = vpop.f32.mrf.mxu0
      %v545 = vadd.f32 0.0, %v544
      %v546 = vpop.f32.mrf.mxu0
      %547 = vmatprep.mubr.f32.mxu0 0.0
      %548 = vmatmul.mubr.f32.gmra.mxu0 %v450
      %v549 = vpop.f32.mrf.mxu0
      %v550 = vadd.f32 0.0, %v549
      %v551 = vpop.f32.mrf.mxu0
      %552 = vmatprep.mubr.f32.mxu0 0.0
      %553 = vmatmul.mubr.f32.gmra.mxu0 %v451
      %v554 = vpop.f32.mrf.mxu0
      %v555 = vadd.f32 0.0, %v554
      %v556 = vpop.f32.mrf.mxu0
      %557 = vmatprep.mubr.f32.mxu0 0.0
      %558 = vmatmul.mubr.f32.gmra.mxu0 %v452
      %v559 = vpop.f32.mrf.mxu0
      %v560 = vadd.f32 0.0, %v559
      %v561 = vpop.f32.mrf.mxu0
      %562 = vmatprep.mubr.f32.mxu0 0.0
      %563 = vmatmul.mubr.f32.gmra.mxu0 %v453
      %v564 = vpop.f32.mrf.mxu0
      %v565 = vadd.f32 0.0, %v564
      %v566 = vpop.f32.mrf.mxu0
      %567 = vmatprep.mubr.f32.mxu0 0.0
      %568 = vmatmul.mubr.f32.gmra.mxu0 %v454
      %v569 = vpop.f32.mrf.mxu0
      %v570 = vadd.f32 0.0, %v569
      %v571 = vpop.f32.mrf.mxu0
      %572 = vmatprep.mubr.f32.mxu0 0.0
      %573 = vmatmul.mubr.f32.gmra.mxu0 %v455
      %v574 = vpop.f32.mrf.mxu0
      %v575 = vadd.f32 0.0, %v574
      %v576 = vpop.f32.mrf.mxu0
      %577 = vdwg.mxu0
      %v578 = vadd.f32 %v410, %v540
      %v579 = vadd.f32 %v415, %v545
      %v580 = vadd.f32 %v420, %v550
      %v581 = vadd.f32 %v425, %v555
      %v582 = vadd.f32 %v430, %v560
      %v583 = vadd.f32 %v435, %v565
      %v584 = vadd.f32 %v440, %v570
      %v585 = vadd.f32 %v445, %v575
      %s586 = scalar_lea.vmem %s176, 288
      %v587 = vld [vmem:[%s586] sm:$0xff]
      %v588 = vld [vmem:[%s586 + $0x10] sm:$0xff]
      %v589 = vld [vmem:[%s586 + $0x20] sm:$0xff]
      %v590 = vld [vmem:[%s586 + $0x30] sm:$0xff]
      %v591 = vld [vmem:[%s586 + $0x40] sm:$0xff]
      %v592 = vld [vmem:[%s586 + $0x50] sm:$0xff]
      %v593 = vld [vmem:[%s586 + $0x60] sm:$0xff]
      %v594 = vld [vmem:[%s586 + $0x70] sm:$0xff]
      %s595 = scalar_lea.vmem %s1, 384
      %v596 = vld [vmem:[%s595] sm:$0xff]
      %v597 = vld [vmem:[%s595 + $0x8] sm:$0xff]
      %v598 = vld [vmem:[%s595 + $0x10] sm:$0xff]
      %v599 = vld [vmem:[%s595 + $0x18] sm:$0xff]
      %v600 = vld [vmem:[%s595 + $0x20] sm:$0xff]
      %v601 = vld [vmem:[%s595 + $0x28] sm:$0xff]
      %v602 = vld [vmem:[%s595 + $0x30] sm:$0xff]
      %v603 = vld [vmem:[%s595 + $0x38] sm:$0xff]
      %v604 = vld [vmem:[%s595 + $0x40] sm:$0xff]
      %v605 = vld [vmem:[%s595 + $0x48] sm:$0xff]
      %v606 = vld [vmem:[%s595 + $0x50] sm:$0xff]
      %v607 = vld [vmem:[%s595 + $0x58] sm:$0xff]
      %v608 = vld [vmem:[%s595 + $0x60] sm:$0xff]
      %v609 = vld [vmem:[%s595 + $0x68] sm:$0xff]
      %v610 = vld [vmem:[%s595 + $0x70] sm:$0xff]
      %v611 = vld [vmem:[%s595 + $0x78] sm:$0xff]
      %612 = vmatprep.subr.mxu0 0.0
      %613 = vmatpush1.msra.mxu0 %v611
      %614 = vmatprep.subr.mxu0 0.0
      %615 = vmatpush1.msra.mxu0 %v610
      %616 = vmatprep.subr.mxu0 0.0
      %617 = vmatpush1.msra.mxu0 %v609
      %618 = vmatprep.subr.mxu0 0.0
      %619 = vmatpush1.msra.mxu0 %v608
      %620 = vmatprep.subr.mxu0 0.0
      %621 = vmatpush1.msra.mxu0 %v607
      %622 = vmatprep.subr.mxu0 0.0
      %623 = vmatpush1.msra.mxu0 %v606
      %624 = vmatprep.subr.mxu0 0.0
      %625 = vmatpush1.msra.mxu0 %v605
      %626 = vmatprep.subr.mxu0 0.0
      %627 = vmatpush1.msra.mxu0 %v604
      %628 = vmatprep.subr.mxu0 0.0
      %629 = vmatpush1.msra.mxu0 %v603
      %630 = vmatprep.subr.mxu0 0.0
      %631 = vmatpush1.msra.mxu0 %v602
      %632 = vmatprep.subr.mxu0 0.0
      %633 = vmatpush1.msra.mxu0 %v601
      %634 = vmatprep.subr.mxu0 0.0
      %635 = vmatpush1.msra.mxu0 %v600
      %636 = vmatprep.subr.mxu0 0.0
      %637 = vmatpush1.msra.mxu0 %v599
      %638 = vmatprep.subr.mxu0 0.0
      %639 = vmatpush1.msra.mxu0 %v598
      %640 = vmatprep.subr.mxu0 0.0
      %641 = vmatpush1.msra.mxu0 %v597
      %642 = vmatprep.subr.mxu0 0.0
      %643 = vmatpush1.msra.mxu0 %v596
      %644 = vmatprep.subr.mxu0 0.0
      %645 = vmatpush2.msra.mxu0 0.0
      %646 = vmatprep.subr.mxu0 0.0
      %647 = vmatpush2.msra.mxu0 0.0
      %648 = vmatprep.subr.mxu0 0.0
      %649 = vmatpush2.msra.mxu0 0.0
      %650 = vmatprep.subr.mxu0 0.0
      %651 = vmatpush2.msra.mxu0 0.0
      %652 = vmatprep.subr.mxu0 0.0
      %653 = vmatpush2.msra.mxu0 0.0
      %654 = vmatprep.subr.mxu0 0.0
      %655 = vmatpush2.msra.mxu0 0.0
      %656 = vmatprep.subr.mxu0 0.0
      %657 = vmatpush2.msra.mxu0 0.0
      %658 = vmatprep.subr.mxu0 0.0
      %659 = vmatpush2.msra.mxu0 0.0
      %660 = vmatprep.subr.mxu0 0.0
      %661 = vmatpush2.msra.mxu0 0.0
      %662 = vmatprep.subr.mxu0 0.0
      %663 = vmatpush2.msra.mxu0 0.0
      %664 = vmatprep.subr.mxu0 0.0
      %665 = vmatpush2.msra.mxu0 0.0
      %666 = vmatprep.subr.mxu0 0.0
      %667 = vmatpush2.msra.mxu0 0.0
      %668 = vmatprep.subr.mxu0 0.0
      %669 = vmatpush2.msra.mxu0 0.0
      %670 = vmatprep.subr.mxu0 0.0
      %671 = vmatpush2.msra.mxu0 0.0
      %672 = vmatprep.subr.mxu0 0.0
      %673 = vmatpush2.msra.mxu0 0.0
      %674 = vmatprep.subr.mxu0 0.0
      %675 = vmatpush2.msra.mxu0 0.0
      %676 = vmatprep.mubr.f32.mxu0 0.0
      %677 = vmatmul.mubr.f32.gmra.mxu0 %v587
      %v678 = vpop.f32.mrf.mxu0
      %v679 = vadd.f32 0.0, %v678
      %v680 = vpop.f32.mrf.mxu0
      %681 = vmatprep.mubr.f32.mxu0 0.0
      %682 = vmatmul.mubr.f32.gmra.mxu0 %v588
      %v683 = vpop.f32.mrf.mxu0
      %v684 = vadd.f32 0.0, %v683
      %v685 = vpop.f32.mrf.mxu0
      %686 = vmatprep.mubr.f32.mxu0 0.0
      %687 = vmatmul.mubr.f32.gmra.mxu0 %v589
      %v688 = vpop.f32.mrf.mxu0
      %v689 = vadd.f32 0.0, %v688
      %v690 = vpop.f32.mrf.mxu0
      %691 = vmatprep.mubr.f32.mxu0 0.0
      %692 = vmatmul.mubr.f32.gmra.mxu0 %v590
      %v693 = vpop.f32.mrf.mxu0
      %v694 = vadd.f32 0.0, %v693
      %v695 = vpop.f32.mrf.mxu0
      %696 = vmatprep.mubr.f32.mxu0 0.0
      %697 = vmatmul.mubr.f32.gmra.mxu0 %v591
      %v698 = vpop.f32.mrf.mxu0
      %v699 = vadd.f32 0.0, %v698
      %v700 = vpop.f32.mrf.mxu0
      %701 = vmatprep.mubr.f32.mxu0 0.0
      %702 = vmatmul.mubr.f32.gmra.mxu0 %v592
      %v703 = vpop.f32.mrf.mxu0
      %v704 = vadd.f32 0.0, %v703
      %v705 = vpop.f32.mrf.mxu0
      %706 = vmatprep.mubr.f32.mxu0 0.0
      %707 = vmatmul.mubr.f32.gmra.mxu0 %v593
      %v708 = vpop.f32.mrf.mxu0
      %v709 = vadd.f32 0.0, %v708
      %v710 = vpop.f32.mrf.mxu0
      %711 = vmatprep.mubr.f32.mxu0 0.0
      %712 = vmatmul.mubr.f32.gmra.mxu0 %v594
      %v713 = vpop.f32.mrf.mxu0
      %v714 = vadd.f32 0.0, %v713
      %v715 = vpop.f32.mrf.mxu0
      %716 = vdwg.mxu0
      %v717 = vadd.f32 %v578, %v679
      %v718 = vadd.f32 %v579, %v684
      %v719 = vadd.f32 %v580, %v689
      %v720 = vadd.f32 %v581, %v694
      %v721 = vadd.f32 %v582, %v699
      %v722 = vadd.f32 %v583, %v704
      %v723 = vadd.f32 %v584, %v709
      %v724 = vadd.f32 %v585, %v714
      %s725 = scalar_lea.vmem %s176, 432
      %v726 = vld [vmem:[%s725] sm:$0xff]
      %v727 = vld [vmem:[%s725 + $0x10] sm:$0xff]
      %v728 = vld [vmem:[%s725 + $0x20] sm:$0xff]
      %v729 = vld [vmem:[%s725 + $0x30] sm:$0xff]
      %v730 = vld [vmem:[%s725 + $0x40] sm:$0xff]
      %v731 = vld [vmem:[%s725 + $0x50] sm:$0xff]
      %v732 = vld [vmem:[%s725 + $0x60] sm:$0xff]
      %v733 = vld [vmem:[%s725 + $0x70] sm:$0xff]
      %s734 = scalar_lea.vmem %s1, 512
      %v735 = vld [vmem:[%s734] sm:$0xff]
      %v736 = vld [vmem:[%s734 + $0x8] sm:$0xff]
      %v737 = vld [vmem:[%s734 + $0x10] sm:$0xff]
      %v738 = vld [vmem:[%s734 + $0x18] sm:$0xff]
      %v739 = vld [vmem:[%s734 + $0x20] sm:$0xff]
      %v740 = vld [vmem:[%s734 + $0x28] sm:$0xff]
      %v741 = vld [vmem:[%s734 + $0x30] sm:$0xff]
      %v742 = vld [vmem:[%s734 + $0x38] sm:$0xff]
      %v743 = vld [vmem:[%s734 + $0x40] sm:$0xff]
      %v744 = vld [vmem:[%s734 + $0x48] sm:$0xff]
      %v745 = vld [vmem:[%s734 + $0x50] sm:$0xff]
      %v746 = vld [vmem:[%s734 + $0x58] sm:$0xff]
      %v747 = vld [vmem:[%s734 + $0x60] sm:$0xff]
      %v748 = vld [vmem:[%s734 + $0x68] sm:$0xff]
      %v749 = vld [vmem:[%s734 + $0x70] sm:$0xff]
      %v750 = vld [vmem:[%s734 + $0x78] sm:$0xff]
      %751 = vmatprep.subr.mxu0 0.0
      %752 = vmatpush1.msra.mxu0 %v750
      %753 = vmatprep.subr.mxu0 0.0
      %754 = vmatpush1.msra.mxu0 %v749
      %755 = vmatprep.subr.mxu0 0.0
      %756 = vmatpush1.msra.mxu0 %v748
      %757 = vmatprep.subr.mxu0 0.0
      %758 = vmatpush1.msra.mxu0 %v747
      %759 = vmatprep.subr.mxu0 0.0
      %760 = vmatpush1.msra.mxu0 %v746
      %761 = vmatprep.subr.mxu0 0.0
      %762 = vmatpush1.msra.mxu0 %v745
      %763 = vmatprep.subr.mxu0 0.0
      %764 = vmatpush1.msra.mxu0 %v744
      %765 = vmatprep.subr.mxu0 0.0
      %766 = vmatpush1.msra.mxu0 %v743
      %767 = vmatprep.subr.mxu0 0.0
      %768 = vmatpush1.msra.mxu0 %v742
      %769 = vmatprep.subr.mxu0 0.0
      %770 = vmatpush1.msra.mxu0 %v741
      %771 = vmatprep.subr.mxu0 0.0
      %772 = vmatpush1.msra.mxu0 %v740
      %773 = vmatprep.subr.mxu0 0.0
      %774 = vmatpush1.msra.mxu0 %v739
      %775 = vmatprep.subr.mxu0 0.0
      %776 = vmatpush1.msra.mxu0 %v738
      %777 = vmatprep.subr.mxu0 0.0
      %778 = vmatpush1.msra.mxu0 %v737
      %779 = vmatprep.subr.mxu0 0.0
      %780 = vmatpush1.msra.mxu0 %v736
      %781 = vmatprep.subr.mxu0 0.0
      %782 = vmatpush1.msra.mxu0 %v735
      %783 = vmatprep.subr.mxu0 0.0
      %784 = vmatpush2.msra.mxu0 0.0
      %785 = vmatprep.subr.mxu0 0.0
      %786 = vmatpush2.msra.mxu0 0.0
      %787 = vmatprep.subr.mxu0 0.0
      %788 = vmatpush2.msra.mxu0 0.0
      %789 = vmatprep.subr.mxu0 0.0
      %790 = vmatpush2.msra.mxu0 0.0
      %791 = vmatprep.subr.mxu0 0.0
      %792 = vmatpush2.msra.mxu0 0.0
      %793 = vmatprep.subr.mxu0 0.0
      %794 = vmatpush2.msra.mxu0 0.0
      %795 = vmatprep.subr.mxu0 0.0
      %796 = vmatpush2.msra.mxu0 0.0
      %797 = vmatprep.subr.mxu0 0.0
      %798 = vmatpush2.msra.mxu0 0.0
      %799 = vmatprep.subr.mxu0 0.0
      %800 = vmatpush2.msra.mxu0 0.0
      %801 = vmatprep.subr.mxu0 0.0
      %802 = vmatpush2.msra.mxu0 0.0
      %803 = vmatprep.subr.mxu0 0.0
      %804 = vmatpush2.msra.mxu0 0.0
      %805 = vmatprep.subr.mxu0 0.0
      %806 = vmatpush2.msra.mxu0 0.0
      %807 = vmatprep.subr.mxu0 0.0
      %808 = vmatpush2.msra.mxu0 0.0
      %809 = vmatprep.subr.mxu0 0.0
      %810 = vmatpush2.msra.mxu0 0.0
      %811 = vmatprep.subr.mxu0 0.0
      %812 = vmatpush2.msra.mxu0 0.0
      %813 = vmatprep.subr.mxu0 0.0
      %814 = vmatpush2.msra.mxu0 0.0
      %815 = vmatprep.mubr.f32.mxu0 0.0
      %816 = vmatmul.mubr.f32.gmra.mxu0 %v726
      %v817 = vpop.f32.mrf.mxu0
      %v818 = vadd.f32 0.0, %v817
      %v819 = vpop.f32.mrf.mxu0
      %820 = vmatprep.mubr.f32.mxu0 0.0
      %821 = vmatmul.mubr.f32.gmra.mxu0 %v727
      %v822 = vpop.f32.mrf.mxu0
      %v823 = vadd.f32 0.0, %v822
      %v824 = vpop.f32.mrf.mxu0
      %825 = vmatprep.mubr.f32.mxu0 0.0
      %826 = vmatmul.mubr.f32.gmra.mxu0 %v728
      %v827 = vpop.f32.mrf.mxu0
      %v828 = vadd.f32 0.0, %v827
      %v829 = vpop.f32.mrf.mxu0
      %830 = vmatprep.mubr.f32.mxu0 0.0
      %831 = vmatmul.mubr.f32.gmra.mxu0 %v729
      %v832 = vpop.f32.mrf.mxu0
      %v833 = vadd.f32 0.0, %v832
      %v834 = vpop.f32.mrf.mxu0
      %835 = vmatprep.mubr.f32.mxu0 0.0
      %836 = vmatmul.mubr.f32.gmra.mxu0 %v730
      %v837 = vpop.f32.mrf.mxu0
      %v838 = vadd.f32 0.0, %v837
      %v839 = vpop.f32.mrf.mxu0
      %840 = vmatprep.mubr.f32.mxu0 0.0
      %841 = vmatmul.mubr.f32.gmra.mxu0 %v731
      %v842 = vpop.f32.mrf.mxu0
      %v843 = vadd.f32 0.0, %v842
      %v844 = vpop.f32.mrf.mxu0
      %845 = vmatprep.mubr.f32.mxu0 0.0
      %846 = vmatmul.mubr.f32.gmra.mxu0 %v732
      %v847 = vpop.f32.mrf.mxu0
      %v848 = vadd.f32 0.0, %v847
      %v849 = vpop.f32.mrf.mxu0
      %850 = vmatprep.mubr.f32.mxu0 0.0
      %851 = vmatmul.mubr.f32.gmra.mxu0 %v733
      %v852 = vpop.f32.mrf.mxu0
      %v853 = vadd.f32 0.0, %v852
      %v854 = vpop.f32.mrf.mxu0
      %855 = vdwg.mxu0
      %v856 = vadd.f32 %v717, %v818
      %v857 = vadd.f32 %v718, %v823
      %v858 = vadd.f32 %v719, %v828
      %v859 = vadd.f32 %v720, %v833
      %v860 = vadd.f32 %v721, %v838
      %v861 = vadd.f32 %v722, %v843
      %v862 = vadd.f32 %v723, %v848
      %v863 = vadd.f32 %v724, %v853
      %v864 = vld [vmem:[%s586 + $0x1] sm:$0xff]
      %v865 = vld [vmem:[%s586 + $0x11] sm:$0xff]
      %v866 = vld [vmem:[%s586 + $0x21] sm:$0xff]
      %v867 = vld [vmem:[%s586 + $0x31] sm:$0xff]
      %v868 = vld [vmem:[%s586 + $0x41] sm:$0xff]
      %v869 = vld [vmem:[%s586 + $0x51] sm:$0xff]
      %v870 = vld [vmem:[%s586 + $0x61] sm:$0xff]
      %v871 = vld [vmem:[%s586 + $0x71] sm:$0xff]
      %s872 = scalar_lea.vmem %s1, 640
      %v873 = vld [vmem:[%s872] sm:$0xff]
      %v874 = vld [vmem:[%s872 + $0x8] sm:$0xff]
      %v875 = vld [vmem:[%s872 + $0x10] sm:$0xff]
      %v876 = vld [vmem:[%s872 + $0x18] sm:$0xff]
      %v877 = vld [vmem:[%s872 + $0x20] sm:$0xff]
      %v878 = vld [vmem:[%s872 + $0x28] sm:$0xff]
      %v879 = vld [vmem:[%s872 + $0x30] sm:$0xff]
      %v880 = vld [vmem:[%s872 + $0x38] sm:$0xff]
      %v881 = vld [vmem:[%s872 + $0x40] sm:$0xff]
      %v882 = vld [vmem:[%s872 + $0x48] sm:$0xff]
      %v883 = vld [vmem:[%s872 + $0x50] sm:$0xff]
      %v884 = vld [vmem:[%s872 + $0x58] sm:$0xff]
      %v885 = vld [vmem:[%s872 + $0x60] sm:$0xff]
      %v886 = vld [vmem:[%s872 + $0x68] sm:$0xff]
      %v887 = vld [vmem:[%s872 + $0x70] sm:$0xff]
      %v888 = vld [vmem:[%s872 + $0x78] sm:$0xff]
      %889 = vmatprep.subr.mxu0 0.0
      %890 = vmatpush1.msra.mxu0 %v888
      %891 = vmatprep.subr.mxu0 0.0
      %892 = vmatpush1.msra.mxu0 %v887
      %893 = vmatprep.subr.mxu0 0.0
      %894 = vmatpush1.msra.mxu0 %v886
      %895 = vmatprep.subr.mxu0 0.0
      %896 = vmatpush1.msra.mxu0 %v885
      %897 = vmatprep.subr.mxu0 0.0
      %898 = vmatpush1.msra.mxu0 %v884
      %899 = vmatprep.subr.mxu0 0.0
      %900 = vmatpush1.msra.mxu0 %v883
      %901 = vmatprep.subr.mxu0 0.0
      %902 = vmatpush1.msra.mxu0 %v882
      %903 = vmatprep.subr.mxu0 0.0
      %904 = vmatpush1.msra.mxu0 %v881
      %905 = vmatprep.subr.mxu0 0.0
      %906 = vmatpush1.msra.mxu0 %v880
      %907 = vmatprep.subr.mxu0 0.0
      %908 = vmatpush1.msra.mxu0 %v879
      %909 = vmatprep.subr.mxu0 0.0
      %910 = vmatpush1.msra.mxu0 %v878
      %911 = vmatprep.subr.mxu0 0.0
      %912 = vmatpush1.msra.mxu0 %v877
      %913 = vmatprep.subr.mxu0 0.0
      %914 = vmatpush1.msra.mxu0 %v876
      %915 = vmatprep.subr.mxu0 0.0
      %916 = vmatpush1.msra.mxu0 %v875
      %917 = vmatprep.subr.mxu0 0.0
      %918 = vmatpush1.msra.mxu0 %v874
      %919 = vmatprep.subr.mxu0 0.0
      %920 = vmatpush1.msra.mxu0 %v873
      %921 = vmatprep.subr.mxu0 0.0
      %922 = vmatpush2.msra.mxu0 0.0
      %923 = vmatprep.subr.mxu0 0.0
      %924 = vmatpush2.msra.mxu0 0.0
      %925 = vmatprep.subr.mxu0 0.0
      %926 = vmatpush2.msra.mxu0 0.0
      %927 = vmatprep.subr.mxu0 0.0
      %928 = vmatpush2.msra.mxu0 0.0
      %929 = vmatprep.subr.mxu0 0.0
      %930 = vmatpush2.msra.mxu0 0.0
      %931 = vmatprep.subr.mxu0 0.0
      %932 = vmatpush2.msra.mxu0 0.0
      %933 = vmatprep.subr.mxu0 0.0
      %934 = vmatpush2.msra.mxu0 0.0
      %935 = vmatprep.subr.mxu0 0.0
      %936 = vmatpush2.msra.mxu0 0.0
      %937 = vmatprep.subr.mxu0 0.0
      %938 = vmatpush2.msra.mxu0 0.0
      %939 = vmatprep.subr.mxu0 0.0
      %940 = vmatpush2.msra.mxu0 0.0
      %941 = vmatprep.subr.mxu0 0.0
      %942 = vmatpush2.msra.mxu0 0.0
      %943 = vmatprep.subr.mxu0 0.0
      %944 = vmatpush2.msra.mxu0 0.0
      %945 = vmatprep.subr.mxu0 0.0
      %946 = vmatpush2.msra.mxu0 0.0
      %947 = vmatprep.subr.mxu0 0.0
      %948 = vmatpush2.msra.mxu0 0.0
      %949 = vmatprep.subr.mxu0 0.0
      %950 = vmatpush2.msra.mxu0 0.0
      %951 = vmatprep.subr.mxu0 0.0
      %952 = vmatpush2.msra.mxu0 0.0
      %953 = vmatprep.mubr.f32.mxu0 0.0
      %954 = vmatmul.mubr.f32.gmra.mxu0 %v864
      %v955 = vpop.f32.mrf.mxu0
      %v956 = vadd.f32 0.0, %v955
      %v957 = vpop.f32.mrf.mxu0
      %958 = vmatprep.mubr.f32.mxu0 0.0
      %959 = vmatmul.mubr.f32.gmra.mxu0 %v865
      %v960 = vpop.f32.mrf.mxu0
      %v961 = vadd.f32 0.0, %v960
      %v962 = vpop.f32.mrf.mxu0
      %963 = vmatprep.mubr.f32.mxu0 0.0
      %964 = vmatmul.mubr.f32.gmra.mxu0 %v866
      %v965 = vpop.f32.mrf.mxu0
      %v966 = vadd.f32 0.0, %v965
      %v967 = vpop.f32.mrf.mxu0
      %968 = vmatprep.mubr.f32.mxu0 0.0
      %969 = vmatmul.mubr.f32.gmra.mxu0 %v867
      %v970 = vpop.f32.mrf.mxu0
      %v971 = vadd.f32 0.0, %v970
      %v972 = vpop.f32.mrf.mxu0
      %973 = vmatprep.mubr.f32.mxu0 0.0
      %974 = vmatmul.mubr.f32.gmra.mxu0 %v868
      %v975 = vpop.f32.mrf.mxu0
      %v976 = vadd.f32 0.0, %v975
      %v977 = vpop.f32.mrf.mxu0
      %978 = vmatprep.mubr.f32.mxu0 0.0
      %979 = vmatmul.mubr.f32.gmra.mxu0 %v869
      %v980 = vpop.f32.mrf.mxu0
      %v981 = vadd.f32 0.0, %v980
      %v982 = vpop.f32.mrf.mxu0
      %983 = vmatprep.mubr.f32.mxu0 0.0
      %984 = vmatmul.mubr.f32.gmra.mxu0 %v870
      %v985 = vpop.f32.mrf.mxu0
      %v986 = vadd.f32 0.0, %v985
      %v987 = vpop.f32.mrf.mxu0
      %988 = vmatprep.mubr.f32.mxu0 0.0
      %989 = vmatmul.mubr.f32.gmra.mxu0 %v871
      %v990 = vpop.f32.mrf.mxu0
      %v991 = vadd.f32 0.0, %v990
      %v992 = vpop.f32.mrf.mxu0
      %993 = vdwg.mxu0
      %v994 = vadd.f32 %v856, %v956
      %v995 = vadd.f32 %v857, %v961
      %v996 = vadd.f32 %v858, %v966
      %v997 = vadd.f32 %v859, %v971
      %v998 = vadd.f32 %v860, %v976
      %v999 = vadd.f32 %v861, %v981
      %v1000 = vadd.f32 %v862, %v986
      %v1001 = vadd.f32 %v863, %v991
      %s1002 = scalar_lea.vmem %s176, 16
      %v1003 = vld [vmem:[%s1002] sm:$0xff]
      %v1004 = vld [vmem:[%s1002 + $0x10] sm:$0xff]
      %v1005 = vld [vmem:[%s1002 + $0x20] sm:$0xff]
      %v1006 = vld [vmem:[%s1002 + $0x30] sm:$0xff]
      %v1007 = vld [vmem:[%s1002 + $0x40] sm:$0xff]
      %v1008 = vld [vmem:[%s1002 + $0x50] sm:$0xff]
      %v1009 = vld [vmem:[%s1002 + $0x60] sm:$0xff]
      %v1010 = vld [vmem:[%s1002 + $0x70] sm:$0xff]
      %s1011 = scalar_lea.vmem %s1, 768
      %v1012 = vld [vmem:[%s1011] sm:$0xff]
      %v1013 = vld [vmem:[%s1011 + $0x8] sm:$0xff]
      %v1014 = vld [vmem:[%s1011 + $0x10] sm:$0xff]
      %v1015 = vld [vmem:[%s1011 + $0x18] sm:$0xff]
      %v1016 = vld [vmem:[%s1011 + $0x20] sm:$0xff]
      %v1017 = vld [vmem:[%s1011 + $0x28] sm:$0xff]
      %v1018 = vld [vmem:[%s1011 + $0x30] sm:$0xff]
      %v1019 = vld [vmem:[%s1011 + $0x38] sm:$0xff]
      %v1020 = vld [vmem:[%s1011 + $0x40] sm:$0xff]
      %v1021 = vld [vmem:[%s1011 + $0x48] sm:$0xff]
      %v1022 = vld [vmem:[%s1011 + $0x50] sm:$0xff]
      %v1023 = vld [vmem:[%s1011 + $0x58] sm:$0xff]
      %v1024 = vld [vmem:[%s1011 + $0x60] sm:$0xff]
      %v1025 = vld [vmem:[%s1011 + $0x68] sm:$0xff]
      %v1026 = vld [vmem:[%s1011 + $0x70] sm:$0xff]
      %v1027 = vld [vmem:[%s1011 + $0x78] sm:$0xff]
      %1028 = vmatprep.subr.mxu0 0.0
      %1029 = vmatpush1.msra.mxu0 %v1027
      %1030 = vmatprep.subr.mxu0 0.0
      %1031 = vmatpush1.msra.mxu0 %v1026
      %1032 = vmatprep.subr.mxu0 0.0
      %1033 = vmatpush1.msra.mxu0 %v1025
      %1034 = vmatprep.subr.mxu0 0.0
      %1035 = vmatpush1.msra.mxu0 %v1024
      %1036 = vmatprep.subr.mxu0 0.0
      %1037 = vmatpush1.msra.mxu0 %v1023
      %1038 = vmatprep.subr.mxu0 0.0
      %1039 = vmatpush1.msra.mxu0 %v1022
      %1040 = vmatprep.subr.mxu0 0.0
      %1041 = vmatpush1.msra.mxu0 %v1021
      %1042 = vmatprep.subr.mxu0 0.0
      %1043 = vmatpush1.msra.mxu0 %v1020
      %1044 = vmatprep.subr.mxu0 0.0
      %1045 = vmatpush1.msra.mxu0 %v1019
      %1046 = vmatprep.subr.mxu0 0.0
      %1047 = vmatpush1.msra.mxu0 %v1018
      %1048 = vmatprep.subr.mxu0 0.0
      %1049 = vmatpush1.msra.mxu0 %v1017
      %1050 = vmatprep.subr.mxu0 0.0
      %1051 = vmatpush1.msra.mxu0 %v1016
      %1052 = vmatprep.subr.mxu0 0.0
      %1053 = vmatpush1.msra.mxu0 %v1015
      %1054 = vmatprep.subr.mxu0 0.0
      %1055 = vmatpush1.msra.mxu0 %v1014
      %1056 = vmatprep.subr.mxu0 0.0
      %1057 = vmatpush1.msra.mxu0 %v1013
      %1058 = vmatprep.subr.mxu0 0.0
      %1059 = vmatpush1.msra.mxu0 %v1012
      %1060 = vmatprep.subr.mxu0 0.0
      %1061 = vmatpush2.msra.mxu0 0.0
      %1062 = vmatprep.subr.mxu0 0.0
      %1063 = vmatpush2.msra.mxu0 0.0
      %1064 = vmatprep.subr.mxu0 0.0
      %1065 = vmatpush2.msra.mxu0 0.0
      %1066 = vmatprep.subr.mxu0 0.0
      %1067 = vmatpush2.msra.mxu0 0.0
      %1068 = vmatprep.subr.mxu0 0.0
      %1069 = vmatpush2.msra.mxu0 0.0
      %1070 = vmatprep.subr.mxu0 0.0
      %1071 = vmatpush2.msra.mxu0 0.0
      %1072 = vmatprep.subr.mxu0 0.0
      %1073 = vmatpush2.msra.mxu0 0.0
      %1074 = vmatprep.subr.mxu0 0.0
      %1075 = vmatpush2.msra.mxu0 0.0
      %1076 = vmatprep.subr.mxu0 0.0
      %1077 = vmatpush2.msra.mxu0 0.0
      %1078 = vmatprep.subr.mxu0 0.0
      %1079 = vmatpush2.msra.mxu0 0.0
      %1080 = vmatprep.subr.mxu0 0.0
      %1081 = vmatpush2.msra.mxu0 0.0
      %1082 = vmatprep.subr.mxu0 0.0
      %1083 = vmatpush2.msra.mxu0 0.0
      %1084 = vmatprep.subr.mxu0 0.0
      %1085 = vmatpush2.msra.mxu0 0.0
      %1086 = vmatprep.subr.mxu0 0.0
      %1087 = vmatpush2.msra.mxu0 0.0
      %1088 = vmatprep.subr.mxu0 0.0
      %1089 = vmatpush2.msra.mxu0 0.0
      %1090 = vmatprep.subr.mxu0 0.0
      %1091 = vmatpush2.msra.mxu0 0.0
      %1092 = vmatprep.mubr.f32.mxu0 0.0
      %1093 = vmatmul.mubr.f32.gmra.mxu0 %v1003
      %v1094 = vpop.f32.mrf.mxu0
      %v1095 = vadd.f32 0.0, %v1094
      %v1096 = vpop.f32.mrf.mxu0
      %1097 = vmatprep.mubr.f32.mxu0 0.0
      %1098 = vmatmul.mubr.f32.gmra.mxu0 %v1004
      %v1099 = vpop.f32.mrf.mxu0
      %v1100 = vadd.f32 0.0, %v1099
      %v1101 = vpop.f32.mrf.mxu0
      %1102 = vmatprep.mubr.f32.mxu0 0.0
      %1103 = vmatmul.mubr.f32.gmra.mxu0 %v1005
      %v1104 = vpop.f32.mrf.mxu0
      %v1105 = vadd.f32 0.0, %v1104
      %v1106 = vpop.f32.mrf.mxu0
      %1107 = vmatprep.mubr.f32.mxu0 0.0
      %1108 = vmatmul.mubr.f32.gmra.mxu0 %v1006
      %v1109 = vpop.f32.mrf.mxu0
      %v1110 = vadd.f32 0.0, %v1109
      %v1111 = vpop.f32.mrf.mxu0
      %1112 = vmatprep.mubr.f32.mxu0 0.0
      %1113 = vmatmul.mubr.f32.gmra.mxu0 %v1007
      %v1114 = vpop.f32.mrf.mxu0
      %v1115 = vadd.f32 0.0, %v1114
      %v1116 = vpop.f32.mrf.mxu0
      %1117 = vmatprep.mubr.f32.mxu0 0.0
      %1118 = vmatmul.mubr.f32.gmra.mxu0 %v1008
      %v1119 = vpop.f32.mrf.mxu0
      %v1120 = vadd.f32 0.0, %v1119
      %v1121 = vpop.f32.mrf.mxu0
      %1122 = vmatprep.mubr.f32.mxu0 0.0
      %1123 = vmatmul.mubr.f32.gmra.mxu0 %v1009
      %v1124 = vpop.f32.mrf.mxu0
      %v1125 = vadd.f32 0.0, %v1124
      %v1126 = vpop.f32.mrf.mxu0
      %1127 = vmatprep.mubr.f32.mxu0 0.0
      %1128 = vmatmul.mubr.f32.gmra.mxu0 %v1010
      %v1129 = vpop.f32.mrf.mxu0
      %v1130 = vadd.f32 0.0, %v1129
      %v1131 = vpop.f32.mrf.mxu0
      %1132 = vdwg.mxu0
      %v1133 = vadd.f32 %v994, %v1095
      %v1134 = vadd.f32 %v995, %v1100
      %v1135 = vadd.f32 %v996, %v1105
      %v1136 = vadd.f32 %v997, %v1110
      %v1137 = vadd.f32 %v998, %v1115
      %v1138 = vadd.f32 %v999, %v1120
      %v1139 = vadd.f32 %v1000, %v1125
      %v1140 = vadd.f32 %v1001, %v1130
      %s1141 = scalar_lea.vmem %s176, 160
      %v1142 = vld [vmem:[%s1141] sm:$0xff]
      %v1143 = vld [vmem:[%s1141 + $0x10] sm:$0xff]
      %v1144 = vld [vmem:[%s1141 + $0x20] sm:$0xff]
      %v1145 = vld [vmem:[%s1141 + $0x30] sm:$0xff]
      %v1146 = vld [vmem:[%s1141 + $0x40] sm:$0xff]
      %v1147 = vld [vmem:[%s1141 + $0x50] sm:$0xff]
      %v1148 = vld [vmem:[%s1141 + $0x60] sm:$0xff]
      %v1149 = vld [vmem:[%s1141 + $0x70] sm:$0xff]
      %s1150 = scalar_lea.vmem %s1, 896
      %v1151 = vld [vmem:[%s1150] sm:$0xff]
      %v1152 = vld [vmem:[%s1150 + $0x8] sm:$0xff]
      %v1153 = vld [vmem:[%s1150 + $0x10] sm:$0xff]
      %v1154 = vld [vmem:[%s1150 + $0x18] sm:$0xff]
      %v1155 = vld [vmem:[%s1150 + $0x20] sm:$0xff]
      %v1156 = vld [vmem:[%s1150 + $0x28] sm:$0xff]
      %v1157 = vld [vmem:[%s1150 + $0x30] sm:$0xff]
      %v1158 = vld [vmem:[%s1150 + $0x38] sm:$0xff]
      %v1159 = vld [vmem:[%s1150 + $0x40] sm:$0xff]
      %v1160 = vld [vmem:[%s1150 + $0x48] sm:$0xff]
      %v1161 = vld [vmem:[%s1150 + $0x50] sm:$0xff]
      %v1162 = vld [vmem:[%s1150 + $0x58] sm:$0xff]
      %v1163 = vld [vmem:[%s1150 + $0x60] sm:$0xff]
      %v1164 = vld [vmem:[%s1150 + $0x68] sm:$0xff]
      %v1165 = vld [vmem:[%s1150 + $0x70] sm:$0xff]
      %v1166 = vld [vmem:[%s1150 + $0x78] sm:$0xff]
      %1167 = vmatprep.subr.mxu0 0.0
      %1168 = vmatpush1.msra.mxu0 %v1166
      %1169 = vmatprep.subr.mxu0 0.0
      %1170 = vmatpush1.msra.mxu0 %v1165
      %1171 = vmatprep.subr.mxu0 0.0
      %1172 = vmatpush1.msra.mxu0 %v1164
      %1173 = vmatprep.subr.mxu0 0.0
      %1174 = vmatpush1.msra.mxu0 %v1163
      %1175 = vmatprep.subr.mxu0 0.0
      %1176 = vmatpush1.msra.mxu0 %v1162
      %1177 = vmatprep.subr.mxu0 0.0
      %1178 = vmatpush1.msra.mxu0 %v1161
      %1179 = vmatprep.subr.mxu0 0.0
      %1180 = vmatpush1.msra.mxu0 %v1160
      %1181 = vmatprep.subr.mxu0 0.0
      %1182 = vmatpush1.msra.mxu0 %v1159
      %1183 = vmatprep.subr.mxu0 0.0
      %1184 = vmatpush1.msra.mxu0 %v1158
      %1185 = vmatprep.subr.mxu0 0.0
      %1186 = vmatpush1.msra.mxu0 %v1157
      %1187 = vmatprep.subr.mxu0 0.0
      %1188 = vmatpush1.msra.mxu0 %v1156
      %1189 = vmatprep.subr.mxu0 0.0
      %1190 = vmatpush1.msra.mxu0 %v1155
      %1191 = vmatprep.subr.mxu0 0.0
      %1192 = vmatpush1.msra.mxu0 %v1154
      %1193 = vmatprep.subr.mxu0 0.0
      %1194 = vmatpush1.msra.mxu0 %v1153
      %1195 = vmatprep.subr.mxu0 0.0
      %1196 = vmatpush1.msra.mxu0 %v1152
      %1197 = vmatprep.subr.mxu0 0.0
      %1198 = vmatpush1.msra.mxu0 %v1151
      %1199 = vmatprep.subr.mxu0 0.0
      %1200 = vmatpush2.msra.mxu0 0.0
      %1201 = vmatprep.subr.mxu0 0.0
      %1202 = vmatpush2.msra.mxu0 0.0
      %1203 = vmatprep.subr.mxu0 0.0
      %1204 = vmatpush2.msra.mxu0 0.0
      %1205 = vmatprep.subr.mxu0 0.0
      %1206 = vmatpush2.msra.mxu0 0.0
      %1207 = vmatprep.subr.mxu0 0.0
      %1208 = vmatpush2.msra.mxu0 0.0
      %1209 = vmatprep.subr.mxu0 0.0
      %1210 = vmatpush2.msra.mxu0 0.0
      %1211 = vmatprep.subr.mxu0 0.0
      %1212 = vmatpush2.msra.mxu0 0.0
      %1213 = vmatprep.subr.mxu0 0.0
      %1214 = vmatpush2.msra.mxu0 0.0
      %1215 = vmatprep.subr.mxu0 0.0
      %1216 = vmatpush2.msra.mxu0 0.0
      %1217 = vmatprep.subr.mxu0 0.0
      %1218 = vmatpush2.msra.mxu0 0.0
      %1219 = vmatprep.subr.mxu0 0.0
      %1220 = vmatpush2.msra.mxu0 0.0
      %1221 = vmatprep.subr.mxu0 0.0
      %1222 = vmatpush2.msra.mxu0 0.0
      %1223 = vmatprep.subr.mxu0 0.0
      %1224 = vmatpush2.msra.mxu0 0.0
      %1225 = vmatprep.subr.mxu0 0.0
      %1226 = vmatpush2.msra.mxu0 0.0
      %1227 = vmatprep.subr.mxu0 0.0
      %1228 = vmatpush2.msra.mxu0 0.0
      %1229 = vmatprep.subr.mxu0 0.0
      %1230 = vmatpush2.msra.mxu0 0.0
      %1231 = vmatprep.mubr.f32.mxu0 0.0
      %1232 = vmatmul.mubr.f32.gmra.mxu0 %v1142
      %v1233 = vpop.f32.mrf.mxu0
      %v1234 = vadd.f32 0.0, %v1233
      %v1235 = vpop.f32.mrf.mxu0
      %1236 = vmatprep.mubr.f32.mxu0 0.0
      %1237 = vmatmul.mubr.f32.gmra.mxu0 %v1143
      %v1238 = vpop.f32.mrf.mxu0
      %v1239 = vadd.f32 0.0, %v1238
      %v1240 = vpop.f32.mrf.mxu0
      %1241 = vmatprep.mubr.f32.mxu0 0.0
      %1242 = vmatmul.mubr.f32.gmra.mxu0 %v1144
      %v1243 = vpop.f32.mrf.mxu0
      %v1244 = vadd.f32 0.0, %v1243
      %v1245 = vpop.f32.mrf.mxu0
      %1246 = vmatprep.mubr.f32.mxu0 0.0
      %1247 = vmatmul.mubr.f32.gmra.mxu0 %v1145
      %v1248 = vpop.f32.mrf.mxu0
      %v1249 = vadd.f32 0.0, %v1248
      %v1250 = vpop.f32.mrf.mxu0
      %1251 = vmatprep.mubr.f32.mxu0 0.0
      %1252 = vmatmul.mubr.f32.gmra.mxu0 %v1146
      %v1253 = vpop.f32.mrf.mxu0
      %v1254 = vadd.f32 0.0, %v1253
      %v1255 = vpop.f32.mrf.mxu0
      %1256 = vmatprep.mubr.f32.mxu0 0.0
      %1257 = vmatmul.mubr.f32.gmra.mxu0 %v1147
      %v1258 = vpop.f32.mrf.mxu0
      %v1259 = vadd.f32 0.0, %v1258
      %v1260 = vpop.f32.mrf.mxu0
      %1261 = vmatprep.mubr.f32.mxu0 0.0
      %1262 = vmatmul.mubr.f32.gmra.mxu0 %v1148
      %v1263 = vpop.f32.mrf.mxu0
      %v1264 = vadd.f32 0.0, %v1263
      %v1265 = vpop.f32.mrf.mxu0
      %1266 = vmatprep.mubr.f32.mxu0 0.0
      %1267 = vmatmul.mubr.f32.gmra.mxu0 %v1149
      %v1268 = vpop.f32.mrf.mxu0
      %v1269 = vadd.f32 0.0, %v1268
      %v1270 = vpop.f32.mrf.mxu0
      %1271 = vdwg.mxu0
      %v1272 = vadd.f32 %v1133, %v1234
      %v1273 = vadd.f32 %v1134, %v1239
      %v1274 = vadd.f32 %v1135, %v1244
      %v1275 = vadd.f32 %v1136, %v1249
      %v1276 = vadd.f32 %v1137, %v1254
      %v1277 = vadd.f32 %v1138, %v1259
      %v1278 = vadd.f32 %v1139, %v1264
      %v1279 = vadd.f32 %v1140, %v1269
      %v1280 = vld [vmem:[%s1002 + $0x1] sm:$0xff]
      %v1281 = vld [vmem:[%s1002 + $0x11] sm:$0xff]
      %v1282 = vld [vmem:[%s1002 + $0x21] sm:$0xff]
      %v1283 = vld [vmem:[%s1002 + $0x31] sm:$0xff]
      %v1284 = vld [vmem:[%s1002 + $0x41] sm:$0xff]
      %v1285 = vld [vmem:[%s1002 + $0x51] sm:$0xff]
      %v1286 = vld [vmem:[%s1002 + $0x61] sm:$0xff]
      %v1287 = vld [vmem:[%s1002 + $0x71] sm:$0xff]
      %s1288 = scalar_lea.vmem %s1, 1024
      %v1289 = vld [vmem:[%s1288] sm:$0xff]
      %v1290 = vld [vmem:[%s1288 + $0x8] sm:$0xff]
      %v1291 = vld [vmem:[%s1288 + $0x10] sm:$0xff]
      %v1292 = vld [vmem:[%s1288 + $0x18] sm:$0xff]
      %v1293 = vld [vmem:[%s1288 + $0x20] sm:$0xff]
      %v1294 = vld [vmem:[%s1288 + $0x28] sm:$0xff]
      %v1295 = vld [vmem:[%s1288 + $0x30] sm:$0xff]
      %v1296 = vld [vmem:[%s1288 + $0x38] sm:$0xff]
      %v1297 = vld [vmem:[%s1288 + $0x40] sm:$0xff]
      %v1298 = vld [vmem:[%s1288 + $0x48] sm:$0xff]
      %v1299 = vld [vmem:[%s1288 + $0x50] sm:$0xff]
      %v1300 = vld [vmem:[%s1288 + $0x58] sm:$0xff]
      %v1301 = vld [vmem:[%s1288 + $0x60] sm:$0xff]
      %v1302 = vld [vmem:[%s1288 + $0x68] sm:$0xff]
      %v1303 = vld [vmem:[%s1288 + $0x70] sm:$0xff]
      %v1304 = vld [vmem:[%s1288 + $0x78] sm:$0xff]
      %1305 = vmatprep.subr.mxu0 0.0
      %1306 = vmatpush1.msra.mxu0 %v1304
      %1307 = vmatprep.subr.mxu0 0.0
      %1308 = vmatpush1.msra.mxu0 %v1303
      %1309 = vmatprep.subr.mxu0 0.0
      %1310 = vmatpush1.msra.mxu0 %v1302
      %1311 = vmatprep.subr.mxu0 0.0
      %1312 = vmatpush1.msra.mxu0 %v1301
      %1313 = vmatprep.subr.mxu0 0.0
      %1314 = vmatpush1.msra.mxu0 %v1300
      %1315 = vmatprep.subr.mxu0 0.0
      %1316 = vmatpush1.msra.mxu0 %v1299
      %1317 = vmatprep.subr.mxu0 0.0
      %1318 = vmatpush1.msra.mxu0 %v1298
      %1319 = vmatprep.subr.mxu0 0.0
      %1320 = vmatpush1.msra.mxu0 %v1297
      %1321 = vmatprep.subr.mxu0 0.0
      %1322 = vmatpush1.msra.mxu0 %v1296
      %1323 = vmatprep.subr.mxu0 0.0
      %1324 = vmatpush1.msra.mxu0 %v1295
      %1325 = vmatprep.subr.mxu0 0.0
      %1326 = vmatpush1.msra.mxu0 %v1294
      %1327 = vmatprep.subr.mxu0 0.0
      %1328 = vmatpush1.msra.mxu0 %v1293
      %1329 = vmatprep.subr.mxu0 0.0
      %1330 = vmatpush1.msra.mxu0 %v1292
      %1331 = vmatprep.subr.mxu0 0.0
      %1332 = vmatpush1.msra.mxu0 %v1291
      %1333 = vmatprep.subr.mxu0 0.0
      %1334 = vmatpush1.msra.mxu0 %v1290
      %1335 = vmatprep.subr.mxu0 0.0
      %1336 = vmatpush1.msra.mxu0 %v1289
      %1337 = vmatprep.subr.mxu0 0.0
      %1338 = vmatpush2.msra.mxu0 0.0
      %1339 = vmatprep.subr.mxu0 0.0
      %1340 = vmatpush2.msra.mxu0 0.0
      %1341 = vmatprep.subr.mxu0 0.0
      %1342 = vmatpush2.msra.mxu0 0.0
      %1343 = vmatprep.subr.mxu0 0.0
      %1344 = vmatpush2.msra.mxu0 0.0
      %1345 = vmatprep.subr.mxu0 0.0
      %1346 = vmatpush2.msra.mxu0 0.0
      %1347 = vmatprep.subr.mxu0 0.0
      %1348 = vmatpush2.msra.mxu0 0.0
      %1349 = vmatprep.subr.mxu0 0.0
      %1350 = vmatpush2.msra.mxu0 0.0
      %1351 = vmatprep.subr.mxu0 0.0
      %1352 = vmatpush2.msra.mxu0 0.0
      %1353 = vmatprep.subr.mxu0 0.0
      %1354 = vmatpush2.msra.mxu0 0.0
      %1355 = vmatprep.subr.mxu0 0.0
      %1356 = vmatpush2.msra.mxu0 0.0
      %1357 = vmatprep.subr.mxu0 0.0
      %1358 = vmatpush2.msra.mxu0 0.0
      %1359 = vmatprep.subr.mxu0 0.0
      %1360 = vmatpush2.msra.mxu0 0.0
      %1361 = vmatprep.subr.mxu0 0.0
      %1362 = vmatpush2.msra.mxu0 0.0
      %1363 = vmatprep.subr.mxu0 0.0
      %1364 = vmatpush2.msra.mxu0 0.0
      %1365 = vmatprep.subr.mxu0 0.0
      %1366 = vmatpush2.msra.mxu0 0.0
      %1367 = vmatprep.subr.mxu0 0.0
      %1368 = vmatpush2.msra.mxu0 0.0
      %1369 = vmatprep.mubr.f32.mxu0 0.0
      %1370 = vmatmul.mubr.f32.gmra.mxu0 %v1280
      %v1371 = vpop.f32.mrf.mxu0
      %v1372 = vadd.f32 0.0, %v1371
      %v1373 = vpop.f32.mrf.mxu0
      %1374 = vmatprep.mubr.f32.mxu0 0.0
      %1375 = vmatmul.mubr.f32.gmra.mxu0 %v1281
      %v1376 = vpop.f32.mrf.mxu0
      %v1377 = vadd.f32 0.0, %v1376
      %v1378 = vpop.f32.mrf.mxu0
      %1379 = vmatprep.mubr.f32.mxu0 0.0
      %1380 = vmatmul.mubr.f32.gmra.mxu0 %v1282
      %v1381 = vpop.f32.mrf.mxu0
      %v1382 = vadd.f32 0.0, %v1381
      %v1383 = vpop.f32.mrf.mxu0
      %1384 = vmatprep.mubr.f32.mxu0 0.0
      %1385 = vmatmul.mubr.f32.gmra.mxu0 %v1283
      %v1386 = vpop.f32.mrf.mxu0
      %v1387 = vadd.f32 0.0, %v1386
      %v1388 = vpop.f32.mrf.mxu0
      %1389 = vmatprep.mubr.f32.mxu0 0.0
      %1390 = vmatmul.mubr.f32.gmra.mxu0 %v1284
      %v1391 = vpop.f32.mrf.mxu0
      %v1392 = vadd.f32 0.0, %v1391
      %v1393 = vpop.f32.mrf.mxu0
      %1394 = vmatprep.mubr.f32.mxu0 0.0
      %1395 = vmatmul.mubr.f32.gmra.mxu0 %v1285
      %v1396 = vpop.f32.mrf.mxu0
      %v1397 = vadd.f32 0.0, %v1396
      %v1398 = vpop.f32.mrf.mxu0
      %1399 = vmatprep.mubr.f32.mxu0 0.0
      %1400 = vmatmul.mubr.f32.gmra.mxu0 %v1286
      %v1401 = vpop.f32.mrf.mxu0
      %v1402 = vadd.f32 0.0, %v1401
      %v1403 = vpop.f32.mrf.mxu0
      %1404 = vmatprep.mubr.f32.mxu0 0.0
      %1405 = vmatmul.mubr.f32.gmra.mxu0 %v1287
      %v1406 = vpop.f32.mrf.mxu0
      %v1407 = vadd.f32 0.0, %v1406
      %v1408 = vpop.f32.mrf.mxu0
      %1409 = vdwg.mxu0
      %v1410 = vadd.f32 %v1272, %v1372
      %v1411 = vadd.f32 %v1273, %v1377
      %v1412 = vadd.f32 %v1274, %v1382
      %v1413 = vadd.f32 %v1275, %v1387
      %v1414 = vadd.f32 %v1276, %v1392
      %v1415 = vadd.f32 %v1277, %v1397
      %v1416 = vadd.f32 %v1278, %v1402
      %v1417 = vadd.f32 %v1279, %v1407
      %1418 = vst [vmem:[%s182] sm:$0xff] %v1410
      %1419 = vst [vmem:[%s182 + $0x8] sm:$0xff] %v1411
      %1420 = vst [vmem:[%s182 + $0x10] sm:$0xff] %v1412
      %1421 = vst [vmem:[%s182 + $0x18] sm:$0xff] %v1413
      %1422 = vst [vmem:[%s182 + $0x20] sm:$0xff] %v1414
      %1423 = vst [vmem:[%s182 + $0x28] sm:$0xff] %v1415
      %1424 = vst [vmem:[%s182 + $0x30] sm:$0xff] %v1416
      %1425 = vst [vmem:[%s182 + $0x38] sm:$0xff] %v1417
      %v1426 = vadd.f32 %v1410, %v1411
      %v1427 = vadd.f32 %v1426, %v1412
      %v1428 = vadd.f32 %v1427, %v1413
      %v1429 = vadd.f32 %v1428, %v1414
      %v1430 = vadd.f32 %v1429, %v1415
      %v1431 = vadd.f32 %v1430, %v1416
      %v1432 = vadd.f32 %v1431, %v1417
      %v1433 = vrot.slane %v1432, 4
      %v1434 = vadd.f32 %v1432, %v1433
      %v1435 = vrot.slane %v1434, 2
      %v1436 = vadd.f32 %v1434, %v1435
      %v1437 = vrot.slane %v1436, 1
      %v1438 = vadd.f32 %v1436, %v1437
      %1439 = vst [vmem:[%s187] sm:$0x1] %v1438
      %v1440 = vmul.f32 %v1410, %v1410
      %v1441 = vmul.f32 %v1411, %v1411
      %v1442 = vmul.f32 %v1412, %v1412
      %v1443 = vmul.f32 %v1413, %v1413
      %v1444 = vmul.f32 %v1414, %v1414
      %v1445 = vmul.f32 %v1415, %v1415
      %v1446 = vmul.f32 %v1416, %v1416
      %v1447 = vmul.f32 %v1417, %v1417
      %v1448 = vadd.f32 %v1440, %v1441
      %v1449 = vadd.f32 %v1448, %v1442
      %v1450 = vadd.f32 %v1449, %v1443
      %v1451 = vadd.f32 %v1450, %v1444
      %v1452 = vadd.f32 %v1451, %v1445
      %v1453 = vadd.f32 %v1452, %v1446
      %v1454 = vadd.f32 %v1453, %v1447
      %v1455 = vrot.slane %v1454, 4
      %v1456 = vadd.f32 %v1454, %v1455
      %v1457 = vrot.slane %v1456, 2
      %v1458 = vadd.f32 %v1456, %v1457
      %v1459 = vrot.slane %v1458, 1
      %v1460 = vadd.f32 %v1458, %v1459
      %1461 = vst [vmem:[%s187 + $0x1] sm:$0x1] %v1460
      %s1462 = smul.u32 8, %s15
      %p1463 = scmp.lt.s32.totalorder %s1462, 15
      %s1464 = scalar_select %p1463, %s1462, 15
      %s1465 = smul.addr %s1464, 8
      %s1466 = scalar_lea.vmem %s2, %s1465
      %p1467 = scmp.lt.s32.totalorder %s15, 1
      %s1468 = scalar_select %p1467, %s15, 1
      %s1469 = smul.addr %s1468, 2
      %s1470 = scalar_lea.vmem %s3, %s1469
      // Predicated region
      $region29: #{bottleneck_forward.7} parent=27 // pred_check
        %p1471 = pneg %p80
      $region30: #{bottleneck_forward.7} parent=27 // pred_check_branch
        %1473 = sbr.rel (%p1471) target = $region32
      $region31: #{bottleneck_forward.7} parent=27 // pred_region
        %s1474 = smul.u32 8, %s15
      $region32: #{bottleneck_forward.7} parent=27 // pred_fallthru
        _
      // Predicated region
      $region33: #{bottleneck_forward.7} parent=27 // pred_check
        %p1475 = pneg %p106
      $region34: #{bottleneck_forward.7} parent=27 // pred_check_branch
        %1477 = sbr.rel (%p1475) target = $region36
      $region35: #{bottleneck_forward.7} parent=27 // pred_region
        _
      $region36: #{bottleneck_forward.7} parent=27 // pred_fallthru
        _
    $region28: #{bottleneck_forward.7} parent=5 // pred_fallthru
      _
    %p1478 = scmp.le.s32.totalorder 2, %s10
    // Predicated region
    $region37: #{bottleneck_forward.7} parent=5 // pred_check
      %p1479 = pneg %p1478
    $region38: #{bottleneck_forward.7} parent=5 // pred_check_branch
      %1481 = sbr.rel (%p1479) target = $region40
    $region39: #{bottleneck_forward.7} parent=5 // pred_region
      %s1482 = ssub.s32 %s10, 2
      // Predicated region
      $region41: #{bottleneck_forward.7} parent=39 // pred_check
        %p1483 = pneg %p86
      $region42: #{bottleneck_forward.7} parent=39 // pred_check_branch
        %1485 = sbr.rel (%p1483) target = $region44
      $region43: #{bottleneck_forward.7} parent=39 // pred_region
        %s1486 = smul.u32 8, %s16
        %p1487 = scmp.lt.s32.totalorder %s1486, 15
        %s1488 = scalar_select %p1487, %s1486, 15
        %s1489 = smul.addr %s1488, 8
        %s1490 = scalar_lea.vmem %s2, %s1489
      $region44: #{bottleneck_forward.7} parent=39 // pred_fallthru
        _
      // Predicated region
      $region45: #{bottleneck_forward.7} parent=39 // pred_check
        %p1491 = pneg %p112
      $region46: #{bottleneck_forward.7} parent=39 // pred_check_branch
        %1493 = sbr.rel (%p1491) target = $region48
      $region47: #{bottleneck_forward.7} parent=39 // pred_region
        %p1494 = scmp.lt.s32.totalorder %s16, 1
        %s1495 = scalar_select %p1494, %s16, 1
        %s1496 = smul.addr %s1495, 2
        %s1497 = scalar_lea.vmem %s3, %s1496
      $region48: #{bottleneck_forward.7} parent=39 // pred_fallthru
        _
    $region40: #{bottleneck_forward.7} parent=5 // pred_fallthru
      _
  $region6: #{bottleneck_forward.7} parent=0 // loop_footer
    %s14 = sadd.s32 1, %s10
  $region7: #{bottleneck_forward.7} parent=0 // loop_footer_branch
    %9 = sbr.rel target = $region3
  $region8: #{bottleneck_forward.7} parent=0 // loop_exit
    _

</llo_original>
